<compile_context>
chip_gen: v5e
topology: v5e:2x2
jax: 0.10.0
libtpu: 0.0.40
codegen_flags: <defaults>
</compile_context>

<pallas_src>
import functools

import jax
import jax.numpy as jnp
from jax.experimental import pallas as pl
from jax.experimental.pallas import tpu as pltpu

LANE = 128  # pad tiny output dims to full lane width (avoids masked vst.msk)


def _round_up(n, m):
    return ((n + m - 1) // m) * m


# ----------------------------- Pallas kernels ----------------------------- #
def _dann_domain_kernel(x_ref, fw_ref, fb_ref, h1w_ref, h1b_ref,
                        d2w_ref, d2b_ref, d3w_ref, d3b_ref,
                        y_ref, dom_ref, *, c_pad):
    """One batch tile of the full DANN forward (classifier + domain head).

    Weights stay VMEM-resident across the batch grid (constant index_map);
    only the (TILE_B, in_dim) input tile and the two output tiles move per
    grid step.
    """
    x = x_ref[...].astype(fw_ref.dtype)                      # f32 -> bf16 in-kernel

    # featurizer: Linear -> ReLU  (bf16 x bf16 on the MXU, f32 accumulate)
    feat = jnp.dot(x, fw_ref[...], preferred_element_type=jnp.float32)
    feat = jnp.maximum(feat + fb_ref[...], 0.0).astype(fw_ref.dtype)

    # classifier head and discriminator layer-1 share the same LHS ->
    # single fused matmul against the concatenated weight; split columns.
    yh = jnp.dot(feat, h1w_ref[...], preferred_element_type=jnp.float32)
    yh = yh + h1b_ref[...]
    y_ref[...] = yh[:, :c_pad].astype(y_ref.dtype)           # lane-padded classifier

    # GradientReverseLayer forward == identity (coeff only affects backward).
    # TODO(synk): training-mode stochastic Dropout(0.5) not implemented
    # (eval-mode forward only).
    h = jnp.maximum(yh[:, c_pad:], 0.0).astype(d2w_ref.dtype)
    h = jnp.dot(h, d2w_ref[...], preferred_element_type=jnp.float32)
    h = jnp.maximum(h + d2b_ref[...], 0.0).astype(d3w_ref.dtype)
    d = jnp.dot(h, d3w_ref[...], preferred_element_type=jnp.float32)
    dom_ref[...] = (d + d3b_ref[...]).astype(dom_ref.dtype)


def _dann_classify_kernel(x_ref, fw_ref, fb_ref, cw_ref, cb_ref, y_ref):
    """Classifier-only path (domain_classifier=False)."""
    x = x_ref[...].astype(fw_ref.dtype)
    feat = jnp.dot(x, fw_ref[...], preferred_element_type=jnp.float32)
    feat = jnp.maximum(feat + fb_ref[...], 0.0).astype(cw_ref.dtype)
    y = jnp.dot(feat, cw_ref[...], preferred_element_type=jnp.float32)
    y_ref[...] = (y + cb_ref[...]).astype(y_ref.dtype)


# ------------------------- parameter construction ------------------------- #
def _init_linear(key, fan_in, fan_out, pad_out=None, w_dtype=jnp.bfloat16):
    """torch.nn.Linear-style init, stored kernel-ready: bf16 (K, N) weight
    (optionally zero-padded on N) and f32 (1, N) bias."""
    kw, kb = jax.random.split(key)
    bound = 1.0 / (fan_in ** 0.5)
    w = jax.random.uniform(kw, (fan_in, fan_out), jnp.float32, -bound, bound)
    b = jax.random.uniform(kb, (fan_out,), jnp.float32, -bound, bound)
    n = fan_out if pad_out is None else pad_out
    if n != fan_out:
        w = jnp.pad(w, ((0, 0), (0, n - fan_out)))
        b = jnp.pad(b, (0, n - fan_out))
    return w.astype(w_dtype), b.reshape(1, n).astype(jnp.float32)


def init_dann_params(key, in_dim, d_out, num_classes, n_domains, hidden=1024):
    keys = jax.random.split(key, 5)
    c_pad = _round_up(num_classes, LANE)
    d_pad = _round_up(n_domains, LANE)
    fw, fb = _init_linear(keys[0], in_dim, d_out)
    cw, cb = _init_linear(keys[1], d_out, num_classes, pad_out=c_pad)
    d1w, d1b = _init_linear(keys[2], d_out, hidden)
    d2w, d2b = _init_linear(keys[3], hidden, hidden)
    d3w, d3b = _init_linear(keys[4], hidden, n_domains, pad_out=d_pad)
    # Fuse classifier || disc-layer-1 along N at init (they share LHS feat).
    h1w = jnp.concatenate([cw, d1w], axis=1)         # (d_out, c_pad + hidden) bf16
    h1b = jnp.concatenate([cb, d1b], axis=1)         # (1,     c_pad + hidden) f32
    return {
        "featurizer": (fw, fb),
        "classifier": (cw, cb),     # used for the classifier-only path
        "head1": (h1w, h1b),        # fused classifier+disc1 (domain path)
        "disc2": (d2w, d2b),
        "disc3": (d3w, d3b),
    }


# ------------------------------ forward pass ------------------------------ #
def _const_spec(shape):
    # Weight/bias block: whole array, same block every grid step -> Pallas
    # DMAs it once and keeps it resident in VMEM across the batch grid.
    return pl.BlockSpec(shape, lambda i: (0, 0))


@functools.partial(
    jax.jit, static_argnames=("num_classes", "n_domains", "domain_classifier"))
def dann_forward(params, x, *, num_classes, n_domains, coeff=1.0,
                 domain_classifier=False):
    del coeff  # only affects backward (gradient reversal); identity in fwd
    B = x.shape[0]
    x_flat = x.reshape(B, -1)                      # metadata-only reshape, stays f32
    in_dim = x_flat.shape[1]

    # Batch tiling: pad B up to the tile, weights resident across the grid.
    tile_b = min(128, _round_up(B, 8))
    b_pad = _round_up(B, tile_b)
    if b_pad != B:
        x_flat = jnp.pad(x_flat, ((0, b_pad - B), (0, 0)))
    grid = (b_pad // tile_b,)

    fw, fb = params["featurizer"]
    d_out = fw.shape[1]

    x_spec = pl.BlockSpec((tile_b, in_dim), lambda i: (i, 0))
    cparams = pltpu.CompilerParams(
        dimension_semantics=("arbitrary",),
        vmem_limit_bytes=32 * 1024 * 1024)

    if domain_classifier:
        h1w, h1b = params["head1"]
        d2w, d2b = params["disc2"]
        d3w, d3b = params["disc3"]
        c_pad = params["classifier"][0].shape[1]
        hidden = d2w.shape[0]
        d_pad = d3w.shape[1]

        ins = (x_flat, fw, fb, h1w, h1b, d2w, d2b, d3w, d3b)
        flops = 2 * b_pad * (in_dim * d_out + d_out * (c_pad + hidden)
                             + hidden * hidden + hidden * d_pad)
        bytes_accessed = (sum(int(a.size) * a.dtype.itemsize for a in ins)
                          + b_pad * (c_pad + d_pad) * 4)

        y_pad, dom_pad = pl.pallas_call(
            functools.partial(_dann_domain_kernel, c_pad=c_pad),
            grid=grid,
            in_specs=[
                x_spec,
                _const_spec(fw.shape), _const_spec(fb.shape),
                _const_spec(h1w.shape), _const_spec(h1b.shape),
                _const_spec(d2w.shape), _const_spec(d2b.shape),
                _const_spec(d3w.shape), _const_spec(d3b.shape),
            ],
            out_specs=(
                pl.BlockSpec((tile_b, c_pad), lambda i: (i, 0)),
                pl.BlockSpec((tile_b, d_pad), lambda i: (i, 0)),
            ),
            out_shape=(
                jax.ShapeDtypeStruct((b_pad, c_pad), jnp.float32),
                jax.ShapeDtypeStruct((b_pad, d_pad), jnp.float32),
            ),
            compiler_params=cparams,
            cost_estimate=pl.CostEstimate(
                flops=flops, transcendentals=0, bytes_accessed=bytes_accessed),
        )(*ins)
        return y_pad[:B, :num_classes], dom_pad[:B, :n_domains]

    cw, cb = params["classifier"]
    c_pad = cw.shape[1]
    ins = (x_flat, fw, fb, cw, cb)
    flops = 2 * b_pad * (in_dim * d_out + d_out * c_pad)
    bytes_accessed = (sum(int(a.size) * a.dtype.itemsize for a in ins)
                      + b_pad * c_pad * 4)

    y_pad = pl.pallas_call(
        _dann_classify_kernel,
        grid=grid,
        in_specs=[
            x_spec,
            _const_spec(fw.shape), _const_spec(fb.shape),
            _const_spec(cw.shape), _const_spec(cb.shape),
        ],
        out_specs=pl.BlockSpec((tile_b, c_pad), lambda i: (i, 0)),
        out_shape=jax.ShapeDtypeStruct((b_pad, c_pad), jnp.float32),
        compiler_params=cparams,
        cost_estimate=pl.CostEstimate(
            flops=flops, transcendentals=0, bytes_accessed=bytes_accessed),
    )(*ins)
    return y_pad[:B, :num_classes]


# -------------------------- pure-JAX reference ----------------------------- #
def _reference_forward(params, x, num_classes, n_domains):
    """Mirrors the kernel's dtype choices (bf16 weights/acts, f32 accumulate)."""
    B = x.shape[0]
    xb = x.reshape(B, -1).astype(jnp.bfloat16)
    fw, fb = params["featurizer"]
    feat = jnp.maximum(
        jnp.dot(xb, fw, preferred_element_type=jnp.float32) + fb, 0.0
    ).astype(jnp.bfloat16)
    cw, cb = params["classifier"]
    y = jnp.dot(feat, cw, preferred_element_type=jnp.float32) + cb
    h1w, h1b = params["head1"]
    c_pad = cw.shape[1]
    h = jnp.maximum(
        jnp.dot(feat, h1w[:, c_pad:], preferred_element_type=jnp.float32)
        + h1b[:, c_pad:], 0.0).astype(jnp.bfloat16)
    d2w, d2b = params["disc2"]
    h = jnp.maximum(
        jnp.dot(h, d2w, preferred_element_type=jnp.float32) + d2b, 0.0
    ).astype(jnp.bfloat16)
    d3w, d3b = params["disc3"]
    dom = jnp.dot(h, d3w, preferred_element_type=jnp.float32) + d3b
    return y[:, :num_classes], dom[:, :n_domains]


# ---------------------------------- main ----------------------------------- #
if __name__ == "__main__":
    # Small shapes: batch=8, channels=4, spatial=16x16 -> in_dim=1024.
    B, C, H, W = 8, 4, 16, 16
    d_out = 128          # featurizer.d_out
    num_classes = 10
    n_domains = 3

    key = jax.random.PRNGKey(0)
    k_x, k_p = jax.random.split(key)
    x = jax.random.normal(k_x, (B, C, H, W), jnp.float32)
    params = init_dann_params(k_p, C * H * W, d_out, num_classes, n_domains)

    y_pred, domains_pred = dann_forward(
        params, x, num_classes=num_classes, n_domains=n_domains,
        coeff=1.0, domain_classifier=True)
    jax.block_until_ready((y_pred, domains_pred))
    assert y_pred.shape == (B, num_classes)
    assert domains_pred.shape == (B, n_domains)

    # correctness vs. a pure-JAX reference with identical dtype policy
    y_ref, dom_ref = _reference_forward(params, x, num_classes, n_domains)
    assert jnp.allclose(y_pred, y_ref, rtol=2e-2, atol=2e-2)
    assert jnp.allclose(domains_pred, dom_ref, rtol=2e-2, atol=2e-2)

    # also exercise the domain_classifier=False branch
    y_only = dann_forward(params, x, num_classes=num_classes,
                          n_domains=n_domains, domain_classifier=False)
    jax.block_until_ready(y_only)
    assert y_only.shape == (B, num_classes)
    assert jnp.allclose(y_only, y_ref, rtol=2e-2, atol=2e-2)

    print("KERNEL_OK")
</pallas_src>

<mosaic_0001>
module attributes {stable_mosaic.version = 11 : i64} {
  func.func @_dann_domain_kernel(%arg0: i32, %arg1: memref<8x1024xf32, #tpu.memory_space<vmem>>, %arg2: memref<1024x128xbf16, #tpu.memory_space<vmem>>, %arg3: memref<1x128xf32, #tpu.memory_space<vmem>>, %arg4: memref<128x1152xbf16, #tpu.memory_space<vmem>>, %arg5: memref<1x1152xf32, #tpu.memory_space<vmem>>, %arg6: memref<1024x1024xbf16, #tpu.memory_space<vmem>>, %arg7: memref<1x1024xf32, #tpu.memory_space<vmem>>, %arg8: memref<1024x128xbf16, #tpu.memory_space<vmem>>, %arg9: memref<1x128xf32, #tpu.memory_space<vmem>>, %arg10: memref<8x128xf32, #tpu.memory_space<vmem>>, %arg11: memref<8x128xf32, #tpu.memory_space<vmem>>) attributes {dimension_semantics = [#tpu.dimension_semantics<arbitrary>], iteration_bounds = array<i64: 1>, scalar_prefetch = 0 : i64, scratch_operands = 0 : i64, tpu.core_type = #tpu.core_type<tc>, window_params = [{transform_indices = @transform_0, window_bounds = array<i64: 8, 1024>}, {pipeline_mode = #tpu.pipeline_mode<synchronous>, transform_indices = @transform_1, window_bounds = array<i64: 1024, 128>}, {pipeline_mode = #tpu.pipeline_mode<synchronous>, transform_indices = @transform_2, window_bounds = array<i64: 1, 128>}, {pipeline_mode = #tpu.pipeline_mode<synchronous>, transform_indices = @transform_3, window_bounds = array<i64: 128, 1152>}, {pipeline_mode = #tpu.pipeline_mode<synchronous>, transform_indices = @transform_4, window_bounds = array<i64: 1, 1152>}, {pipeline_mode = #tpu.pipeline_mode<synchronous>, transform_indices = @transform_5, window_bounds = array<i64: 1024, 1024>}, {pipeline_mode = #tpu.pipeline_mode<synchronous>, transform_indices = @transform_6, window_bounds = array<i64: 1, 1024>}, {pipeline_mode = #tpu.pipeline_mode<synchronous>, transform_indices = @transform_7, window_bounds = array<i64: 1024, 128>}, {pipeline_mode = #tpu.pipeline_mode<synchronous>, transform_indices = @transform_8, window_bounds = array<i64: 1, 128>}, {transform_indices = @transform_9, window_bounds = array<i64: 8, 128>}, {transform_indices = @transform_10, window_bounds = array<i64: 8, 128>}]} {
    %c0 = arith.constant 0 : index
    %c0_0 = arith.constant 0 : index
    %0 = vector.load %arg1[%c0, %c0_0] : memref<8x1024xf32, #tpu.memory_space<vmem>>, vector<8x1024xf32>
    %1 = arith.truncf %0 : vector<8x1024xf32> to vector<8x1024xbf16>
    %c0_1 = arith.constant 0 : index
    %c0_2 = arith.constant 0 : index
    %2 = vector.load %arg2[%c0_1, %c0_2] : memref<1024x128xbf16, #tpu.memory_space<vmem>>, vector<1024x128xbf16>
    %cst = arith.constant dense<0.000000e+00> : vector<8x128xf32>
    %3 = tpu.matmul %1, %2, %cst {dimension_numbers = #tpu.dot_dimension_numbers<[1], [0], [0], [1], [0, 0, 1, 1], [], []>} : vector<8x1024xbf16>, vector<1024x128xbf16>, vector<8x128xf32> -> vector<8x128xf32>
    %c0_3 = arith.constant 0 : index
    %c0_4 = arith.constant 0 : index
    %4 = vector.load %arg3[%c0_3, %c0_4] : memref<1x128xf32, #tpu.memory_space<vmem>>, vector<1x128xf32>
    %5 = vector.broadcast %4 : vector<1x128xf32> to vector<8x128xf32>
    %6 = arith.addf %3, %5 : vector<8x128xf32>
    %cst_5 = arith.constant 0.000000e+00 : f32
    %7 = vector.broadcast %cst_5 : f32 to vector<8x128xf32>
    %8 = arith.maximumf %6, %7 : vector<8x128xf32>
    %9 = arith.truncf %8 : vector<8x128xf32> to vector<8x128xbf16>
    %c0_6 = arith.constant 0 : index
    %c0_7 = arith.constant 0 : index
    %10 = vector.load %arg4[%c0_6, %c0_7] : memref<128x1152xbf16, #tpu.memory_space<vmem>>, vector<128x1152xbf16>
    %cst_8 = arith.constant dense<0.000000e+00> : vector<8x1152xf32>
    %11 = tpu.matmul %9, %10, %cst_8 {dimension_numbers = #tpu.dot_dimension_numbers<[1], [0], [0], [1], [0, 0, 1, 1], [], []>} : vector<8x128xbf16>, vector<128x1152xbf16>, vector<8x1152xf32> -> vector<8x1152xf32>
    %c0_9 = arith.constant 0 : index
    %c0_10 = arith.constant 0 : index
    %12 = vector.load %arg5[%c0_9, %c0_10] : memref<1x1152xf32, #tpu.memory_space<vmem>>, vector<1x1152xf32>
    %13 = vector.broadcast %12 : vector<1x1152xf32> to vector<8x1152xf32>
    %14 = arith.addf %11, %13 : vector<8x1152xf32>
    %15 = vector.extract_strided_slice %14 {offsets = [0, 0], sizes = [8, 128], strides = [1, 1]} : vector<8x1152xf32> to vector<8x128xf32>
    %c0_11 = arith.constant 0 : index
    %c0_12 = arith.constant 0 : index
    %16 = vector.load %arg10[%c0_11, %c0_12] : memref<8x128xf32, #tpu.memory_space<vmem>>, vector<8x128xf32>
    tpu.vector_store %arg10[%c0_11, %c0_12], %15 {strides = array<i32>} : memref<8x128xf32, #tpu.memory_space<vmem>>, vector<8x128xf32>,
    %17 = vector.extract_strided_slice %14 {offsets = [0, 128], sizes = [8, 1024], strides = [1, 1]} : vector<8x1152xf32> to vector<8x1024xf32>
    %cst_13 = arith.constant 0.000000e+00 : f32
    %18 = vector.broadcast %cst_13 : f32 to vector<8x1024xf32>
    %19 = arith.maximumf %17, %18 : vector<8x1024xf32>
    %20 = arith.truncf %19 : vector<8x1024xf32> to vector<8x1024xbf16>
    %c0_14 = arith.constant 0 : index
    %c0_15 = arith.constant 0 : index
    %21 = vector.load %arg6[%c0_14, %c0_15] : memref<1024x1024xbf16, #tpu.memory_space<vmem>>, vector<1024x1024xbf16>
    %cst_16 = arith.constant dense<0.000000e+00> : vector<8x1024xf32>
    %22 = tpu.matmul %20, %21, %cst_16 {dimension_numbers = #tpu.dot_dimension_numbers<[1], [0], [0], [1], [0, 0, 1, 1], [], []>} : vector<8x1024xbf16>, vector<1024x1024xbf16>, vector<8x1024xf32> -> vector<8x1024xf32>
    %c0_17 = arith.constant 0 : index
    %c0_18 = arith.constant 0 : index
    %23 = vector.load %arg7[%c0_17, %c0_18] : memref<1x1024xf32, #tpu.memory_space<vmem>>, vector<1x1024xf32>
    %24 = vector.broadcast %23 : vector<1x1024xf32> to vector<8x1024xf32>
    %25 = arith.addf %22, %24 : vector<8x1024xf32>
    %cst_19 = arith.constant 0.000000e+00 : f32
    %26 = vector.broadcast %cst_19 : f32 to vector<8x1024xf32>
    %27 = arith.maximumf %25, %26 : vector<8x1024xf32>
    %28 = arith.truncf %27 : vector<8x1024xf32> to vector<8x1024xbf16>
    %c0_20 = arith.constant 0 : index
    %c0_21 = arith.constant 0 : index
    %29 = vector.load %arg8[%c0_20, %c0_21] : memref<1024x128xbf16, #tpu.memory_space<vmem>>, vector<1024x128xbf16>
    %cst_22 = arith.constant dense<0.000000e+00> : vector<8x128xf32>
    %30 = tpu.matmul %28, %29, %cst_22 {dimension_numbers = #tpu.dot_dimension_numbers<[1], [0], [0], [1], [0, 0, 1, 1], [], []>} : vector<8x1024xbf16>, vector<1024x128xbf16>, vector<8x128xf32> -> vector<8x128xf32>
    %c0_23 = arith.constant 0 : index
    %c0_24 = arith.constant 0 : index
    %31 = vector.load %arg9[%c0_23, %c0_24] : memref<1x128xf32, #tpu.memory_space<vmem>>, vector<1x128xf32>
    %32 = vector.broadcast %31 : vector<1x128xf32> to vector<8x128xf32>
    %33 = arith.addf %30, %32 : vector<8x128xf32>
    %c0_25 = arith.constant 0 : index
    %c0_26 = arith.constant 0 : index
    %34 = vector.load %arg11[%c0_25, %c0_26] : memref<8x128xf32, #tpu.memory_space<vmem>>, vector<8x128xf32>
    tpu.vector_store %arg11[%c0_25, %c0_26], %33 {strides = array<i32>} : memref<8x128xf32, #tpu.memory_space<vmem>>, vector<8x128xf32>,
    return
  }
  func.func @transform_0(%arg0: i32) -> (i32, i32) {
    %c0_i32 = arith.constant 0 : i32
    %c0_i32_0 = arith.constant 0 : i32
    return %arg0, %c0_i32 : i32, i32
  }
  func.func @transform_1(%arg0: i32) -> (i32, i32) {
    %c0_i32 = arith.constant 0 : i32
    %c0_i32_0 = arith.constant 0 : i32
    %c0_i32_1 = arith.constant 0 : i32
    return %c0_i32, %c0_i32_0 : i32, i32
  }
  func.func @transform_2(%arg0: i32) -> (i32, i32) {
    %c0_i32 = arith.constant 0 : i32
    %c0_i32_0 = arith.constant 0 : i32
    %c0_i32_1 = arith.constant 0 : i32
    return %c0_i32, %c0_i32_0 : i32, i32
  }
  func.func @transform_3(%arg0: i32) -> (i32, i32) {
    %c0_i32 = arith.constant 0 : i32
    %c0_i32_0 = arith.constant 0 : i32
    %c0_i32_1 = arith.constant 0 : i32
    return %c0_i32, %c0_i32_0 : i32, i32
  }
  func.func @transform_4(%arg0: i32) -> (i32, i32) {
    %c0_i32 = arith.constant 0 : i32
    %c0_i32_0 = arith.constant 0 : i32
    %c0_i32_1 = arith.constant 0 : i32
    return %c0_i32, %c0_i32_0 : i32, i32
  }
  func.func @transform_5(%arg0: i32) -> (i32, i32) {
    %c0_i32 = arith.constant 0 : i32
    %c0_i32_0 = arith.constant 0 : i32
    %c0_i32_1 = arith.constant 0 : i32
    return %c0_i32, %c0_i32_0 : i32, i32
  }
  func.func @transform_6(%arg0: i32) -> (i32, i32) {
    %c0_i32 = arith.constant 0 : i32
    %c0_i32_0 = arith.constant 0 : i32
    %c0_i32_1 = arith.constant 0 : i32
    return %c0_i32, %c0_i32_0 : i32, i32
  }
  func.func @transform_7(%arg0: i32) -> (i32, i32) {
    %c0_i32 = arith.constant 0 : i32
    %c0_i32_0 = arith.constant 0 : i32
    %c0_i32_1 = arith.constant 0 : i32
    return %c0_i32, %c0_i32_0 : i32, i32
  }
  func.func @transform_8(%arg0: i32) -> (i32, i32) {
    %c0_i32 = arith.constant 0 : i32
    %c0_i32_0 = arith.constant 0 : i32
    %c0_i32_1 = arith.constant 0 : i32
    return %c0_i32, %c0_i32_0 : i32, i32
  }
  func.func @transform_9(%arg0: i32) -> (i32, i32) {
    %c0_i32 = arith.constant 0 : i32
    %c0_i32_0 = arith.constant 0 : i32
    return %arg0, %c0_i32 : i32, i32
  }
  func.func @transform_10(%arg0: i32) -> (i32, i32) {
    %c0_i32 = arith.constant 0 : i32
    %c0_i32_0 = arith.constant 0 : i32
    return %arg0, %c0_i32 : i32, i32
  }
}

</mosaic_0001>

<llo_original>
// kernel: dann_forward.1
$region0: #{dann_forward.1}
  #allocation0 [shape = 'u32[]', space=smem, size = 0x4, offset = 0x4, fixed_abs, tag = 'smem constant byte address 0x4 - core index']
  #allocation1 [shape = 'u32[72,128]{1,0:T(1,128)}', space=vmem, size = 0x9000, scoped, tag = 'internal scratch']
  %s0 = inlined_call_operand.vmem [shape: f32[8,1024], index: 0, kind: input, shape index: {}]
  %s1 = inlined_call_operand.hbm [shape: bf16[1024,128], index: 1, kind: input, shape index: {}]
  %s2 = inlined_call_operand.hbm [shape: f32[1,128], index: 2, kind: input, shape index: {}]
  %s3 = inlined_call_operand.hbm [shape: bf16[128,1152], index: 3, kind: input, shape index: {}]
  %s4 = inlined_call_operand.hbm [shape: f32[1,1152], index: 4, kind: input, shape index: {}]
  %s5 = inlined_call_operand.hbm [shape: bf16[1024,1024], index: 5, kind: input, shape index: {}]
  %s6 = inlined_call_operand.hbm [shape: f32[1,1024], index: 6, kind: input, shape index: {}]
  %s7 = inlined_call_operand.hbm [shape: bf16[1024,128], index: 7, kind: input, shape index: {}]
  %s8 = inlined_call_operand.hbm [shape: f32[1,128], index: 8, kind: input, shape index: {}]
  %s9 = inlined_call_operand.hbm [shape: f32[8,128], index: 9, kind: output, shape index: {0}]
  %s10 = inlined_call_operand.vmem [shape: f32[8,128], index: 10, kind: output, shape index: {1}]
  %11 = xla_tuple %s9, %s10
  %s12 = sld [smem:[#allocation0]]
  $region86: #{dann_forward.1} parent=0
    _
  %s14 = ssub.s32 1, %s12
  %s15 = scalar_select 0, %s14, %s12
  $region1: #{dann_forward.1} parent=0
    #allocation2 [shape = 'u8[262144]{0}', space=vmem, size = 0x40000, scoped, tag = 'input window, operand 1, single buffered']
    #allocation3 [shape = 's32[1]{0}', space=sflag, size = 0x4, scoped, tag = 'scoped memory for dann_forward.1']
    #allocation4 [shape = 's32[1]{0}', space=sflag, size = 0x4, scoped, tag = 'scoped memory for dann_forward.1']
    #allocation5 [shape = 'u8[512]{0}', space=vmem, size = 0x400, scoped, tag = 'input window, operand 2, single buffered']
    #allocation6 [shape = 's32[1]{0}', space=sflag, size = 0x4, scoped, tag = 'scoped memory for dann_forward.1']
    #allocation7 [shape = 'u8[294912]{0}', space=vmem, size = 0x48000, scoped, tag = 'input window, operand 3, single buffered']
    #allocation8 [shape = 'u8[4608]{0}', space=vmem, size = 0x1400, scoped, tag = 'input window, operand 4, single buffered']
    #allocation9 [shape = 's32[1]{0}', space=sflag, size = 0x4, scoped, tag = 'scoped memory for dann_forward.1']
    #allocation10 [shape = 'u8[2097152]{0}', space=vmem, size = 0x200000, scoped, tag = 'input window, operand 5, single buffered']
    #allocation11 [shape = 'u8[4096]{0}', space=vmem, size = 0x1000, scoped, tag = 'input window, operand 6, single buffered']
    #allocation12 [shape = 's32[1]{0}', space=sflag, size = 0x4, scoped, tag = 'scoped memory for dann_forward.1']
    #allocation13 [shape = 'u8[262144]{0}', space=vmem, size = 0x40000, scoped, tag = 'input window, operand 7, single buffered']
    #allocation14 [shape = 'u8[512]{0}', space=vmem, size = 0x400, scoped, tag = 'input window, operand 8, single buffered']
    #allocation15 [shape = 's32[1]{0}', space=sflag, size = 0x4, scoped, tag = 'scoped memory for dann_forward.1']
    #allocation16 [shape = 'u8[4096]{0}', space=vmem, size = 0x1000, scoped, tag = 'output window, operand 0, single buffered']
    %16 = vsyncpa [#allocation3], 0
    %17 = vsyncpa [#allocation6], 0
    %18 = vsyncpa [#allocation9], 0
    %19 = vsyncpa [#allocation12], 0
    %20 = vsyncpa [#allocation15], 0
    %21 = vsyncpa [#allocation4], 0
    // Predicated region
    $region2: #{dann_forward.1} parent=1 // pred_check
      _
    $region3: #{dann_forward.1} parent=1 // pred_check_branch
      %23 = sbr.rel (0) target = $region5
    $region4: #{dann_forward.1} parent=1 // pred_region
      _
    $region5: #{dann_forward.1} parent=1 // pred_fallthru
      _
    // Predicated region
    $region6: #{dann_forward.1} parent=1 // pred_check
      _
    $region7: #{dann_forward.1} parent=1 // pred_check_branch
      %25 = sbr.rel (0) target = $region9
    $region8: #{dann_forward.1} parent=1 // pred_region
      %27 = vsyncadd [#allocation3], 0
      %s28 = sshll.u32 %s1, 4
      %s29 = int_to_ptr.hbm [resolvable:$true] %s28
      %s30 = sshll.u32 [#allocation2], 4
      %s31 = int_to_ptr.vmem [resolvable:$true] %s30
      %36 = dma.hbm_to_vmem [thread:$0]  %s29, 8192, %s31, [#allocation3], 64, 64, 4
    $region9: #{dann_forward.1} parent=1 // pred_fallthru
      _
    // Predicated region
    $region10: #{dann_forward.1} parent=1 // pred_check
      _
    $region11: #{dann_forward.1} parent=1 // pred_check_branch
      %38 = sbr.rel (0) target = $region13
    $region12: #{dann_forward.1} parent=1 // pred_region
      %40 = vsyncadd [#allocation6], 0
      %s42 = sshll.u32 %s2, 4
      %s43 = int_to_ptr.hbm [resolvable:$true] %s42
      %s44 = sshll.u32 [#allocation5], 4
      %s45 = int_to_ptr.vmem [resolvable:$true] %s44
      %47 = dma.hbm_to_vmem [thread:$0]  %s43, 16, %s45, [#allocation6]
    $region13: #{dann_forward.1} parent=1 // pred_fallthru
      _
    // Predicated region
    $region14: #{dann_forward.1} parent=1 // pred_check
      _
    $region15: #{dann_forward.1} parent=1 // pred_check_branch
      %49 = sbr.rel (0) target = $region17
    $region16: #{dann_forward.1} parent=1 // pred_region
      %51 = vsyncadd [#allocation6], 0
      %s52 = sshll.u32 %s3, 4
      %s53 = int_to_ptr.hbm [resolvable:$true] %s52
      %s54 = sshll.u32 [#allocation7], 4
      %s55 = int_to_ptr.vmem [resolvable:$true] %s54
      %60 = dma.hbm_to_vmem [thread:$0]  %s53, 9216, %s55, [#allocation6], 576, 576, 36
    $region17: #{dann_forward.1} parent=1 // pred_fallthru
      _
    // Predicated region
    $region18: #{dann_forward.1} parent=1 // pred_check
      _
    $region19: #{dann_forward.1} parent=1 // pred_check_branch
      %62 = sbr.rel (0) target = $region21
    $region20: #{dann_forward.1} parent=1 // pred_region
      %64 = vsyncadd [#allocation9], 0
      %s66 = sshll.u32 %s4, 4
      %s67 = int_to_ptr.hbm [resolvable:$true] %s66
      %s68 = sshll.u32 [#allocation8], 4
      %s69 = int_to_ptr.vmem [resolvable:$true] %s68
      %71 = dma.hbm_to_vmem [thread:$0]  %s67, 144, %s69, [#allocation9]
    $region21: #{dann_forward.1} parent=1 // pred_fallthru
      _
    // Predicated region
    $region22: #{dann_forward.1} parent=1 // pred_check
      _
    $region23: #{dann_forward.1} parent=1 // pred_check_branch
      %73 = sbr.rel (0) target = $region25
    $region24: #{dann_forward.1} parent=1 // pred_region
      %75 = vsyncadd [#allocation9], 0
      %s76 = sshll.u32 %s5, 4
      %s77 = int_to_ptr.hbm [resolvable:$true] %s76
      %s78 = sshll.u32 [#allocation10], 4
      %s79 = int_to_ptr.vmem [resolvable:$true] %s78
      %84 = dma.hbm_to_vmem [thread:$0]  %s77, 65536, %s79, [#allocation9], 512, 512, 32
    $region25: #{dann_forward.1} parent=1 // pred_fallthru
      _
    // Predicated region
    $region26: #{dann_forward.1} parent=1 // pred_check
      _
    $region27: #{dann_forward.1} parent=1 // pred_check_branch
      %86 = sbr.rel (0) target = $region29
    $region28: #{dann_forward.1} parent=1 // pred_region
      %88 = vsyncadd [#allocation12], 0
      %s90 = sshll.u32 %s6, 4
      %s91 = int_to_ptr.hbm [resolvable:$true] %s90
      %s92 = sshll.u32 [#allocation11], 4
      %s93 = int_to_ptr.vmem [resolvable:$true] %s92
      %95 = dma.hbm_to_vmem [thread:$0]  %s91, 128, %s93, [#allocation12]
    $region29: #{dann_forward.1} parent=1 // pred_fallthru
      _
    // Predicated region
    $region30: #{dann_forward.1} parent=1 // pred_check
      _
    $region31: #{dann_forward.1} parent=1 // pred_check_branch
      %97 = sbr.rel (0) target = $region33
    $region32: #{dann_forward.1} parent=1 // pred_region
      %99 = vsyncadd [#allocation12], 0
      %s100 = sshll.u32 %s7, 4
      %s101 = int_to_ptr.hbm [resolvable:$true] %s100
      %s102 = sshll.u32 [#allocation13], 4
      %s103 = int_to_ptr.vmem [resolvable:$true] %s102
      %108 = dma.hbm_to_vmem [thread:$0]  %s101, 8192, %s103, [#allocation12], 64, 64, 4
    $region33: #{dann_forward.1} parent=1 // pred_fallthru
      _
    // Predicated region
    $region34: #{dann_forward.1} parent=1 // pred_check
      _
    $region35: #{dann_forward.1} parent=1 // pred_check_branch
      %110 = sbr.rel (0) target = $region37
    $region36: #{dann_forward.1} parent=1 // pred_region
      %112 = vsyncadd [#allocation15], 0
      %s114 = sshll.u32 %s8, 4
      %s115 = int_to_ptr.hbm [resolvable:$true] %s114
      %s116 = sshll.u32 [#allocation14], 4
      %s117 = int_to_ptr.vmem [resolvable:$true] %s116
      %119 = dma.hbm_to_vmem [thread:$0]  %s115, 16, %s117, [#allocation15]
    $region37: #{dann_forward.1} parent=1 // pred_fallthru
      _
    // Predicated region
    $region38: #{dann_forward.1} parent=1 // pred_check
      _
    $region39: #{dann_forward.1} parent=1 // pred_check_branch
      %121 = sbr.rel (0) target = $region41
    $region40: #{dann_forward.1} parent=1 // pred_region
      %123 = dma.done [#allocation3], 8192
    $region41: #{dann_forward.1} parent=1 // pred_fallthru
      _
    // Predicated region
    $region42: #{dann_forward.1} parent=1 // pred_check
      _
    $region43: #{dann_forward.1} parent=1 // pred_check_branch
      %125 = sbr.rel (0) target = $region45
    $region44: #{dann_forward.1} parent=1 // pred_region
      %127 = dma.done [#allocation6], 16
    $region45: #{dann_forward.1} parent=1 // pred_fallthru
      _
    // Predicated region
    $region46: #{dann_forward.1} parent=1 // pred_check
      _
    $region47: #{dann_forward.1} parent=1 // pred_check_branch
      %129 = sbr.rel (0) target = $region49
    $region48: #{dann_forward.1} parent=1 // pred_region
      %131 = dma.done [#allocation6], 9216
    $region49: #{dann_forward.1} parent=1 // pred_fallthru
      _
    // Predicated region
    $region50: #{dann_forward.1} parent=1 // pred_check
      _
    $region51: #{dann_forward.1} parent=1 // pred_check_branch
      %133 = sbr.rel (0) target = $region53
    $region52: #{dann_forward.1} parent=1 // pred_region
      %135 = dma.done [#allocation9], 144
    $region53: #{dann_forward.1} parent=1 // pred_fallthru
      _
    // Predicated region
    $region54: #{dann_forward.1} parent=1 // pred_check
      _
    $region55: #{dann_forward.1} parent=1 // pred_check_branch
      %137 = sbr.rel (0) target = $region57
    $region56: #{dann_forward.1} parent=1 // pred_region
      %139 = dma.done [#allocation9], 65536
    $region57: #{dann_forward.1} parent=1 // pred_fallthru
      _
    // Predicated region
    $region58: #{dann_forward.1} parent=1 // pred_check
      _
    $region59: #{dann_forward.1} parent=1 // pred_check_branch
      %141 = sbr.rel (0) target = $region61
    $region60: #{dann_forward.1} parent=1 // pred_region
      %143 = dma.done [#allocation12], 128
    $region61: #{dann_forward.1} parent=1 // pred_fallthru
      _
    // Predicated region
    $region62: #{dann_forward.1} parent=1 // pred_check
      _
    $region63: #{dann_forward.1} parent=1 // pred_check_branch
      %145 = sbr.rel (0) target = $region65
    $region64: #{dann_forward.1} parent=1 // pred_region
      %147 = dma.done [#allocation12], 8192
    $region65: #{dann_forward.1} parent=1 // pred_fallthru
      _
    // Predicated region
    $region66: #{dann_forward.1} parent=1 // pred_check
      _
    $region67: #{dann_forward.1} parent=1 // pred_check_branch
      %149 = sbr.rel (0) target = $region69
    $region68: #{dann_forward.1} parent=1 // pred_region
      %151 = dma.done [#allocation15], 16
    $region69: #{dann_forward.1} parent=1 // pred_fallthru
      _
    %v152 = vld [vmem:[%s0] sm:$0xff]
    %v153 = vld [vmem:[%s0 + $0x8] sm:$0xff]
    %v154 = vld [vmem:[%s0 + $0x10] sm:$0xff]
    %v155 = vld [vmem:[%s0 + $0x18] sm:$0xff]
    %v156 = vld [vmem:[%s0 + $0x20] sm:$0xff]
    %v157 = vld [vmem:[%s0 + $0x28] sm:$0xff]
    %v158 = vld [vmem:[%s0 + $0x30] sm:$0xff]
    %v159 = vld [vmem:[%s0 + $0x38] sm:$0xff]
    %v160 = vpack.c.bf16 %v152, %v152
    %v161 = vpack.c.bf16 %v153, %v153
    %v162 = vpack.c.bf16 %v154, %v154
    %v163 = vpack.c.bf16 %v155, %v155
    %v164 = vpack.c.bf16 %v156, %v156
    %v165 = vpack.c.bf16 %v157, %v157
    %v166 = vpack.c.bf16 %v158, %v158
    %v167 = vpack.c.bf16 %v159, %v159
    %v168 = vld [vmem:[#allocation2] sm:$0xf]
    %v169 = vld [vmem:[#allocation2 + $0x4] sm:$0xf]
    %v170 = vld [vmem:[#allocation2 + $0x8] sm:$0xf]
    %v171 = vld [vmem:[#allocation2 + $0xc] sm:$0xf]
    %v172 = vld [vmem:[#allocation2 + $0x10] sm:$0xf]
    %v173 = vld [vmem:[#allocation2 + $0x14] sm:$0xf]
    %v174 = vld [vmem:[#allocation2 + $0x18] sm:$0xf]
    %v175 = vld [vmem:[#allocation2 + $0x1c] sm:$0xf]
    %v176 = vld [vmem:[#allocation2 + $0x20] sm:$0xf]
    %v177 = vld [vmem:[#allocation2 + $0x24] sm:$0xf]
    %v178 = vld [vmem:[#allocation2 + $0x28] sm:$0xf]
    %v179 = vld [vmem:[#allocation2 + $0x2c] sm:$0xf]
    %v180 = vld [vmem:[#allocation2 + $0x30] sm:$0xf]
    %v181 = vld [vmem:[#allocation2 + $0x34] sm:$0xf]
    %v182 = vld [vmem:[#allocation2 + $0x38] sm:$0xf]
    %v183 = vld [vmem:[#allocation2 + $0x3c] sm:$0xf]
    %v184 = vld [vmem:[#allocation2 + $0x40] sm:$0xf]
    %v185 = vld [vmem:[#allocation2 + $0x44] sm:$0xf]
    %v186 = vld [vmem:[#allocation2 + $0x48] sm:$0xf]
    %v187 = vld [vmem:[#allocation2 + $0x4c] sm:$0xf]
    %v188 = vld [vmem:[#allocation2 + $0x50] sm:$0xf]
    %v189 = vld [vmem:[#allocation2 + $0x54] sm:$0xf]
    %v190 = vld [vmem:[#allocation2 + $0x58] sm:$0xf]
    %v191 = vld [vmem:[#allocation2 + $0x5c] sm:$0xf]
    %v192 = vld [vmem:[#allocation2 + $0x60] sm:$0xf]
    %v193 = vld [vmem:[#allocation2 + $0x64] sm:$0xf]
    %v194 = vld [vmem:[#allocation2 + $0x68] sm:$0xf]
    %v195 = vld [vmem:[#allocation2 + $0x6c] sm:$0xf]
    %v196 = vld [vmem:[#allocation2 + $0x70] sm:$0xf]
    %v197 = vld [vmem:[#allocation2 + $0x74] sm:$0xf]
    %v198 = vld [vmem:[#allocation2 + $0x78] sm:$0xf]
    %v199 = vld [vmem:[#allocation2 + $0x7c] sm:$0xf]
    %v200 = vld [vmem:[#allocation2 + $0x80] sm:$0xf]
    %v201 = vld [vmem:[#allocation2 + $0x84] sm:$0xf]
    %v202 = vld [vmem:[#allocation2 + $0x88] sm:$0xf]
    %v203 = vld [vmem:[#allocation2 + $0x8c] sm:$0xf]
    %v204 = vld [vmem:[#allocation2 + $0x90] sm:$0xf]
    %v205 = vld [vmem:[#allocation2 + $0x94] sm:$0xf]
    %v206 = vld [vmem:[#allocation2 + $0x98] sm:$0xf]
    %v207 = vld [vmem:[#allocation2 + $0x9c] sm:$0xf]
    %v208 = vld [vmem:[#allocation2 + $0xa0] sm:$0xf]
    %v209 = vld [vmem:[#allocation2 + $0xa4] sm:$0xf]
    %v210 = vld [vmem:[#allocation2 + $0xa8] sm:$0xf]
    %v211 = vld [vmem:[#allocation2 + $0xac] sm:$0xf]
    %v212 = vld [vmem:[#allocation2 + $0xb0] sm:$0xf]
    %v213 = vld [vmem:[#allocation2 + $0xb4] sm:$0xf]
    %v214 = vld [vmem:[#allocation2 + $0xb8] sm:$0xf]
    %v215 = vld [vmem:[#allocation2 + $0xbc] sm:$0xf]
    %v216 = vld [vmem:[#allocation2 + $0xc0] sm:$0xf]
    %v217 = vld [vmem:[#allocation2 + $0xc4] sm:$0xf]
    %v218 = vld [vmem:[#allocation2 + $0xc8] sm:$0xf]
    %v219 = vld [vmem:[#allocation2 + $0xcc] sm:$0xf]
    %v220 = vld [vmem:[#allocation2 + $0xd0] sm:$0xf]
    %v221 = vld [vmem:[#allocation2 + $0xd4] sm:$0xf]
    %v222 = vld [vmem:[#allocation2 + $0xd8] sm:$0xf]
    %v223 = vld [vmem:[#allocation2 + $0xdc] sm:$0xf]
    %v224 = vld [vmem:[#allocation2 + $0xe0] sm:$0xf]
    %v225 = vld [vmem:[#allocation2 + $0xe4] sm:$0xf]
    %v226 = vld [vmem:[#allocation2 + $0xe8] sm:$0xf]
    %v227 = vld [vmem:[#allocation2 + $0xec] sm:$0xf]
    %v228 = vld [vmem:[#allocation2 + $0xf0] sm:$0xf]
    %v229 = vld [vmem:[#allocation2 + $0xf4] sm:$0xf]
    %v230 = vld [vmem:[#allocation2 + $0xf8] sm:$0xf]
    %v231 = vld [vmem:[#allocation2 + $0xfc] sm:$0xf]
    %v232 = vld [vmem:[#allocation2 + $0x100] sm:$0xf]
    %v233 = vld [vmem:[#allocation2 + $0x104] sm:$0xf]
    %v234 = vld [vmem:[#allocation2 + $0x108] sm:$0xf]
    %v235 = vld [vmem:[#allocation2 + $0x10c] sm:$0xf]
    %v236 = vld [vmem:[#allocation2 + $0x110] sm:$0xf]
    %v237 = vld [vmem:[#allocation2 + $0x114] sm:$0xf]
    %v238 = vld [vmem:[#allocation2 + $0x118] sm:$0xf]
    %v239 = vld [vmem:[#allocation2 + $0x11c] sm:$0xf]
    %v240 = vld [vmem:[#allocation2 + $0x120] sm:$0xf]
    %v241 = vld [vmem:[#allocation2 + $0x124] sm:$0xf]
    %v242 = vld [vmem:[#allocation2 + $0x128] sm:$0xf]
    %v243 = vld [vmem:[#allocation2 + $0x12c] sm:$0xf]
    %v244 = vld [vmem:[#allocation2 + $0x130] sm:$0xf]
    %v245 = vld [vmem:[#allocation2 + $0x134] sm:$0xf]
    %v246 = vld [vmem:[#allocation2 + $0x138] sm:$0xf]
    %v247 = vld [vmem:[#allocation2 + $0x13c] sm:$0xf]
    %v248 = vld [vmem:[#allocation2 + $0x140] sm:$0xf]
    %v249 = vld [vmem:[#allocation2 + $0x144] sm:$0xf]
    %v250 = vld [vmem:[#allocation2 + $0x148] sm:$0xf]
    %v251 = vld [vmem:[#allocation2 + $0x14c] sm:$0xf]
    %v252 = vld [vmem:[#allocation2 + $0x150] sm:$0xf]
    %v253 = vld [vmem:[#allocation2 + $0x154] sm:$0xf]
    %v254 = vld [vmem:[#allocation2 + $0x158] sm:$0xf]
    %v255 = vld [vmem:[#allocation2 + $0x15c] sm:$0xf]
    %v256 = vld [vmem:[#allocation2 + $0x160] sm:$0xf]
    %v257 = vld [vmem:[#allocation2 + $0x164] sm:$0xf]
    %v258 = vld [vmem:[#allocation2 + $0x168] sm:$0xf]
    %v259 = vld [vmem:[#allocation2 + $0x16c] sm:$0xf]
    %v260 = vld [vmem:[#allocation2 + $0x170] sm:$0xf]
    %v261 = vld [vmem:[#allocation2 + $0x174] sm:$0xf]
    %v262 = vld [vmem:[#allocation2 + $0x178] sm:$0xf]
    %v263 = vld [vmem:[#allocation2 + $0x17c] sm:$0xf]
    %v264 = vld [vmem:[#allocation2 + $0x180] sm:$0xf]
    %v265 = vld [vmem:[#allocation2 + $0x184] sm:$0xf]
    %v266 = vld [vmem:[#allocation2 + $0x188] sm:$0xf]
    %v267 = vld [vmem:[#allocation2 + $0x18c] sm:$0xf]
    %v268 = vld [vmem:[#allocation2 + $0x190] sm:$0xf]
    %v269 = vld [vmem:[#allocation2 + $0x194] sm:$0xf]
    %v270 = vld [vmem:[#allocation2 + $0x198] sm:$0xf]
    %v271 = vld [vmem:[#allocation2 + $0x19c] sm:$0xf]
    %v272 = vld [vmem:[#allocation2 + $0x1a0] sm:$0xf]
    %v273 = vld [vmem:[#allocation2 + $0x1a4] sm:$0xf]
    %v274 = vld [vmem:[#allocation2 + $0x1a8] sm:$0xf]
    %v275 = vld [vmem:[#allocation2 + $0x1ac] sm:$0xf]
    %v276 = vld [vmem:[#allocation2 + $0x1b0] sm:$0xf]
    %v277 = vld [vmem:[#allocation2 + $0x1b4] sm:$0xf]
    %v278 = vld [vmem:[#allocation2 + $0x1b8] sm:$0xf]
    %v279 = vld [vmem:[#allocation2 + $0x1bc] sm:$0xf]
    %v280 = vld [vmem:[#allocation2 + $0x1c0] sm:$0xf]
    %v281 = vld [vmem:[#allocation2 + $0x1c4] sm:$0xf]
    %v282 = vld [vmem:[#allocation2 + $0x1c8] sm:$0xf]
    %v283 = vld [vmem:[#allocation2 + $0x1cc] sm:$0xf]
    %v284 = vld [vmem:[#allocation2 + $0x1d0] sm:$0xf]
    %v285 = vld [vmem:[#allocation2 + $0x1d4] sm:$0xf]
    %v286 = vld [vmem:[#allocation2 + $0x1d8] sm:$0xf]
    %v287 = vld [vmem:[#allocation2 + $0x1dc] sm:$0xf]
    %v288 = vld [vmem:[#allocation2 + $0x1e0] sm:$0xf]
    %v289 = vld [vmem:[#allocation2 + $0x1e4] sm:$0xf]
    %v290 = vld [vmem:[#allocation2 + $0x1e8] sm:$0xf]
    %v291 = vld [vmem:[#allocation2 + $0x1ec] sm:$0xf]
    %v292 = vld [vmem:[#allocation2 + $0x1f0] sm:$0xf]
    %v293 = vld [vmem:[#allocation2 + $0x1f4] sm:$0xf]
    %v294 = vld [vmem:[#allocation2 + $0x1f8] sm:$0xf]
    %v295 = vld [vmem:[#allocation2 + $0x1fc] sm:$0xf]
    %v296 = vld [vmem:[#allocation5] sm:$0x1]
    %v298 = vperm.slane %v296, 0
    %v428 = vunpack.c.l.b16 %v168
    %v429 = vunpack.c.l.b16 %v169
    %v430 = vunpack.c.l.b16 %v170
    %v431 = vunpack.c.l.b16 %v171
    %v432 = vunpack.c.l.b16 %v172
    %v433 = vunpack.c.l.b16 %v173
    %v434 = vunpack.c.l.b16 %v174
    %v435 = vunpack.c.l.b16 %v175
    %v436 = vunpack.c.l.b16 %v176
    %v437 = vunpack.c.l.b16 %v177
    %v438 = vunpack.c.l.b16 %v178
    %v439 = vunpack.c.l.b16 %v179
    %v440 = vunpack.c.l.b16 %v180
    %v441 = vunpack.c.l.b16 %v181
    %v442 = vunpack.c.l.b16 %v182
    %v443 = vunpack.c.l.b16 %v183
    %v444 = vunpack.c.l.b16 %v184
    %v445 = vunpack.c.l.b16 %v185
    %v446 = vunpack.c.l.b16 %v186
    %v447 = vunpack.c.l.b16 %v187
    %v448 = vunpack.c.l.b16 %v188
    %v449 = vunpack.c.l.b16 %v189
    %v450 = vunpack.c.l.b16 %v190
    %v451 = vunpack.c.l.b16 %v191
    %v452 = vunpack.c.l.b16 %v192
    %v453 = vunpack.c.l.b16 %v193
    %v454 = vunpack.c.l.b16 %v194
    %v455 = vunpack.c.l.b16 %v195
    %v456 = vunpack.c.l.b16 %v196
    %v457 = vunpack.c.l.b16 %v197
    %v458 = vunpack.c.l.b16 %v198
    %v459 = vunpack.c.l.b16 %v199
    %v460 = vunpack.c.l.b16 %v200
    %v461 = vunpack.c.l.b16 %v201
    %v462 = vunpack.c.l.b16 %v202
    %v463 = vunpack.c.l.b16 %v203
    %v464 = vunpack.c.l.b16 %v204
    %v465 = vunpack.c.l.b16 %v205
    %v466 = vunpack.c.l.b16 %v206
    %v467 = vunpack.c.l.b16 %v207
    %v468 = vunpack.c.l.b16 %v208
    %v469 = vunpack.c.l.b16 %v209
    %v470 = vunpack.c.l.b16 %v210
    %v471 = vunpack.c.l.b16 %v211
    %v472 = vunpack.c.l.b16 %v212
    %v473 = vunpack.c.l.b16 %v213
    %v474 = vunpack.c.l.b16 %v214
    %v475 = vunpack.c.l.b16 %v215
    %v476 = vunpack.c.l.b16 %v216
    %v477 = vunpack.c.l.b16 %v217
    %v478 = vunpack.c.l.b16 %v218
    %v479 = vunpack.c.l.b16 %v219
    %v480 = vunpack.c.l.b16 %v220
    %v481 = vunpack.c.l.b16 %v221
    %v482 = vunpack.c.l.b16 %v222
    %v483 = vunpack.c.l.b16 %v223
    %v484 = vunpack.c.l.b16 %v224
    %v485 = vunpack.c.l.b16 %v225
    %v486 = vunpack.c.l.b16 %v226
    %v487 = vunpack.c.l.b16 %v227
    %v488 = vunpack.c.l.b16 %v228
    %v489 = vunpack.c.l.b16 %v229
    %v490 = vunpack.c.l.b16 %v230
    %v491 = vunpack.c.l.b16 %v231
    %v492 = vunpack.c.l.b16 %v232
    %v493 = vunpack.c.l.b16 %v233
    %v494 = vunpack.c.l.b16 %v234
    %v495 = vunpack.c.l.b16 %v235
    %v496 = vunpack.c.l.b16 %v236
    %v497 = vunpack.c.l.b16 %v237
    %v498 = vunpack.c.l.b16 %v238
    %v499 = vunpack.c.l.b16 %v239
    %v500 = vunpack.c.l.b16 %v240
    %v501 = vunpack.c.l.b16 %v241
    %v502 = vunpack.c.l.b16 %v242
    %v503 = vunpack.c.l.b16 %v243
    %v504 = vunpack.c.l.b16 %v244
    %v505 = vunpack.c.l.b16 %v245
    %v506 = vunpack.c.l.b16 %v246
    %v507 = vunpack.c.l.b16 %v247
    %v508 = vunpack.c.l.b16 %v248
    %v509 = vunpack.c.l.b16 %v249
    %v510 = vunpack.c.l.b16 %v250
    %v511 = vunpack.c.l.b16 %v251
    %v512 = vunpack.c.l.b16 %v252
    %v513 = vunpack.c.l.b16 %v253
    %v514 = vunpack.c.l.b16 %v254
    %v515 = vunpack.c.l.b16 %v255
    %v516 = vunpack.c.l.b16 %v256
    %v517 = vunpack.c.l.b16 %v257
    %v518 = vunpack.c.l.b16 %v258
    %v519 = vunpack.c.l.b16 %v259
    %v520 = vunpack.c.l.b16 %v260
    %v521 = vunpack.c.l.b16 %v261
    %v522 = vunpack.c.l.b16 %v262
    %v523 = vunpack.c.l.b16 %v263
    %v524 = vunpack.c.l.b16 %v264
    %v525 = vunpack.c.l.b16 %v265
    %v526 = vunpack.c.l.b16 %v266
    %v527 = vunpack.c.l.b16 %v267
    %v528 = vunpack.c.l.b16 %v268
    %v529 = vunpack.c.l.b16 %v269
    %v530 = vunpack.c.l.b16 %v270
    %v531 = vunpack.c.l.b16 %v271
    %v532 = vunpack.c.l.b16 %v272
    %v533 = vunpack.c.l.b16 %v273
    %v534 = vunpack.c.l.b16 %v274
    %v535 = vunpack.c.l.b16 %v275
    %v536 = vunpack.c.l.b16 %v276
    %v537 = vunpack.c.l.b16 %v277
    %v538 = vunpack.c.l.b16 %v278
    %v539 = vunpack.c.l.b16 %v279
    %v540 = vunpack.c.l.b16 %v280
    %v541 = vunpack.c.l.b16 %v281
    %v542 = vunpack.c.l.b16 %v282
    %v543 = vunpack.c.l.b16 %v283
    %v544 = vunpack.c.l.b16 %v284
    %v545 = vunpack.c.l.b16 %v285
    %v546 = vunpack.c.l.b16 %v286
    %v547 = vunpack.c.l.b16 %v287
    %v548 = vunpack.c.l.b16 %v288
    %v549 = vunpack.c.l.b16 %v289
    %v550 = vunpack.c.l.b16 %v290
    %v551 = vunpack.c.l.b16 %v291
    %v552 = vunpack.c.l.b16 %v292
    %v553 = vunpack.c.l.b16 %v293
    %v554 = vunpack.c.l.b16 %v294
    %v555 = vunpack.c.l.b16 %v295
    %v556 = vpack.c.b16 %v429, %v428
    %v557 = vpack.c.b16 %v431, %v430
    %v558 = vpack.c.b16 %v433, %v432
    %v559 = vpack.c.b16 %v435, %v434
    %v560 = vpack.c.b16 %v437, %v436
    %v561 = vpack.c.b16 %v439, %v438
    %v562 = vpack.c.b16 %v441, %v440
    %v563 = vpack.c.b16 %v443, %v442
    %v564 = vpack.c.b16 %v445, %v444
    %v565 = vpack.c.b16 %v447, %v446
    %v566 = vpack.c.b16 %v449, %v448
    %v567 = vpack.c.b16 %v451, %v450
    %v568 = vpack.c.b16 %v453, %v452
    %v569 = vpack.c.b16 %v455, %v454
    %v570 = vpack.c.b16 %v457, %v456
    %v571 = vpack.c.b16 %v459, %v458
    %v572 = vpack.c.b16 %v461, %v460
    %v573 = vpack.c.b16 %v463, %v462
    %v574 = vpack.c.b16 %v465, %v464
    %v575 = vpack.c.b16 %v467, %v466
    %v576 = vpack.c.b16 %v469, %v468
    %v577 = vpack.c.b16 %v471, %v470
    %v578 = vpack.c.b16 %v473, %v472
    %v579 = vpack.c.b16 %v475, %v474
    %v580 = vpack.c.b16 %v477, %v476
    %v581 = vpack.c.b16 %v479, %v478
    %v582 = vpack.c.b16 %v481, %v480
    %v583 = vpack.c.b16 %v483, %v482
    %v584 = vpack.c.b16 %v485, %v484
    %v585 = vpack.c.b16 %v487, %v486
    %v586 = vpack.c.b16 %v489, %v488
    %v587 = vpack.c.b16 %v491, %v490
    %v588 = vpack.c.b16 %v493, %v492
    %v589 = vpack.c.b16 %v495, %v494
    %v590 = vpack.c.b16 %v497, %v496
    %v591 = vpack.c.b16 %v499, %v498
    %v592 = vpack.c.b16 %v501, %v500
    %v593 = vpack.c.b16 %v503, %v502
    %v594 = vpack.c.b16 %v505, %v504
    %v595 = vpack.c.b16 %v507, %v506
    %v596 = vpack.c.b16 %v509, %v508
    %v597 = vpack.c.b16 %v511, %v510
    %v598 = vpack.c.b16 %v513, %v512
    %v599 = vpack.c.b16 %v515, %v514
    %v600 = vpack.c.b16 %v517, %v516
    %v601 = vpack.c.b16 %v519, %v518
    %v602 = vpack.c.b16 %v521, %v520
    %v603 = vpack.c.b16 %v523, %v522
    %v604 = vpack.c.b16 %v525, %v524
    %v605 = vpack.c.b16 %v527, %v526
    %v606 = vpack.c.b16 %v529, %v528
    %v607 = vpack.c.b16 %v531, %v530
    %v608 = vpack.c.b16 %v533, %v532
    %v609 = vpack.c.b16 %v535, %v534
    %v610 = vpack.c.b16 %v537, %v536
    %v611 = vpack.c.b16 %v539, %v538
    %v612 = vpack.c.b16 %v541, %v540
    %v613 = vpack.c.b16 %v543, %v542
    %v614 = vpack.c.b16 %v545, %v544
    %v615 = vpack.c.b16 %v547, %v546
    %v616 = vpack.c.b16 %v549, %v548
    %v617 = vpack.c.b16 %v551, %v550
    %v618 = vpack.c.b16 %v553, %v552
    %v619 = vpack.c.b16 %v555, %v554
    %684 = vmatpush.bf16.msra.mxu0 %v563
    %685 = vmatpush.bf16.msra.mxu0 %v562
    %686 = vmatpush.bf16.msra.mxu0 %v561
    %687 = vmatpush.bf16.msra.mxu0 %v560
    %688 = vmatpush.bf16.msra.mxu0 %v559
    %689 = vmatpush.bf16.msra.mxu0 %v558
    %690 = vmatpush.bf16.msra.mxu0 %v557
    %691 = vmatpush.bf16.msra.mxu0 %v556
    %692 = vmatmul.bf16.gmra.mxu0 %v160
    %v693 = vpop.f32.mrf.mxu0
    %v694 = vadd.f32 %v298, %v693
    %v695 = vpop.f32.mrf.mxu0
    %696 = vdwg.mxu0
    %697 = vmatpush.bf16.msra.mxu0 %v571
    %698 = vmatpush.bf16.msra.mxu0 %v570
    %699 = vmatpush.bf16.msra.mxu0 %v569
    %700 = vmatpush.bf16.msra.mxu0 %v568
    %701 = vmatpush.bf16.msra.mxu0 %v567
    %702 = vmatpush.bf16.msra.mxu0 %v566
    %703 = vmatpush.bf16.msra.mxu0 %v565
    %704 = vmatpush.bf16.msra.mxu0 %v564
    %705 = vmatmul.bf16.gmra.mxu0 %v161
    %v706 = vpop.f32.mrf.mxu0
    %v707 = vadd.f32 %v694, %v706
    %v708 = vpop.f32.mrf.mxu0
    %709 = vdwg.mxu0
    %710 = vmatpush.bf16.msra.mxu0 %v579
    %711 = vmatpush.bf16.msra.mxu0 %v578
    %712 = vmatpush.bf16.msra.mxu0 %v577
    %713 = vmatpush.bf16.msra.mxu0 %v576
    %714 = vmatpush.bf16.msra.mxu0 %v575
    %715 = vmatpush.bf16.msra.mxu0 %v574
    %716 = vmatpush.bf16.msra.mxu0 %v573
    %717 = vmatpush.bf16.msra.mxu0 %v572
    %718 = vmatmul.bf16.gmra.mxu0 %v162
    %v719 = vpop.f32.mrf.mxu0
    %v720 = vadd.f32 %v707, %v719
    %v721 = vpop.f32.mrf.mxu0
    %722 = vdwg.mxu0
    %723 = vmatpush.bf16.msra.mxu0 %v587
    %724 = vmatpush.bf16.msra.mxu0 %v586
    %725 = vmatpush.bf16.msra.mxu0 %v585
    %726 = vmatpush.bf16.msra.mxu0 %v584
    %727 = vmatpush.bf16.msra.mxu0 %v583
    %728 = vmatpush.bf16.msra.mxu0 %v582
    %729 = vmatpush.bf16.msra.mxu0 %v581
    %730 = vmatpush.bf16.msra.mxu0 %v580
    %731 = vmatmul.bf16.gmra.mxu0 %v163
    %v732 = vpop.f32.mrf.mxu0
    %v733 = vadd.f32 %v720, %v732
    %v734 = vpop.f32.mrf.mxu0
    %735 = vdwg.mxu0
    %736 = vmatpush.bf16.msra.mxu0 %v595
    %737 = vmatpush.bf16.msra.mxu0 %v594
    %738 = vmatpush.bf16.msra.mxu0 %v593
    %739 = vmatpush.bf16.msra.mxu0 %v592
    %740 = vmatpush.bf16.msra.mxu0 %v591
    %741 = vmatpush.bf16.msra.mxu0 %v590
    %742 = vmatpush.bf16.msra.mxu0 %v589
    %743 = vmatpush.bf16.msra.mxu0 %v588
    %744 = vmatmul.bf16.gmra.mxu0 %v164
    %v745 = vpop.f32.mrf.mxu0
    %v746 = vadd.f32 %v733, %v745
    %v747 = vpop.f32.mrf.mxu0
    %748 = vdwg.mxu0
    %749 = vmatpush.bf16.msra.mxu0 %v603
    %750 = vmatpush.bf16.msra.mxu0 %v602
    %751 = vmatpush.bf16.msra.mxu0 %v601
    %752 = vmatpush.bf16.msra.mxu0 %v600
    %753 = vmatpush.bf16.msra.mxu0 %v599
    %754 = vmatpush.bf16.msra.mxu0 %v598
    %755 = vmatpush.bf16.msra.mxu0 %v597
    %756 = vmatpush.bf16.msra.mxu0 %v596
    %757 = vmatmul.bf16.gmra.mxu0 %v165
    %v758 = vpop.f32.mrf.mxu0
    %v759 = vadd.f32 %v746, %v758
    %v760 = vpop.f32.mrf.mxu0
    %761 = vdwg.mxu0
    %762 = vmatpush.bf16.msra.mxu0 %v611
    %763 = vmatpush.bf16.msra.mxu0 %v610
    %764 = vmatpush.bf16.msra.mxu0 %v609
    %765 = vmatpush.bf16.msra.mxu0 %v608
    %766 = vmatpush.bf16.msra.mxu0 %v607
    %767 = vmatpush.bf16.msra.mxu0 %v606
    %768 = vmatpush.bf16.msra.mxu0 %v605
    %769 = vmatpush.bf16.msra.mxu0 %v604
    %770 = vmatmul.bf16.gmra.mxu0 %v166
    %v771 = vpop.f32.mrf.mxu0
    %v772 = vadd.f32 %v759, %v771
    %v773 = vpop.f32.mrf.mxu0
    %774 = vdwg.mxu0
    %775 = vmatpush.bf16.msra.mxu0 %v619
    %776 = vmatpush.bf16.msra.mxu0 %v618
    %777 = vmatpush.bf16.msra.mxu0 %v617
    %778 = vmatpush.bf16.msra.mxu0 %v616
    %779 = vmatpush.bf16.msra.mxu0 %v615
    %780 = vmatpush.bf16.msra.mxu0 %v614
    %781 = vmatpush.bf16.msra.mxu0 %v613
    %782 = vmatpush.bf16.msra.mxu0 %v612
    %783 = vmatmul.bf16.gmra.mxu0 %v167
    %v784 = vpop.f32.mrf.mxu0
    %v785 = vadd.f32 %v772, %v784
    %v786 = vpop.f32.mrf.mxu0
    %787 = vdwg.mxu0
    %v788 = vmax.f32 %v785, 0.0
    %v789 = vpack.c.bf16 %v788, %v788
    %v790 = vld [vmem:[#allocation7] sm:$0xff]
    %v791 = vld [vmem:[#allocation7 + $0x8] sm:$0xff]
    %v792 = vld [vmem:[#allocation7 + $0x10] sm:$0xff]
    %v793 = vld [vmem:[#allocation7 + $0x18] sm:$0xff]
    %v794 = vld [vmem:[#allocation7 + $0x20] sm:$0xf]
    %v795 = vld [vmem:[#allocation7 + $0x24] sm:$0xff]
    %v796 = vld [vmem:[#allocation7 + $0x2c] sm:$0xff]
    %v797 = vld [vmem:[#allocation7 + $0x34] sm:$0xff]
    %v798 = vld [vmem:[#allocation7 + $0x3c] sm:$0xff]
    %v799 = vld [vmem:[#allocation7 + $0x44] sm:$0xf]
    %v800 = vld [vmem:[#allocation7 + $0x48] sm:$0xff]
    %v801 = vld [vmem:[#allocation7 + $0x50] sm:$0xff]
    %v802 = vld [vmem:[#allocation7 + $0x58] sm:$0xff]
    %v803 = vld [vmem:[#allocation7 + $0x60] sm:$0xff]
    %v804 = vld [vmem:[#allocation7 + $0x68] sm:$0xf]
    %v805 = vld [vmem:[#allocation7 + $0x6c] sm:$0xff]
    %v806 = vld [vmem:[#allocation7 + $0x74] sm:$0xff]
    %v807 = vld [vmem:[#allocation7 + $0x7c] sm:$0xff]
    %v808 = vld [vmem:[#allocation7 + $0x84] sm:$0xff]
    %v809 = vld [vmem:[#allocation7 + $0x8c] sm:$0xf]
    %v810 = vld [vmem:[#allocation7 + $0x90] sm:$0xff]
    %v811 = vld [vmem:[#allocation7 + $0x98] sm:$0xff]
    %v812 = vld [vmem:[#allocation7 + $0xa0] sm:$0xff]
    %v813 = vld [vmem:[#allocation7 + $0xa8] sm:$0xff]
    %v814 = vld [vmem:[#allocation7 + $0xb0] sm:$0xf]
    %v815 = vld [vmem:[#allocation7 + $0xb4] sm:$0xff]
    %v816 = vld [vmem:[#allocation7 + $0xbc] sm:$0xff]
    %v817 = vld [vmem:[#allocation7 + $0xc4] sm:$0xff]
    %v818 = vld [vmem:[#allocation7 + $0xcc] sm:$0xff]
    %v819 = vld [vmem:[#allocation7 + $0xd4] sm:$0xf]
    %v820 = vld [vmem:[#allocation7 + $0xd8] sm:$0xff]
    %v821 = vld [vmem:[#allocation7 + $0xe0] sm:$0xff]
    %v822 = vld [vmem:[#allocation7 + $0xe8] sm:$0xff]
    %v823 = vld [vmem:[#allocation7 + $0xf0] sm:$0xff]
    %v824 = vld [vmem:[#allocation7 + $0xf8] sm:$0xf]
    %v825 = vld [vmem:[#allocation7 + $0xfc] sm:$0xff]
    %v826 = vld [vmem:[#allocation7 + $0x104] sm:$0xff]
    %v827 = vld [vmem:[#allocation7 + $0x10c] sm:$0xff]
    %v828 = vld [vmem:[#allocation7 + $0x114] sm:$0xff]
    %v829 = vld [vmem:[#allocation7 + $0x11c] sm:$0xf]
    %v830 = vld [vmem:[#allocation7 + $0x120] sm:$0xff]
    %v831 = vld [vmem:[#allocation7 + $0x128] sm:$0xff]
    %v832 = vld [vmem:[#allocation7 + $0x130] sm:$0xff]
    %v833 = vld [vmem:[#allocation7 + $0x138] sm:$0xff]
    %v834 = vld [vmem:[#allocation7 + $0x140] sm:$0xf]
    %v835 = vld [vmem:[#allocation7 + $0x144] sm:$0xff]
    %v836 = vld [vmem:[#allocation7 + $0x14c] sm:$0xff]
    %v837 = vld [vmem:[#allocation7 + $0x154] sm:$0xff]
    %v838 = vld [vmem:[#allocation7 + $0x15c] sm:$0xff]
    %v839 = vld [vmem:[#allocation7 + $0x164] sm:$0xf]
    %v840 = vld [vmem:[#allocation7 + $0x168] sm:$0xff]
    %v841 = vld [vmem:[#allocation7 + $0x170] sm:$0xff]
    %v842 = vld [vmem:[#allocation7 + $0x178] sm:$0xff]
    %v843 = vld [vmem:[#allocation7 + $0x180] sm:$0xff]
    %v844 = vld [vmem:[#allocation7 + $0x188] sm:$0xf]
    %v845 = vld [vmem:[#allocation7 + $0x18c] sm:$0xff]
    %v846 = vld [vmem:[#allocation7 + $0x194] sm:$0xff]
    %v847 = vld [vmem:[#allocation7 + $0x19c] sm:$0xff]
    %v848 = vld [vmem:[#allocation7 + $0x1a4] sm:$0xff]
    %v849 = vld [vmem:[#allocation7 + $0x1ac] sm:$0xf]
    %v850 = vld [vmem:[#allocation7 + $0x1b0] sm:$0xff]
    %v851 = vld [vmem:[#allocation7 + $0x1b8] sm:$0xff]
    %v852 = vld [vmem:[#allocation7 + $0x1c0] sm:$0xff]
    %v853 = vld [vmem:[#allocation7 + $0x1c8] sm:$0xff]
    %v854 = vld [vmem:[#allocation7 + $0x1d0] sm:$0xf]
    %v855 = vld [vmem:[#allocation7 + $0x1d4] sm:$0xff]
    %v856 = vld [vmem:[#allocation7 + $0x1dc] sm:$0xff]
    %v857 = vld [vmem:[#allocation7 + $0x1e4] sm:$0xff]
    %v858 = vld [vmem:[#allocation7 + $0x1ec] sm:$0xff]
    %v859 = vld [vmem:[#allocation7 + $0x1f4] sm:$0xf]
    %v860 = vld [vmem:[#allocation7 + $0x1f8] sm:$0xff]
    %v861 = vld [vmem:[#allocation7 + $0x200] sm:$0xff]
    %v862 = vld [vmem:[#allocation7 + $0x208] sm:$0xff]
    %v863 = vld [vmem:[#allocation7 + $0x210] sm:$0xff]
    %v864 = vld [vmem:[#allocation7 + $0x218] sm:$0xf]
    %v865 = vld [vmem:[#allocation7 + $0x21c] sm:$0xff]
    %v866 = vld [vmem:[#allocation7 + $0x224] sm:$0xff]
    %v867 = vld [vmem:[#allocation7 + $0x22c] sm:$0xff]
    %v868 = vld [vmem:[#allocation7 + $0x234] sm:$0xff]
    %v869 = vld [vmem:[#allocation7 + $0x23c] sm:$0xf]
    %v870 = vld [vmem:[#allocation8] sm:$0xff]
    %v871 = vld [vmem:[#allocation8 + $0x8] sm:$0x1]
    %v874 = vperm.slane %v870, 0
    %v875 = vperm.slane %v870, 1
    %v876 = vperm.slane %v870, 2
    %v877 = vperm.slane %v870, 3
    %v878 = vperm.slane %v870, 4
    %v879 = vperm.slane %v870, 5
    %v880 = vperm.slane %v870, 6
    %v881 = vperm.slane %v870, 7
    %v882 = vperm.slane %v871, 0
    %v972 = vunpack.c.l.b16 %v790
    %v973 = vunpack.c.h.b16 %v790
    %v974 = vunpack.c.l.b16 %v791
    %v975 = vunpack.c.h.b16 %v791
    %v976 = vunpack.c.l.b16 %v792
    %v977 = vunpack.c.h.b16 %v792
    %v978 = vunpack.c.l.b16 %v793
    %v979 = vunpack.c.h.b16 %v793
    %v980 = vunpack.c.l.b16 %v794
    %v981 = vunpack.c.l.b16 %v795
    %v982 = vunpack.c.h.b16 %v795
    %v983 = vunpack.c.l.b16 %v796
    %v984 = vunpack.c.h.b16 %v796
    %v985 = vunpack.c.l.b16 %v797
    %v986 = vunpack.c.h.b16 %v797
    %v987 = vunpack.c.l.b16 %v798
    %v988 = vunpack.c.h.b16 %v798
    %v989 = vunpack.c.l.b16 %v799
    %v990 = vunpack.c.l.b16 %v800
    %v991 = vunpack.c.h.b16 %v800
    %v992 = vunpack.c.l.b16 %v801
    %v993 = vunpack.c.h.b16 %v801
    %v994 = vunpack.c.l.b16 %v802
    %v995 = vunpack.c.h.b16 %v802
    %v996 = vunpack.c.l.b16 %v803
    %v997 = vunpack.c.h.b16 %v803
    %v998 = vunpack.c.l.b16 %v804
    %v999 = vunpack.c.l.b16 %v805
    %v1000 = vunpack.c.h.b16 %v805
    %v1001 = vunpack.c.l.b16 %v806
    %v1002 = vunpack.c.h.b16 %v806
    %v1003 = vunpack.c.l.b16 %v807
    %v1004 = vunpack.c.h.b16 %v807
    %v1005 = vunpack.c.l.b16 %v808
    %v1006 = vunpack.c.h.b16 %v808
    %v1007 = vunpack.c.l.b16 %v809
    %v1008 = vunpack.c.l.b16 %v810
    %v1009 = vunpack.c.h.b16 %v810
    %v1010 = vunpack.c.l.b16 %v811
    %v1011 = vunpack.c.h.b16 %v811
    %v1012 = vunpack.c.l.b16 %v812
    %v1013 = vunpack.c.h.b16 %v812
    %v1014 = vunpack.c.l.b16 %v813
    %v1015 = vunpack.c.h.b16 %v813
    %v1016 = vunpack.c.l.b16 %v814
    %v1017 = vunpack.c.l.b16 %v815
    %v1018 = vunpack.c.h.b16 %v815
    %v1019 = vunpack.c.l.b16 %v816
    %v1020 = vunpack.c.h.b16 %v816
    %v1021 = vunpack.c.l.b16 %v817
    %v1022 = vunpack.c.h.b16 %v817
    %v1023 = vunpack.c.l.b16 %v818
    %v1024 = vunpack.c.h.b16 %v818
    %v1025 = vunpack.c.l.b16 %v819
    %v1026 = vunpack.c.l.b16 %v820
    %v1027 = vunpack.c.h.b16 %v820
    %v1028 = vunpack.c.l.b16 %v821
    %v1029 = vunpack.c.h.b16 %v821
    %v1030 = vunpack.c.l.b16 %v822
    %v1031 = vunpack.c.h.b16 %v822
    %v1032 = vunpack.c.l.b16 %v823
    %v1033 = vunpack.c.h.b16 %v823
    %v1034 = vunpack.c.l.b16 %v824
    %v1035 = vunpack.c.l.b16 %v825
    %v1036 = vunpack.c.h.b16 %v825
    %v1037 = vunpack.c.l.b16 %v826
    %v1038 = vunpack.c.h.b16 %v826
    %v1039 = vunpack.c.l.b16 %v827
    %v1040 = vunpack.c.h.b16 %v827
    %v1041 = vunpack.c.l.b16 %v828
    %v1042 = vunpack.c.h.b16 %v828
    %v1043 = vunpack.c.l.b16 %v829
    %v1044 = vunpack.c.l.b16 %v830
    %v1045 = vunpack.c.h.b16 %v830
    %v1046 = vunpack.c.l.b16 %v831
    %v1047 = vunpack.c.h.b16 %v831
    %v1048 = vunpack.c.l.b16 %v832
    %v1049 = vunpack.c.h.b16 %v832
    %v1050 = vunpack.c.l.b16 %v833
    %v1051 = vunpack.c.h.b16 %v833
    %v1052 = vunpack.c.l.b16 %v834
    %v1053 = vunpack.c.l.b16 %v835
    %v1054 = vunpack.c.h.b16 %v835
    %v1055 = vunpack.c.l.b16 %v836
    %v1056 = vunpack.c.h.b16 %v836
    %v1057 = vunpack.c.l.b16 %v837
    %v1058 = vunpack.c.h.b16 %v837
    %v1059 = vunpack.c.l.b16 %v838
    %v1060 = vunpack.c.h.b16 %v838
    %v1061 = vunpack.c.l.b16 %v839
    %v1062 = vunpack.c.l.b16 %v840
    %v1063 = vunpack.c.h.b16 %v840
    %v1064 = vunpack.c.l.b16 %v841
    %v1065 = vunpack.c.h.b16 %v841
    %v1066 = vunpack.c.l.b16 %v842
    %v1067 = vunpack.c.h.b16 %v842
    %v1068 = vunpack.c.l.b16 %v843
    %v1069 = vunpack.c.h.b16 %v843
    %v1070 = vunpack.c.l.b16 %v844
    %v1071 = vunpack.c.l.b16 %v845
    %v1072 = vunpack.c.h.b16 %v845
    %v1073 = vunpack.c.l.b16 %v846
    %v1074 = vunpack.c.h.b16 %v846
    %v1075 = vunpack.c.l.b16 %v847
    %v1076 = vunpack.c.h.b16 %v847
    %v1077 = vunpack.c.l.b16 %v848
    %v1078 = vunpack.c.h.b16 %v848
    %v1079 = vunpack.c.l.b16 %v849
    %v1080 = vunpack.c.l.b16 %v850
    %v1081 = vunpack.c.h.b16 %v850
    %v1082 = vunpack.c.l.b16 %v851
    %v1083 = vunpack.c.h.b16 %v851
    %v1084 = vunpack.c.l.b16 %v852
    %v1085 = vunpack.c.h.b16 %v852
    %v1086 = vunpack.c.l.b16 %v853
    %v1087 = vunpack.c.h.b16 %v853
    %v1088 = vunpack.c.l.b16 %v854
    %v1089 = vunpack.c.l.b16 %v855
    %v1090 = vunpack.c.h.b16 %v855
    %v1091 = vunpack.c.l.b16 %v856
    %v1092 = vunpack.c.h.b16 %v856
    %v1093 = vunpack.c.l.b16 %v857
    %v1094 = vunpack.c.h.b16 %v857
    %v1095 = vunpack.c.l.b16 %v858
    %v1096 = vunpack.c.h.b16 %v858
    %v1097 = vunpack.c.l.b16 %v859
    %v1098 = vunpack.c.l.b16 %v860
    %v1099 = vunpack.c.h.b16 %v860
    %v1100 = vunpack.c.l.b16 %v861
    %v1101 = vunpack.c.h.b16 %v861
    %v1102 = vunpack.c.l.b16 %v862
    %v1103 = vunpack.c.h.b16 %v862
    %v1104 = vunpack.c.l.b16 %v863
    %v1105 = vunpack.c.h.b16 %v863
    %v1106 = vunpack.c.l.b16 %v864
    %v1107 = vunpack.c.l.b16 %v865
    %v1108 = vunpack.c.h.b16 %v865
    %v1109 = vunpack.c.l.b16 %v866
    %v1110 = vunpack.c.h.b16 %v866
    %v1111 = vunpack.c.l.b16 %v867
    %v1112 = vunpack.c.h.b16 %v867
    %v1113 = vunpack.c.l.b16 %v868
    %v1114 = vunpack.c.h.b16 %v868
    %v1115 = vunpack.c.l.b16 %v869
    %v1116 = vpack.c.b16 %v981, %v972
    %v1117 = vpack.c.b16 %v982, %v973
    %v1118 = vpack.c.b16 %v983, %v974
    %v1119 = vpack.c.b16 %v984, %v975
    %v1120 = vpack.c.b16 %v985, %v976
    %v1121 = vpack.c.b16 %v986, %v977
    %v1122 = vpack.c.b16 %v987, %v978
    %v1123 = vpack.c.b16 %v988, %v979
    %v1124 = vpack.c.b16 %v989, %v980
    %v1125 = vpack.c.b16 %v999, %v990
    %v1126 = vpack.c.b16 %v1000, %v991
    %v1127 = vpack.c.b16 %v1001, %v992
    %v1128 = vpack.c.b16 %v1002, %v993
    %v1129 = vpack.c.b16 %v1003, %v994
    %v1130 = vpack.c.b16 %v1004, %v995
    %v1131 = vpack.c.b16 %v1005, %v996
    %v1132 = vpack.c.b16 %v1006, %v997
    %v1133 = vpack.c.b16 %v1007, %v998
    %v1134 = vpack.c.b16 %v1017, %v1008
    %v1135 = vpack.c.b16 %v1018, %v1009
    %v1136 = vpack.c.b16 %v1019, %v1010
    %v1137 = vpack.c.b16 %v1020, %v1011
    %v1138 = vpack.c.b16 %v1021, %v1012
    %v1139 = vpack.c.b16 %v1022, %v1013
    %v1140 = vpack.c.b16 %v1023, %v1014
    %v1141 = vpack.c.b16 %v1024, %v1015
    %v1142 = vpack.c.b16 %v1025, %v1016
    %v1143 = vpack.c.b16 %v1035, %v1026
    %v1144 = vpack.c.b16 %v1036, %v1027
    %v1145 = vpack.c.b16 %v1037, %v1028
    %v1146 = vpack.c.b16 %v1038, %v1029
    %v1147 = vpack.c.b16 %v1039, %v1030
    %v1148 = vpack.c.b16 %v1040, %v1031
    %v1149 = vpack.c.b16 %v1041, %v1032
    %v1150 = vpack.c.b16 %v1042, %v1033
    %v1151 = vpack.c.b16 %v1043, %v1034
    %v1152 = vpack.c.b16 %v1053, %v1044
    %v1153 = vpack.c.b16 %v1054, %v1045
    %v1154 = vpack.c.b16 %v1055, %v1046
    %v1155 = vpack.c.b16 %v1056, %v1047
    %v1156 = vpack.c.b16 %v1057, %v1048
    %v1157 = vpack.c.b16 %v1058, %v1049
    %v1158 = vpack.c.b16 %v1059, %v1050
    %v1159 = vpack.c.b16 %v1060, %v1051
    %v1160 = vpack.c.b16 %v1061, %v1052
    %v1161 = vpack.c.b16 %v1071, %v1062
    %v1162 = vpack.c.b16 %v1072, %v1063
    %v1163 = vpack.c.b16 %v1073, %v1064
    %v1164 = vpack.c.b16 %v1074, %v1065
    %v1165 = vpack.c.b16 %v1075, %v1066
    %v1166 = vpack.c.b16 %v1076, %v1067
    %v1167 = vpack.c.b16 %v1077, %v1068
    %v1168 = vpack.c.b16 %v1078, %v1069
    %v1169 = vpack.c.b16 %v1079, %v1070
    %v1170 = vpack.c.b16 %v1089, %v1080
    %v1171 = vpack.c.b16 %v1090, %v1081
    %v1172 = vpack.c.b16 %v1091, %v1082
    %v1173 = vpack.c.b16 %v1092, %v1083
    %v1174 = vpack.c.b16 %v1093, %v1084
    %v1175 = vpack.c.b16 %v1094, %v1085
    %v1176 = vpack.c.b16 %v1095, %v1086
    %v1177 = vpack.c.b16 %v1096, %v1087
    %v1178 = vpack.c.b16 %v1097, %v1088
    %v1179 = vpack.c.b16 %v1107, %v1098
    %v1180 = vpack.c.b16 %v1108, %v1099
    %v1181 = vpack.c.b16 %v1109, %v1100
    %v1182 = vpack.c.b16 %v1110, %v1101
    %v1183 = vpack.c.b16 %v1111, %v1102
    %v1184 = vpack.c.b16 %v1112, %v1103
    %v1185 = vpack.c.b16 %v1113, %v1104
    %v1186 = vpack.c.b16 %v1114, %v1105
    %v1187 = vpack.c.b16 %v1115, %v1106
    %1260 = vmatpush.bf16.msra.mxu0 %v1179
    %1261 = vmatpush.bf16.msra.mxu0 %v1170
    %1262 = vmatpush.bf16.msra.mxu0 %v1161
    %1263 = vmatpush.bf16.msra.mxu0 %v1152
    %1264 = vmatpush.bf16.msra.mxu0 %v1143
    %1265 = vmatpush.bf16.msra.mxu0 %v1134
    %1266 = vmatpush.bf16.msra.mxu0 %v1125
    %1267 = vmatpush.bf16.msra.mxu0 %v1116
    %1268 = vmatmul.bf16.gmra.mxu0 %v789
    %v1269 = vpop.f32.mrf.mxu0
    %v1270 = vadd.f32 %v874, %v1269
    %v1271 = vpop.f32.mrf.mxu0
    %1272 = vdwg.mxu0
    %1273 = vmatpush.bf16.msra.mxu0 %v1180
    %1274 = vmatpush.bf16.msra.mxu0 %v1171
    %1275 = vmatpush.bf16.msra.mxu0 %v1162
    %1276 = vmatpush.bf16.msra.mxu0 %v1153
    %1277 = vmatpush.bf16.msra.mxu0 %v1144
    %1278 = vmatpush.bf16.msra.mxu0 %v1135
    %1279 = vmatpush.bf16.msra.mxu0 %v1126
    %1280 = vmatpush.bf16.msra.mxu0 %v1117
    %1281 = vmatmul.bf16.gmra.mxu0 %v789
    %v1282 = vpop.f32.mrf.mxu0
    %v1283 = vadd.f32 %v875, %v1282
    %v1284 = vpop.f32.mrf.mxu0
    %1285 = vdwg.mxu0
    %1286 = vmatpush.bf16.msra.mxu0 %v1181
    %1287 = vmatpush.bf16.msra.mxu0 %v1172
    %1288 = vmatpush.bf16.msra.mxu0 %v1163
    %1289 = vmatpush.bf16.msra.mxu0 %v1154
    %1290 = vmatpush.bf16.msra.mxu0 %v1145
    %1291 = vmatpush.bf16.msra.mxu0 %v1136
    %1292 = vmatpush.bf16.msra.mxu0 %v1127
    %1293 = vmatpush.bf16.msra.mxu0 %v1118
    %1294 = vmatmul.bf16.gmra.mxu0 %v789
    %v1295 = vpop.f32.mrf.mxu0
    %v1296 = vadd.f32 %v876, %v1295
    %v1297 = vpop.f32.mrf.mxu0
    %1298 = vdwg.mxu0
    %1299 = vmatpush.bf16.msra.mxu0 %v1182
    %1300 = vmatpush.bf16.msra.mxu0 %v1173
    %1301 = vmatpush.bf16.msra.mxu0 %v1164
    %1302 = vmatpush.bf16.msra.mxu0 %v1155
    %1303 = vmatpush.bf16.msra.mxu0 %v1146
    %1304 = vmatpush.bf16.msra.mxu0 %v1137
    %1305 = vmatpush.bf16.msra.mxu0 %v1128
    %1306 = vmatpush.bf16.msra.mxu0 %v1119
    %1307 = vmatmul.bf16.gmra.mxu0 %v789
    %v1308 = vpop.f32.mrf.mxu0
    %v1309 = vadd.f32 %v877, %v1308
    %v1310 = vpop.f32.mrf.mxu0
    %1311 = vdwg.mxu0
    %1312 = vmatpush.bf16.msra.mxu0 %v1183
    %1313 = vmatpush.bf16.msra.mxu0 %v1174
    %1314 = vmatpush.bf16.msra.mxu0 %v1165
    %1315 = vmatpush.bf16.msra.mxu0 %v1156
    %1316 = vmatpush.bf16.msra.mxu0 %v1147
    %1317 = vmatpush.bf16.msra.mxu0 %v1138
    %1318 = vmatpush.bf16.msra.mxu0 %v1129
    %1319 = vmatpush.bf16.msra.mxu0 %v1120
    %1320 = vmatmul.bf16.gmra.mxu0 %v789
    %v1321 = vpop.f32.mrf.mxu0
    %v1322 = vadd.f32 %v878, %v1321
    %v1323 = vpop.f32.mrf.mxu0
    %1324 = vdwg.mxu0
    %1325 = vmatpush.bf16.msra.mxu0 %v1184
    %1326 = vmatpush.bf16.msra.mxu0 %v1175
    %1327 = vmatpush.bf16.msra.mxu0 %v1166
    %1328 = vmatpush.bf16.msra.mxu0 %v1157
    %1329 = vmatpush.bf16.msra.mxu0 %v1148
    %1330 = vmatpush.bf16.msra.mxu0 %v1139
    %1331 = vmatpush.bf16.msra.mxu0 %v1130
    %1332 = vmatpush.bf16.msra.mxu0 %v1121
    %1333 = vmatmul.bf16.gmra.mxu0 %v789
    %v1334 = vpop.f32.mrf.mxu0
    %v1335 = vadd.f32 %v879, %v1334
    %v1336 = vpop.f32.mrf.mxu0
    %1337 = vdwg.mxu0
    %1338 = vmatpush.bf16.msra.mxu0 %v1185
    %1339 = vmatpush.bf16.msra.mxu0 %v1176
    %1340 = vmatpush.bf16.msra.mxu0 %v1167
    %1341 = vmatpush.bf16.msra.mxu0 %v1158
    %1342 = vmatpush.bf16.msra.mxu0 %v1149
    %1343 = vmatpush.bf16.msra.mxu0 %v1140
    %1344 = vmatpush.bf16.msra.mxu0 %v1131
    %1345 = vmatpush.bf16.msra.mxu0 %v1122
    %1346 = vmatmul.bf16.gmra.mxu0 %v789
    %v1347 = vpop.f32.mrf.mxu0
    %v1348 = vadd.f32 %v880, %v1347
    %v1349 = vpop.f32.mrf.mxu0
    %1350 = vdwg.mxu0
    %1351 = vmatpush.bf16.msra.mxu0 %v1186
    %1352 = vmatpush.bf16.msra.mxu0 %v1177
    %1353 = vmatpush.bf16.msra.mxu0 %v1168
    %1354 = vmatpush.bf16.msra.mxu0 %v1159
    %1355 = vmatpush.bf16.msra.mxu0 %v1150
    %1356 = vmatpush.bf16.msra.mxu0 %v1141
    %1357 = vmatpush.bf16.msra.mxu0 %v1132
    %1358 = vmatpush.bf16.msra.mxu0 %v1123
    %1359 = vmatmul.bf16.gmra.mxu0 %v789
    %v1360 = vpop.f32.mrf.mxu0
    %v1361 = vadd.f32 %v881, %v1360
    %v1362 = vpop.f32.mrf.mxu0
    %1363 = vdwg.mxu0
    %1364 = vmatpush.bf16.msra.mxu0 %v1187
    %1365 = vmatpush.bf16.msra.mxu0 %v1178
    %1366 = vmatpush.bf16.msra.mxu0 %v1169
    %1367 = vmatpush.bf16.msra.mxu0 %v1160
    %1368 = vmatpush.bf16.msra.mxu0 %v1151
    %1369 = vmatpush.bf16.msra.mxu0 %v1142
    %1370 = vmatpush.bf16.msra.mxu0 %v1133
    %1371 = vmatpush.bf16.msra.mxu0 %v1124
    %1372 = vmatmul.bf16.gmra.mxu0 %v789
    %v1373 = vpop.f32.mrf.mxu0
    %v1374 = vadd.f32 %v882, %v1373
    %v1375 = vpop.f32.mrf.mxu0
    %1376 = vdwg.mxu0
    %1377 = vst [vmem:[#allocation16] sm:$0xff] %v1270
    %v1378 = vmax.f32 %v1283, 0.0
    %v1379 = vmax.f32 %v1296, 0.0
    %v1380 = vmax.f32 %v1309, 0.0
    %v1381 = vmax.f32 %v1322, 0.0
    %v1382 = vmax.f32 %v1335, 0.0
    %v1383 = vmax.f32 %v1348, 0.0
    %v1384 = vmax.f32 %v1361, 0.0
    %v1385 = vmax.f32 %v1374, 0.0
    %v1386 = vpack.c.bf16 %v1378, %v1378
    %v1387 = vpack.c.bf16 %v1379, %v1379
    %v1388 = vpack.c.bf16 %v1380, %v1380
    %v1389 = vpack.c.bf16 %v1381, %v1381
    %v1390 = vpack.c.bf16 %v1382, %v1382
    %v1391 = vpack.c.bf16 %v1383, %v1383
    %v1392 = vpack.c.bf16 %v1384, %v1384
    %v1393 = vpack.c.bf16 %v1385, %v1385
    %v1394 = vld [vmem:[#allocation10] sm:$0xff]
    %v1395 = vld [vmem:[#allocation10 + $0x8] sm:$0xff]
    %v1396 = vld [vmem:[#allocation10 + $0x10] sm:$0xff]
    %v1397 = vld [vmem:[#allocation10 + $0x18] sm:$0xff]
    %v1398 = vld [vmem:[#allocation10 + $0x20] sm:$0xff]
    %v1399 = vld [vmem:[#allocation10 + $0x28] sm:$0xff]
    %v1400 = vld [vmem:[#allocation10 + $0x30] sm:$0xff]
    %v1401 = vld [vmem:[#allocation10 + $0x38] sm:$0xff]
    %v1402 = vld [vmem:[#allocation10 + $0x40] sm:$0xff]
    %v1403 = vld [vmem:[#allocation10 + $0x48] sm:$0xff]
    %v1404 = vld [vmem:[#allocation10 + $0x50] sm:$0xff]
    %v1405 = vld [vmem:[#allocation10 + $0x58] sm:$0xff]
    %v1406 = vld [vmem:[#allocation10 + $0x60] sm:$0xff]
    %v1407 = vld [vmem:[#allocation10 + $0x68] sm:$0xff]
    %v1408 = vld [vmem:[#allocation10 + $0x70] sm:$0xff]
    %v1409 = vld [vmem:[#allocation10 + $0x78] sm:$0xff]
    %v1410 = vld [vmem:[#allocation10 + $0x80] sm:$0xff]
    %v1411 = vld [vmem:[#allocation10 + $0x88] sm:$0xff]
    %v1412 = vld [vmem:[#allocation10 + $0x90] sm:$0xff]
    %v1413 = vld [vmem:[#allocation10 + $0x98] sm:$0xff]
    %v1414 = vld [vmem:[#allocation10 + $0xa0] sm:$0xff]
    %v1415 = vld [vmem:[#allocation10 + $0xa8] sm:$0xff]
    %v1416 = vld [vmem:[#allocation10 + $0xb0] sm:$0xff]
    %v1417 = vld [vmem:[#allocation10 + $0xb8] sm:$0xff]
    %v1418 = vld [vmem:[#allocation10 + $0xc0] sm:$0xff]
    %v1419 = vld [vmem:[#allocation10 + $0xc8] sm:$0xff]
    %v1420 = vld [vmem:[#allocation10 + $0xd0] sm:$0xff]
    %v1421 = vld [vmem:[#allocation10 + $0xd8] sm:$0xff]
    %v1422 = vld [vmem:[#allocation10 + $0xe0] sm:$0xff]
    %v1423 = vld [vmem:[#allocation10 + $0xe8] sm:$0xff]
    %v1424 = vld [vmem:[#allocation10 + $0xf0] sm:$0xff]
    %v1425 = vld [vmem:[#allocation10 + $0xf8] sm:$0xff]
    %v1426 = vld [vmem:[#allocation10 + $0x100] sm:$0xff]
    %v1427 = vld [vmem:[#allocation10 + $0x108] sm:$0xff]
    %v1428 = vld [vmem:[#allocation10 + $0x110] sm:$0xff]
    %v1429 = vld [vmem:[#allocation10 + $0x118] sm:$0xff]
    %v1430 = vld [vmem:[#allocation10 + $0x120] sm:$0xff]
    %v1431 = vld [vmem:[#allocation10 + $0x128] sm:$0xff]
    %v1432 = vld [vmem:[#allocation10 + $0x130] sm:$0xff]
    %v1433 = vld [vmem:[#allocation10 + $0x138] sm:$0xff]
    %v1434 = vld [vmem:[#allocation10 + $0x140] sm:$0xff]
    %v1435 = vld [vmem:[#allocation10 + $0x148] sm:$0xff]
    %v1436 = vld [vmem:[#allocation10 + $0x150] sm:$0xff]
    %v1437 = vld [vmem:[#allocation10 + $0x158] sm:$0xff]
    %v1438 = vld [vmem:[#allocation10 + $0x160] sm:$0xff]
    %v1439 = vld [vmem:[#allocation10 + $0x168] sm:$0xff]
    %v1440 = vld [vmem:[#allocation10 + $0x170] sm:$0xff]
    %v1441 = vld [vmem:[#allocation10 + $0x178] sm:$0xff]
    %v1442 = vld [vmem:[#allocation10 + $0x180] sm:$0xff]
    %v1443 = vld [vmem:[#allocation10 + $0x188] sm:$0xff]
    %v1444 = vld [vmem:[#allocation10 + $0x190] sm:$0xff]
    %v1445 = vld [vmem:[#allocation10 + $0x198] sm:$0xff]
    %v1446 = vld [vmem:[#allocation10 + $0x1a0] sm:$0xff]
    %v1447 = vld [vmem:[#allocation10 + $0x1a8] sm:$0xff]
    %v1448 = vld [vmem:[#allocation10 + $0x1b0] sm:$0xff]
    %v1449 = vld [vmem:[#allocation10 + $0x1b8] sm:$0xff]
    %v1450 = vld [vmem:[#allocation10 + $0x1c0] sm:$0xff]
    %v1451 = vld [vmem:[#allocation10 + $0x1c8] sm:$0xff]
    %v1452 = vld [vmem:[#allocation10 + $0x1d0] sm:$0xff]
    %v1453 = vld [vmem:[#allocation10 + $0x1d8] sm:$0xff]
    %v1454 = vld [vmem:[#allocation10 + $0x1e0] sm:$0xff]
    %v1455 = vld [vmem:[#allocation10 + $0x1e8] sm:$0xff]
    %v1456 = vld [vmem:[#allocation10 + $0x1f0] sm:$0xff]
    %v1457 = vld [vmem:[#allocation10 + $0x1f8] sm:$0xff]
    %v1458 = vld [vmem:[#allocation10 + $0x200] sm:$0xff]
    %v1459 = vld [vmem:[#allocation10 + $0x208] sm:$0xff]
    %v1460 = vld [vmem:[#allocation10 + $0x210] sm:$0xff]
    %v1461 = vld [vmem:[#allocation10 + $0x218] sm:$0xff]
    %v1462 = vld [vmem:[#allocation10 + $0x220] sm:$0xff]
    %v1463 = vld [vmem:[#allocation10 + $0x228] sm:$0xff]
    %v1464 = vld [vmem:[#allocation10 + $0x230] sm:$0xff]
    %v1465 = vld [vmem:[#allocation10 + $0x238] sm:$0xff]
    %v1466 = vld [vmem:[#allocation10 + $0x240] sm:$0xff]
    %v1467 = vld [vmem:[#allocation10 + $0x248] sm:$0xff]
    %v1468 = vld [vmem:[#allocation10 + $0x250] sm:$0xff]
    %v1469 = vld [vmem:[#allocation10 + $0x258] sm:$0xff]
    %v1470 = vld [vmem:[#allocation10 + $0x260] sm:$0xff]
    %v1471 = vld [vmem:[#allocation10 + $0x268] sm:$0xff]
    %v1472 = vld [vmem:[#allocation10 + $0x270] sm:$0xff]
    %v1473 = vld [vmem:[#allocation10 + $0x278] sm:$0xff]
    %v1474 = vld [vmem:[#allocation10 + $0x280] sm:$0xff]
    %v1475 = vld [vmem:[#allocation10 + $0x288] sm:$0xff]
    %v1476 = vld [vmem:[#allocation10 + $0x290] sm:$0xff]
    %v1477 = vld [vmem:[#allocation10 + $0x298] sm:$0xff]
    %v1478 = vld [vmem:[#allocation10 + $0x2a0] sm:$0xff]
    %v1479 = vld [vmem:[#allocation10 + $0x2a8] sm:$0xff]
    %v1480 = vld [vmem:[#allocation10 + $0x2b0] sm:$0xff]
    %v1481 = vld [vmem:[#allocation10 + $0x2b8] sm:$0xff]
    %v1482 = vld [vmem:[#allocation10 + $0x2c0] sm:$0xff]
    %v1483 = vld [vmem:[#allocation10 + $0x2c8] sm:$0xff]
    %v1484 = vld [vmem:[#allocation10 + $0x2d0] sm:$0xff]
    %v1485 = vld [vmem:[#allocation10 + $0x2d8] sm:$0xff]
    %v1486 = vld [vmem:[#allocation10 + $0x2e0] sm:$0xff]
    %v1487 = vld [vmem:[#allocation10 + $0x2e8] sm:$0xff]
    %v1488 = vld [vmem:[#allocation10 + $0x2f0] sm:$0xff]
    %v1489 = vld [vmem:[#allocation10 + $0x2f8] sm:$0xff]
    %v1490 = vld [vmem:[#allocation10 + $0x300] sm:$0xff]
    %v1491 = vld [vmem:[#allocation10 + $0x308] sm:$0xff]
    %v1492 = vld [vmem:[#allocation10 + $0x310] sm:$0xff]
    %v1493 = vld [vmem:[#allocation10 + $0x318] sm:$0xff]
    %v1494 = vld [vmem:[#allocation10 + $0x320] sm:$0xff]
    %v1495 = vld [vmem:[#allocation10 + $0x328] sm:$0xff]
    %v1496 = vld [vmem:[#allocation10 + $0x330] sm:$0xff]
    %v1497 = vld [vmem:[#allocation10 + $0x338] sm:$0xff]
    %v1498 = vld [vmem:[#allocation10 + $0x340] sm:$0xff]
    %v1499 = vld [vmem:[#allocation10 + $0x348] sm:$0xff]
    %v1500 = vld [vmem:[#allocation10 + $0x350] sm:$0xff]
    %v1501 = vld [vmem:[#allocation10 + $0x358] sm:$0xff]
    %v1502 = vld [vmem:[#allocation10 + $0x360] sm:$0xff]
    %v1503 = vld [vmem:[#allocation10 + $0x368] sm:$0xff]
    %v1504 = vld [vmem:[#allocation10 + $0x370] sm:$0xff]
    %v1505 = vld [vmem:[#allocation10 + $0x378] sm:$0xff]
    %v1506 = vld [vmem:[#allocation10 + $0x380] sm:$0xff]
    %v1507 = vld [vmem:[#allocation10 + $0x388] sm:$0xff]
    %v1508 = vld [vmem:[#allocation10 + $0x390] sm:$0xff]
    %v1509 = vld [vmem:[#allocation10 + $0x398] sm:$0xff]
    %v1510 = vld [vmem:[#allocation10 + $0x3a0] sm:$0xff]
    %v1511 = vld [vmem:[#allocation10 + $0x3a8] sm:$0xff]
    %v1512 = vld [vmem:[#allocation10 + $0x3b0] sm:$0xff]
    %v1513 = vld [vmem:[#allocation10 + $0x3b8] sm:$0xff]
    %v1514 = vld [vmem:[#allocation10 + $0x3c0] sm:$0xff]
    %v1515 = vld [vmem:[#allocation10 + $0x3c8] sm:$0xff]
    %v1516 = vld [vmem:[#allocation10 + $0x3d0] sm:$0xff]
    %v1517 = vld [vmem:[#allocation10 + $0x3d8] sm:$0xff]
    %v1518 = vld [vmem:[#allocation10 + $0x3e0] sm:$0xff]
    %v1519 = vld [vmem:[#allocation10 + $0x3e8] sm:$0xff]
    %v1520 = vld [vmem:[#allocation10 + $0x3f0] sm:$0xff]
    %v1521 = vld [vmem:[#allocation10 + $0x3f8] sm:$0xff]
    %v1522 = vld [vmem:[#allocation10 + $0x400] sm:$0xff]
    %v1523 = vld [vmem:[#allocation10 + $0x408] sm:$0xff]
    %v1524 = vld [vmem:[#allocation10 + $0x410] sm:$0xff]
    %v1525 = vld [vmem:[#allocation10 + $0x418] sm:$0xff]
    %v1526 = vld [vmem:[#allocation10 + $0x420] sm:$0xff]
    %v1527 = vld [vmem:[#allocation10 + $0x428] sm:$0xff]
    %v1528 = vld [vmem:[#allocation10 + $0x430] sm:$0xff]
    %v1529 = vld [vmem:[#allocation10 + $0x438] sm:$0xff]
    %v1530 = vld [vmem:[#allocation10 + $0x440] sm:$0xff]
    %v1531 = vld [vmem:[#allocation10 + $0x448] sm:$0xff]
    %v1532 = vld [vmem:[#allocation10 + $0x450] sm:$0xff]
    %v1533 = vld [vmem:[#allocation10 + $0x458] sm:$0xff]
    %v1534 = vld [vmem:[#allocation10 + $0x460] sm:$0xff]
    %v1535 = vld [vmem:[#allocation10 + $0x468] sm:$0xff]
    %v1536 = vld [vmem:[#allocation10 + $0x470] sm:$0xff]
    %v1537 = vld [vmem:[#allocation10 + $0x478] sm:$0xff]
    %v1538 = vld [vmem:[#allocation10 + $0x480] sm:$0xff]
    %v1539 = vld [vmem:[#allocation10 + $0x488] sm:$0xff]
    %v1540 = vld [vmem:[#allocation10 + $0x490] sm:$0xff]
    %v1541 = vld [vmem:[#allocation10 + $0x498] sm:$0xff]
    %v1542 = vld [vmem:[#allocation10 + $0x4a0] sm:$0xff]
    %v1543 = vld [vmem:[#allocation10 + $0x4a8] sm:$0xff]
    %v1544 = vld [vmem:[#allocation10 + $0x4b0] sm:$0xff]
    %v1545 = vld [vmem:[#allocation10 + $0x4b8] sm:$0xff]
    %v1546 = vld [vmem:[#allocation10 + $0x4c0] sm:$0xff]
    %v1547 = vld [vmem:[#allocation10 + $0x4c8] sm:$0xff]
    %v1548 = vld [vmem:[#allocation10 + $0x4d0] sm:$0xff]
    %v1549 = vld [vmem:[#allocation10 + $0x4d8] sm:$0xff]
    %v1550 = vld [vmem:[#allocation10 + $0x4e0] sm:$0xff]
    %v1551 = vld [vmem:[#allocation10 + $0x4e8] sm:$0xff]
    %v1552 = vld [vmem:[#allocation10 + $0x4f0] sm:$0xff]
    %v1553 = vld [vmem:[#allocation10 + $0x4f8] sm:$0xff]
    %v1554 = vld [vmem:[#allocation10 + $0x500] sm:$0xff]
    %v1555 = vld [vmem:[#allocation10 + $0x508] sm:$0xff]
    %v1556 = vld [vmem:[#allocation10 + $0x510] sm:$0xff]
    %v1557 = vld [vmem:[#allocation10 + $0x518] sm:$0xff]
    %v1558 = vld [vmem:[#allocation10 + $0x520] sm:$0xff]
    %v1559 = vld [vmem:[#allocation10 + $0x528] sm:$0xff]
    %v1560 = vld [vmem:[#allocation10 + $0x530] sm:$0xff]
    %v1561 = vld [vmem:[#allocation10 + $0x538] sm:$0xff]
    %v1562 = vld [vmem:[#allocation10 + $0x540] sm:$0xff]
    %v1563 = vld [vmem:[#allocation10 + $0x548] sm:$0xff]
    %v1564 = vld [vmem:[#allocation10 + $0x550] sm:$0xff]
    %v1565 = vld [vmem:[#allocation10 + $0x558] sm:$0xff]
    %v1566 = vld [vmem:[#allocation10 + $0x560] sm:$0xff]
    %v1567 = vld [vmem:[#allocation10 + $0x568] sm:$0xff]
    %v1568 = vld [vmem:[#allocation10 + $0x570] sm:$0xff]
    %v1569 = vld [vmem:[#allocation10 + $0x578] sm:$0xff]
    %v1570 = vld [vmem:[#allocation10 + $0x580] sm:$0xff]
    %v1571 = vld [vmem:[#allocation10 + $0x588] sm:$0xff]
    %v1572 = vld [vmem:[#allocation10 + $0x590] sm:$0xff]
    %v1573 = vld [vmem:[#allocation10 + $0x598] sm:$0xff]
    %v1574 = vld [vmem:[#allocation10 + $0x5a0] sm:$0xff]
    %v1575 = vld [vmem:[#allocation10 + $0x5a8] sm:$0xff]
    %v1576 = vld [vmem:[#allocation10 + $0x5b0] sm:$0xff]
    %v1577 = vld [vmem:[#allocation10 + $0x5b8] sm:$0xff]
    %v1578 = vld [vmem:[#allocation10 + $0x5c0] sm:$0xff]
    %v1579 = vld [vmem:[#allocation10 + $0x5c8] sm:$0xff]
    %v1580 = vld [vmem:[#allocation10 + $0x5d0] sm:$0xff]
    %v1581 = vld [vmem:[#allocation10 + $0x5d8] sm:$0xff]
    %v1582 = vld [vmem:[#allocation10 + $0x5e0] sm:$0xff]
    %v1583 = vld [vmem:[#allocation10 + $0x5e8] sm:$0xff]
    %v1584 = vld [vmem:[#allocation10 + $0x5f0] sm:$0xff]
    %v1585 = vld [vmem:[#allocation10 + $0x5f8] sm:$0xff]
    %v1586 = vld [vmem:[#allocation10 + $0x600] sm:$0xff]
    %v1587 = vld [vmem:[#allocation10 + $0x608] sm:$0xff]
    %v1588 = vld [vmem:[#allocation10 + $0x610] sm:$0xff]
    %v1589 = vld [vmem:[#allocation10 + $0x618] sm:$0xff]
    %v1590 = vld [vmem:[#allocation10 + $0x620] sm:$0xff]
    %v1591 = vld [vmem:[#allocation10 + $0x628] sm:$0xff]
    %v1592 = vld [vmem:[#allocation10 + $0x630] sm:$0xff]
    %v1593 = vld [vmem:[#allocation10 + $0x638] sm:$0xff]
    %v1594 = vld [vmem:[#allocation10 + $0x640] sm:$0xff]
    %v1595 = vld [vmem:[#allocation10 + $0x648] sm:$0xff]
    %v1596 = vld [vmem:[#allocation10 + $0x650] sm:$0xff]
    %v1597 = vld [vmem:[#allocation10 + $0x658] sm:$0xff]
    %v1598 = vld [vmem:[#allocation10 + $0x660] sm:$0xff]
    %v1599 = vld [vmem:[#allocation10 + $0x668] sm:$0xff]
    %v1600 = vld [vmem:[#allocation10 + $0x670] sm:$0xff]
    %v1601 = vld [vmem:[#allocation10 + $0x678] sm:$0xff]
    %v1602 = vld [vmem:[#allocation10 + $0x680] sm:$0xff]
    %v1603 = vld [vmem:[#allocation10 + $0x688] sm:$0xff]
    %v1604 = vld [vmem:[#allocation10 + $0x690] sm:$0xff]
    %v1605 = vld [vmem:[#allocation10 + $0x698] sm:$0xff]
    %v1606 = vld [vmem:[#allocation10 + $0x6a0] sm:$0xff]
    %v1607 = vld [vmem:[#allocation10 + $0x6a8] sm:$0xff]
    %v1608 = vld [vmem:[#allocation10 + $0x6b0] sm:$0xff]
    %v1609 = vld [vmem:[#allocation10 + $0x6b8] sm:$0xff]
    %v1610 = vld [vmem:[#allocation10 + $0x6c0] sm:$0xff]
    %v1611 = vld [vmem:[#allocation10 + $0x6c8] sm:$0xff]
    %v1612 = vld [vmem:[#allocation10 + $0x6d0] sm:$0xff]
    %v1613 = vld [vmem:[#allocation10 + $0x6d8] sm:$0xff]
    %v1614 = vld [vmem:[#allocation10 + $0x6e0] sm:$0xff]
    %v1615 = vld [vmem:[#allocation10 + $0x6e8] sm:$0xff]
    %v1616 = vld [vmem:[#allocation10 + $0x6f0] sm:$0xff]
    %v1617 = vld [vmem:[#allocation10 + $0x6f8] sm:$0xff]
    %v1618 = vld [vmem:[#allocation10 + $0x700] sm:$0xff]
    %v1619 = vld [vmem:[#allocation10 + $0x708] sm:$0xff]
    %v1620 = vld [vmem:[#allocation10 + $0x710] sm:$0xff]
    %v1621 = vld [vmem:[#allocation10 + $0x718] sm:$0xff]
    %v1622 = vld [vmem:[#allocation10 + $0x720] sm:$0xff]
    %v1623 = vld [vmem:[#allocation10 + $0x728] sm:$0xff]
    %v1624 = vld [vmem:[#allocation10 + $0x730] sm:$0xff]
    %v1625 = vld [vmem:[#allocation10 + $0x738] sm:$0xff]
    %v1626 = vld [vmem:[#allocation10 + $0x740] sm:$0xff]
    %v1627 = vld [vmem:[#allocation10 + $0x748] sm:$0xff]
    %v1628 = vld [vmem:[#allocation10 + $0x750] sm:$0xff]
    %v1629 = vld [vmem:[#allocation10 + $0x758] sm:$0xff]
    %v1630 = vld [vmem:[#allocation10 + $0x760] sm:$0xff]
    %v1631 = vld [vmem:[#allocation10 + $0x768] sm:$0xff]
    %v1632 = vld [vmem:[#allocation10 + $0x770] sm:$0xff]
    %v1633 = vld [vmem:[#allocation10 + $0x778] sm:$0xff]
    %v1634 = vld [vmem:[#allocation10 + $0x780] sm:$0xff]
    %v1635 = vld [vmem:[#allocation10 + $0x788] sm:$0xff]
    %v1636 = vld [vmem:[#allocation10 + $0x790] sm:$0xff]
    %v1637 = vld [vmem:[#allocation10 + $0x798] sm:$0xff]
    %v1638 = vld [vmem:[#allocation10 + $0x7a0] sm:$0xff]
    %v1639 = vld [vmem:[#allocation10 + $0x7a8] sm:$0xff]
    %v1640 = vld [vmem:[#allocation10 + $0x7b0] sm:$0xff]
    %v1641 = vld [vmem:[#allocation10 + $0x7b8] sm:$0xff]
    %v1642 = vld [vmem:[#allocation10 + $0x7c0] sm:$0xff]
    %v1643 = vld [vmem:[#allocation10 + $0x7c8] sm:$0xff]
    %v1644 = vld [vmem:[#allocation10 + $0x7d0] sm:$0xff]
    %v1645 = vld [vmem:[#allocation10 + $0x7d8] sm:$0xff]
    %v1646 = vld [vmem:[#allocation10 + $0x7e0] sm:$0xff]
    %v1647 = vld [vmem:[#allocation10 + $0x7e8] sm:$0xff]
    %v1648 = vld [vmem:[#allocation10 + $0x7f0] sm:$0xff]
    %v1649 = vld [vmem:[#allocation10 + $0x7f8] sm:$0xff]
    %v1650 = vld [vmem:[#allocation10 + $0x800] sm:$0xff]
    %v1651 = vld [vmem:[#allocation10 + $0x808] sm:$0xff]
    %v1652 = vld [vmem:[#allocation10 + $0x810] sm:$0xff]
    %v1653 = vld [vmem:[#allocation10 + $0x818] sm:$0xff]
    %v1654 = vld [vmem:[#allocation10 + $0x820] sm:$0xff]
    %v1655 = vld [vmem:[#allocation10 + $0x828] sm:$0xff]
    %v1656 = vld [vmem:[#allocation10 + $0x830] sm:$0xff]
    %v1657 = vld [vmem:[#allocation10 + $0x838] sm:$0xff]
    %v1658 = vld [vmem:[#allocation10 + $0x840] sm:$0xff]
    %v1659 = vld [vmem:[#allocation10 + $0x848] sm:$0xff]
    %v1660 = vld [vmem:[#allocation10 + $0x850] sm:$0xff]
    %v1661 = vld [vmem:[#allocation10 + $0x858] sm:$0xff]
    %v1662 = vld [vmem:[#allocation10 + $0x860] sm:$0xff]
    %v1663 = vld [vmem:[#allocation10 + $0x868] sm:$0xff]
    %v1664 = vld [vmem:[#allocation10 + $0x870] sm:$0xff]
    %v1665 = vld [vmem:[#allocation10 + $0x878] sm:$0xff]
    %v1666 = vld [vmem:[#allocation10 + $0x880] sm:$0xff]
    %v1667 = vld [vmem:[#allocation10 + $0x888] sm:$0xff]
    %v1668 = vld [vmem:[#allocation10 + $0x890] sm:$0xff]
    %v1669 = vld [vmem:[#allocation10 + $0x898] sm:$0xff]
    %v1670 = vld [vmem:[#allocation10 + $0x8a0] sm:$0xff]
    %v1671 = vld [vmem:[#allocation10 + $0x8a8] sm:$0xff]
    %v1672 = vld [vmem:[#allocation10 + $0x8b0] sm:$0xff]
    %v1673 = vld [vmem:[#allocation10 + $0x8b8] sm:$0xff]
    %v1674 = vld [vmem:[#allocation10 + $0x8c0] sm:$0xff]
    %v1675 = vld [vmem:[#allocation10 + $0x8c8] sm:$0xff]
    %v1676 = vld [vmem:[#allocation10 + $0x8d0] sm:$0xff]
    %v1677 = vld [vmem:[#allocation10 + $0x8d8] sm:$0xff]
    %v1678 = vld [vmem:[#allocation10 + $0x8e0] sm:$0xff]
    %v1679 = vld [vmem:[#allocation10 + $0x8e8] sm:$0xff]
    %v1680 = vld [vmem:[#allocation10 + $0x8f0] sm:$0xff]
    %v1681 = vld [vmem:[#allocation10 + $0x8f8] sm:$0xff]
    %v1682 = vld [vmem:[#allocation10 + $0x900] sm:$0xff]
    %v1683 = vld [vmem:[#allocation10 + $0x908] sm:$0xff]
    %v1684 = vld [vmem:[#allocation10 + $0x910] sm:$0xff]
    %v1685 = vld [vmem:[#allocation10 + $0x918] sm:$0xff]
    %v1686 = vld [vmem:[#allocation10 + $0x920] sm:$0xff]
    %v1687 = vld [vmem:[#allocation10 + $0x928] sm:$0xff]
    %v1688 = vld [vmem:[#allocation10 + $0x930] sm:$0xff]
    %v1689 = vld [vmem:[#allocation10 + $0x938] sm:$0xff]
    %v1690 = vld [vmem:[#allocation10 + $0x940] sm:$0xff]
    %v1691 = vld [vmem:[#allocation10 + $0x948] sm:$0xff]
    %v1692 = vld [vmem:[#allocation10 + $0x950] sm:$0xff]
    %v1693 = vld [vmem:[#allocation10 + $0x958] sm:$0xff]
    %v1694 = vld [vmem:[#allocation10 + $0x960] sm:$0xff]
    %v1695 = vld [vmem:[#allocation10 + $0x968] sm:$0xff]
    %v1696 = vld [vmem:[#allocation10 + $0x970] sm:$0xff]
    %v1697 = vld [vmem:[#allocation10 + $0x978] sm:$0xff]
    %v1698 = vld [vmem:[#allocation10 + $0x980] sm:$0xff]
    %v1699 = vld [vmem:[#allocation10 + $0x988] sm:$0xff]
    %v1700 = vld [vmem:[#allocation10 + $0x990] sm:$0xff]
    %v1701 = vld [vmem:[#allocation10 + $0x998] sm:$0xff]
    %v1702 = vld [vmem:[#allocation10 + $0x9a0] sm:$0xff]
    %v1703 = vld [vmem:[#allocation10 + $0x9a8] sm:$0xff]
    %v1704 = vld [vmem:[#allocation10 + $0x9b0] sm:$0xff]
    %v1705 = vld [vmem:[#allocation10 + $0x9b8] sm:$0xff]
    %v1706 = vld [vmem:[#allocation10 + $0x9c0] sm:$0xff]
    %v1707 = vld [vmem:[#allocation10 + $0x9c8] sm:$0xff]
    %v1708 = vld [vmem:[#allocation10 + $0x9d0] sm:$0xff]
    %v1709 = vld [vmem:[#allocation10 + $0x9d8] sm:$0xff]
    %v1710 = vld [vmem:[#allocation10 + $0x9e0] sm:$0xff]
    %v1711 = vld [vmem:[#allocation10 + $0x9e8] sm:$0xff]
    %v1712 = vld [vmem:[#allocation10 + $0x9f0] sm:$0xff]
    %v1713 = vld [vmem:[#allocation10 + $0x9f8] sm:$0xff]
    %v1714 = vld [vmem:[#allocation10 + $0xa00] sm:$0xff]
    %v1715 = vld [vmem:[#allocation10 + $0xa08] sm:$0xff]
    %v1716 = vld [vmem:[#allocation10 + $0xa10] sm:$0xff]
    %v1717 = vld [vmem:[#allocation10 + $0xa18] sm:$0xff]
    %v1718 = vld [vmem:[#allocation10 + $0xa20] sm:$0xff]
    %v1719 = vld [vmem:[#allocation10 + $0xa28] sm:$0xff]
    %v1720 = vld [vmem:[#allocation10 + $0xa30] sm:$0xff]
    %v1721 = vld [vmem:[#allocation10 + $0xa38] sm:$0xff]
    %v1722 = vld [vmem:[#allocation10 + $0xa40] sm:$0xff]
    %v1723 = vld [vmem:[#allocation10 + $0xa48] sm:$0xff]
    %v1724 = vld [vmem:[#allocation10 + $0xa50] sm:$0xff]
    %v1725 = vld [vmem:[#allocation10 + $0xa58] sm:$0xff]
    %v1726 = vld [vmem:[#allocation10 + $0xa60] sm:$0xff]
    %v1727 = vld [vmem:[#allocation10 + $0xa68] sm:$0xff]
    %v1728 = vld [vmem:[#allocation10 + $0xa70] sm:$0xff]
    %v1729 = vld [vmem:[#allocation10 + $0xa78] sm:$0xff]
    %v1730 = vld [vmem:[#allocation10 + $0xa80] sm:$0xff]
    %v1731 = vld [vmem:[#allocation10 + $0xa88] sm:$0xff]
    %v1732 = vld [vmem:[#allocation10 + $0xa90] sm:$0xff]
    %v1733 = vld [vmem:[#allocation10 + $0xa98] sm:$0xff]
    %v1734 = vld [vmem:[#allocation10 + $0xaa0] sm:$0xff]
    %v1735 = vld [vmem:[#allocation10 + $0xaa8] sm:$0xff]
    %v1736 = vld [vmem:[#allocation10 + $0xab0] sm:$0xff]
    %v1737 = vld [vmem:[#allocation10 + $0xab8] sm:$0xff]
    %v1738 = vld [vmem:[#allocation10 + $0xac0] sm:$0xff]
    %v1739 = vld [vmem:[#allocation10 + $0xac8] sm:$0xff]
    %v1740 = vld [vmem:[#allocation10 + $0xad0] sm:$0xff]
    %v1741 = vld [vmem:[#allocation10 + $0xad8] sm:$0xff]
    %v1742 = vld [vmem:[#allocation10 + $0xae0] sm:$0xff]
    %v1743 = vld [vmem:[#allocation10 + $0xae8] sm:$0xff]
    %v1744 = vld [vmem:[#allocation10 + $0xaf0] sm:$0xff]
    %v1745 = vld [vmem:[#allocation10 + $0xaf8] sm:$0xff]
    %v1746 = vld [vmem:[#allocation10 + $0xb00] sm:$0xff]
    %v1747 = vld [vmem:[#allocation10 + $0xb08] sm:$0xff]
    %v1748 = vld [vmem:[#allocation10 + $0xb10] sm:$0xff]
    %v1749 = vld [vmem:[#allocation10 + $0xb18] sm:$0xff]
    %v1750 = vld [vmem:[#allocation10 + $0xb20] sm:$0xff]
    %v1751 = vld [vmem:[#allocation10 + $0xb28] sm:$0xff]
    %v1752 = vld [vmem:[#allocation10 + $0xb30] sm:$0xff]
    %v1753 = vld [vmem:[#allocation10 + $0xb38] sm:$0xff]
    %v1754 = vld [vmem:[#allocation10 + $0xb40] sm:$0xff]
    %v1755 = vld [vmem:[#allocation10 + $0xb48] sm:$0xff]
    %v1756 = vld [vmem:[#allocation10 + $0xb50] sm:$0xff]
    %v1757 = vld [vmem:[#allocation10 + $0xb58] sm:$0xff]
    %v1758 = vld [vmem:[#allocation10 + $0xb60] sm:$0xff]
    %v1759 = vld [vmem:[#allocation10 + $0xb68] sm:$0xff]
    %v1760 = vld [vmem:[#allocation10 + $0xb70] sm:$0xff]
    %v1761 = vld [vmem:[#allocation10 + $0xb78] sm:$0xff]
    %v1762 = vld [vmem:[#allocation10 + $0xb80] sm:$0xff]
    %v1763 = vld [vmem:[#allocation10 + $0xb88] sm:$0xff]
    %v1764 = vld [vmem:[#allocation10 + $0xb90] sm:$0xff]
    %v1765 = vld [vmem:[#allocation10 + $0xb98] sm:$0xff]
    %v1766 = vld [vmem:[#allocation10 + $0xba0] sm:$0xff]
    %v1767 = vld [vmem:[#allocation10 + $0xba8] sm:$0xff]
    %v1768 = vld [vmem:[#allocation10 + $0xbb0] sm:$0xff]
    %v1769 = vld [vmem:[#allocation10 + $0xbb8] sm:$0xff]
    %v1770 = vld [vmem:[#allocation10 + $0xbc0] sm:$0xff]
    %v1771 = vld [vmem:[#allocation10 + $0xbc8] sm:$0xff]
    %v1772 = vld [vmem:[#allocation10 + $0xbd0] sm:$0xff]
    %v1773 = vld [vmem:[#allocation10 + $0xbd8] sm:$0xff]
    %v1774 = vld [vmem:[#allocation10 + $0xbe0] sm:$0xff]
    %v1775 = vld [vmem:[#allocation10 + $0xbe8] sm:$0xff]
    %v1776 = vld [vmem:[#allocation10 + $0xbf0] sm:$0xff]
    %v1777 = vld [vmem:[#allocation10 + $0xbf8] sm:$0xff]
    %v1778 = vld [vmem:[#allocation10 + $0xc00] sm:$0xff]
    %v1779 = vld [vmem:[#allocation10 + $0xc08] sm:$0xff]
    %v1780 = vld [vmem:[#allocation10 + $0xc10] sm:$0xff]
    %v1781 = vld [vmem:[#allocation10 + $0xc18] sm:$0xff]
    %v1782 = vld [vmem:[#allocation10 + $0xc20] sm:$0xff]
    %v1783 = vld [vmem:[#allocation10 + $0xc28] sm:$0xff]
    %v1784 = vld [vmem:[#allocation10 + $0xc30] sm:$0xff]
    %v1785 = vld [vmem:[#allocation10 + $0xc38] sm:$0xff]
    %v1786 = vld [vmem:[#allocation10 + $0xc40] sm:$0xff]
    %v1787 = vld [vmem:[#allocation10 + $0xc48] sm:$0xff]
    %v1788 = vld [vmem:[#allocation10 + $0xc50] sm:$0xff]
    %v1789 = vld [vmem:[#allocation10 + $0xc58] sm:$0xff]
    %v1790 = vld [vmem:[#allocation10 + $0xc60] sm:$0xff]
    %v1791 = vld [vmem:[#allocation10 + $0xc68] sm:$0xff]
    %v1792 = vld [vmem:[#allocation10 + $0xc70] sm:$0xff]
    %v1793 = vld [vmem:[#allocation10 + $0xc78] sm:$0xff]
    %v1794 = vld [vmem:[#allocation10 + $0xc80] sm:$0xff]
    %v1795 = vld [vmem:[#allocation10 + $0xc88] sm:$0xff]
    %v1796 = vld [vmem:[#allocation10 + $0xc90] sm:$0xff]
    %v1797 = vld [vmem:[#allocation10 + $0xc98] sm:$0xff]
    %v1798 = vld [vmem:[#allocation10 + $0xca0] sm:$0xff]
    %v1799 = vld [vmem:[#allocation10 + $0xca8] sm:$0xff]
    %v1800 = vld [vmem:[#allocation10 + $0xcb0] sm:$0xff]
    %v1801 = vld [vmem:[#allocation10 + $0xcb8] sm:$0xff]
    %v1802 = vld [vmem:[#allocation10 + $0xcc0] sm:$0xff]
    %v1803 = vld [vmem:[#allocation10 + $0xcc8] sm:$0xff]
    %v1804 = vld [vmem:[#allocation10 + $0xcd0] sm:$0xff]
    %v1805 = vld [vmem:[#allocation10 + $0xcd8] sm:$0xff]
    %v1806 = vld [vmem:[#allocation10 + $0xce0] sm:$0xff]
    %v1807 = vld [vmem:[#allocation10 + $0xce8] sm:$0xff]
    %v1808 = vld [vmem:[#allocation10 + $0xcf0] sm:$0xff]
    %v1809 = vld [vmem:[#allocation10 + $0xcf8] sm:$0xff]
    %v1810 = vld [vmem:[#allocation10 + $0xd00] sm:$0xff]
    %v1811 = vld [vmem:[#allocation10 + $0xd08] sm:$0xff]
    %v1812 = vld [vmem:[#allocation10 + $0xd10] sm:$0xff]
    %v1813 = vld [vmem:[#allocation10 + $0xd18] sm:$0xff]
    %v1814 = vld [vmem:[#allocation10 + $0xd20] sm:$0xff]
    %v1815 = vld [vmem:[#allocation10 + $0xd28] sm:$0xff]
    %v1816 = vld [vmem:[#allocation10 + $0xd30] sm:$0xff]
    %v1817 = vld [vmem:[#allocation10 + $0xd38] sm:$0xff]
    %v1818 = vld [vmem:[#allocation10 + $0xd40] sm:$0xff]
    %v1819 = vld [vmem:[#allocation10 + $0xd48] sm:$0xff]
    %v1820 = vld [vmem:[#allocation10 + $0xd50] sm:$0xff]
    %v1821 = vld [vmem:[#allocation10 + $0xd58] sm:$0xff]
    %v1822 = vld [vmem:[#allocation10 + $0xd60] sm:$0xff]
    %v1823 = vld [vmem:[#allocation10 + $0xd68] sm:$0xff]
    %v1824 = vld [vmem:[#allocation10 + $0xd70] sm:$0xff]
    %v1825 = vld [vmem:[#allocation10 + $0xd78] sm:$0xff]
    %v1826 = vld [vmem:[#allocation10 + $0xd80] sm:$0xff]
    %v1827 = vld [vmem:[#allocation10 + $0xd88] sm:$0xff]
    %v1828 = vld [vmem:[#allocation10 + $0xd90] sm:$0xff]
    %v1829 = vld [vmem:[#allocation10 + $0xd98] sm:$0xff]
    %v1830 = vld [vmem:[#allocation10 + $0xda0] sm:$0xff]
    %v1831 = vld [vmem:[#allocation10 + $0xda8] sm:$0xff]
    %v1832 = vld [vmem:[#allocation10 + $0xdb0] sm:$0xff]
    %v1833 = vld [vmem:[#allocation10 + $0xdb8] sm:$0xff]
    %v1834 = vld [vmem:[#allocation10 + $0xdc0] sm:$0xff]
    %v1835 = vld [vmem:[#allocation10 + $0xdc8] sm:$0xff]
    %v1836 = vld [vmem:[#allocation10 + $0xdd0] sm:$0xff]
    %v1837 = vld [vmem:[#allocation10 + $0xdd8] sm:$0xff]
    %v1838 = vld [vmem:[#allocation10 + $0xde0] sm:$0xff]
    %v1839 = vld [vmem:[#allocation10 + $0xde8] sm:$0xff]
    %v1840 = vld [vmem:[#allocation10 + $0xdf0] sm:$0xff]
    %v1841 = vld [vmem:[#allocation10 + $0xdf8] sm:$0xff]
    %v1842 = vld [vmem:[#allocation10 + $0xe00] sm:$0xff]
    %v1843 = vld [vmem:[#allocation10 + $0xe08] sm:$0xff]
    %v1844 = vld [vmem:[#allocation10 + $0xe10] sm:$0xff]
    %v1845 = vld [vmem:[#allocation10 + $0xe18] sm:$0xff]
    %v1846 = vld [vmem:[#allocation10 + $0xe20] sm:$0xff]
    %v1847 = vld [vmem:[#allocation10 + $0xe28] sm:$0xff]
    %v1848 = vld [vmem:[#allocation10 + $0xe30] sm:$0xff]
    %v1849 = vld [vmem:[#allocation10 + $0xe38] sm:$0xff]
    %v1850 = vld [vmem:[#allocation10 + $0xe40] sm:$0xff]
    %v1851 = vld [vmem:[#allocation10 + $0xe48] sm:$0xff]
    %v1852 = vld [vmem:[#allocation10 + $0xe50] sm:$0xff]
    %v1853 = vld [vmem:[#allocation10 + $0xe58] sm:$0xff]
    %v1854 = vld [vmem:[#allocation10 + $0xe60] sm:$0xff]
    %v1855 = vld [vmem:[#allocation10 + $0xe68] sm:$0xff]
    %v1856 = vld [vmem:[#allocation10 + $0xe70] sm:$0xff]
    %v1857 = vld [vmem:[#allocation10 + $0xe78] sm:$0xff]
    %v1858 = vld [vmem:[#allocation10 + $0xe80] sm:$0xff]
    %v1859 = vld [vmem:[#allocation10 + $0xe88] sm:$0xff]
    %v1860 = vld [vmem:[#allocation10 + $0xe90] sm:$0xff]
    %v1861 = vld [vmem:[#allocation10 + $0xe98] sm:$0xff]
    %v1862 = vld [vmem:[#allocation10 + $0xea0] sm:$0xff]
    %v1863 = vld [vmem:[#allocation10 + $0xea8] sm:$0xff]
    %v1864 = vld [vmem:[#allocation10 + $0xeb0] sm:$0xff]
    %v1865 = vld [vmem:[#allocation10 + $0xeb8] sm:$0xff]
    %v1866 = vld [vmem:[#allocation10 + $0xec0] sm:$0xff]
    %v1867 = vld [vmem:[#allocation10 + $0xec8] sm:$0xff]
    %v1868 = vld [vmem:[#allocation10 + $0xed0] sm:$0xff]
    %v1869 = vld [vmem:[#allocation10 + $0xed8] sm:$0xff]
    %v1870 = vld [vmem:[#allocation10 + $0xee0] sm:$0xff]
    %v1871 = vld [vmem:[#allocation10 + $0xee8] sm:$0xff]
    %v1872 = vld [vmem:[#allocation10 + $0xef0] sm:$0xff]
    %v1873 = vld [vmem:[#allocation10 + $0xef8] sm:$0xff]
    %v1874 = vld [vmem:[#allocation10 + $0xf00] sm:$0xff]
    %v1875 = vld [vmem:[#allocation10 + $0xf08] sm:$0xff]
    %v1876 = vld [vmem:[#allocation10 + $0xf10] sm:$0xff]
    %v1877 = vld [vmem:[#allocation10 + $0xf18] sm:$0xff]
    %v1878 = vld [vmem:[#allocation10 + $0xf20] sm:$0xff]
    %v1879 = vld [vmem:[#allocation10 + $0xf28] sm:$0xff]
    %v1880 = vld [vmem:[#allocation10 + $0xf30] sm:$0xff]
    %v1881 = vld [vmem:[#allocation10 + $0xf38] sm:$0xff]
    %v1882 = vld [vmem:[#allocation10 + $0xf40] sm:$0xff]
    %v1883 = vld [vmem:[#allocation10 + $0xf48] sm:$0xff]
    %v1884 = vld [vmem:[#allocation10 + $0xf50] sm:$0xff]
    %v1885 = vld [vmem:[#allocation10 + $0xf58] sm:$0xff]
    %v1886 = vld [vmem:[#allocation10 + $0xf60] sm:$0xff]
    %v1887 = vld [vmem:[#allocation10 + $0xf68] sm:$0xff]
    %v1888 = vld [vmem:[#allocation10 + $0xf70] sm:$0xff]
    %v1889 = vld [vmem:[#allocation10 + $0xf78] sm:$0xff]
    %v1890 = vld [vmem:[#allocation10 + $0xf80] sm:$0xff]
    %v1891 = vld [vmem:[#allocation10 + $0xf88] sm:$0xff]
    %v1892 = vld [vmem:[#allocation10 + $0xf90] sm:$0xff]
    %v1893 = vld [vmem:[#allocation10 + $0xf98] sm:$0xff]
    %v1894 = vld [vmem:[#allocation10 + $0xfa0] sm:$0xff]
    %v1895 = vld [vmem:[#allocation10 + $0xfa8] sm:$0xff]
    %v1896 = vld [vmem:[#allocation10 + $0xfb0] sm:$0xff]
    %v1897 = vld [vmem:[#allocation10 + $0xfb8] sm:$0xff]
    %v1898 = vld [vmem:[#allocation10 + $0xfc0] sm:$0xff]
    %v1899 = vld [vmem:[#allocation10 + $0xfc8] sm:$0xff]
    %v1900 = vld [vmem:[#allocation10 + $0xfd0] sm:$0xff]
    %v1901 = vld [vmem:[#allocation10 + $0xfd8] sm:$0xff]
    %v1902 = vld [vmem:[#allocation10 + $0xfe0] sm:$0xff]
    %v1903 = vld [vmem:[#allocation10 + $0xfe8] sm:$0xff]
    %v1904 = vld [vmem:[#allocation10 + $0xff0] sm:$0xff]
    %v1905 = vld [vmem:[#allocation10 + $0xff8] sm:$0xff]
    %v1906 = vld [vmem:[#allocation11] sm:$0xff]
    %v1908 = vperm.slane %v1906, 0
    %v1909 = vperm.slane %v1906, 1
    %v1910 = vperm.slane %v1906, 2
    %v1911 = vperm.slane %v1906, 3
    %v1912 = vperm.slane %v1906, 4
    %v1913 = vperm.slane %v1906, 5
    %v1914 = vperm.slane %v1906, 6
    %v1915 = vperm.slane %v1906, 7
    %v2436 = vunpack.c.l.b16 %v1394
    %v2437 = vunpack.c.h.b16 %v1394
    %v2438 = vunpack.c.l.b16 %v1395
    %v2439 = vunpack.c.h.b16 %v1395
    %v2440 = vunpack.c.l.b16 %v1396
    %v2441 = vunpack.c.h.b16 %v1396
    %v2442 = vunpack.c.l.b16 %v1397
    %v2443 = vunpack.c.h.b16 %v1397
    %v2444 = vunpack.c.l.b16 %v1398
    %v2445 = vunpack.c.h.b16 %v1398
    %v2446 = vunpack.c.l.b16 %v1399
    %v2447 = vunpack.c.h.b16 %v1399
    %v2448 = vunpack.c.l.b16 %v1400
    %v2449 = vunpack.c.h.b16 %v1400
    %v2450 = vunpack.c.l.b16 %v1401
    %v2451 = vunpack.c.h.b16 %v1401
    %v2452 = vunpack.c.l.b16 %v1402
    %v2453 = vunpack.c.h.b16 %v1402
    %v2454 = vunpack.c.l.b16 %v1403
    %v2455 = vunpack.c.h.b16 %v1403
    %v2456 = vunpack.c.l.b16 %v1404
    %v2457 = vunpack.c.h.b16 %v1404
    %v2458 = vunpack.c.l.b16 %v1405
    %v2459 = vunpack.c.h.b16 %v1405
    %v2460 = vunpack.c.l.b16 %v1406
    %v2461 = vunpack.c.h.b16 %v1406
    %v2462 = vunpack.c.l.b16 %v1407
    %v2463 = vunpack.c.h.b16 %v1407
    %v2464 = vunpack.c.l.b16 %v1408
    %v2465 = vunpack.c.h.b16 %v1408
    %v2466 = vunpack.c.l.b16 %v1409
    %v2467 = vunpack.c.h.b16 %v1409
    %v2468 = vunpack.c.l.b16 %v1410
    %v2469 = vunpack.c.h.b16 %v1410
    %v2470 = vunpack.c.l.b16 %v1411
    %v2471 = vunpack.c.h.b16 %v1411
    %v2472 = vunpack.c.l.b16 %v1412
    %v2473 = vunpack.c.h.b16 %v1412
    %v2474 = vunpack.c.l.b16 %v1413
    %v2475 = vunpack.c.h.b16 %v1413
    %v2476 = vunpack.c.l.b16 %v1414
    %v2477 = vunpack.c.h.b16 %v1414
    %v2478 = vunpack.c.l.b16 %v1415
    %v2479 = vunpack.c.h.b16 %v1415
    %v2480 = vunpack.c.l.b16 %v1416
    %v2481 = vunpack.c.h.b16 %v1416
    %v2482 = vunpack.c.l.b16 %v1417
    %v2483 = vunpack.c.h.b16 %v1417
    %v2484 = vunpack.c.l.b16 %v1418
    %v2485 = vunpack.c.h.b16 %v1418
    %v2486 = vunpack.c.l.b16 %v1419
    %v2487 = vunpack.c.h.b16 %v1419
    %v2488 = vunpack.c.l.b16 %v1420
    %v2489 = vunpack.c.h.b16 %v1420
    %v2490 = vunpack.c.l.b16 %v1421
    %v2491 = vunpack.c.h.b16 %v1421
    %v2492 = vunpack.c.l.b16 %v1422
    %v2493 = vunpack.c.h.b16 %v1422
    %v2494 = vunpack.c.l.b16 %v1423
    %v2495 = vunpack.c.h.b16 %v1423
    %v2496 = vunpack.c.l.b16 %v1424
    %v2497 = vunpack.c.h.b16 %v1424
    %v2498 = vunpack.c.l.b16 %v1425
    %v2499 = vunpack.c.h.b16 %v1425
    %v2500 = vunpack.c.l.b16 %v1426
    %v2501 = vunpack.c.h.b16 %v1426
    %v2502 = vunpack.c.l.b16 %v1427
    %v2503 = vunpack.c.h.b16 %v1427
    %v2504 = vunpack.c.l.b16 %v1428
    %v2505 = vunpack.c.h.b16 %v1428
    %v2506 = vunpack.c.l.b16 %v1429
    %v2507 = vunpack.c.h.b16 %v1429
    %v2508 = vunpack.c.l.b16 %v1430
    %v2509 = vunpack.c.h.b16 %v1430
    %v2510 = vunpack.c.l.b16 %v1431
    %v2511 = vunpack.c.h.b16 %v1431
    %v2512 = vunpack.c.l.b16 %v1432
    %v2513 = vunpack.c.h.b16 %v1432
    %v2514 = vunpack.c.l.b16 %v1433
    %v2515 = vunpack.c.h.b16 %v1433
    %v2516 = vunpack.c.l.b16 %v1434
    %v2517 = vunpack.c.h.b16 %v1434
    %v2518 = vunpack.c.l.b16 %v1435
    %v2519 = vunpack.c.h.b16 %v1435
    %v2520 = vunpack.c.l.b16 %v1436
    %v2521 = vunpack.c.h.b16 %v1436
    %v2522 = vunpack.c.l.b16 %v1437
    %v2523 = vunpack.c.h.b16 %v1437
    %v2524 = vunpack.c.l.b16 %v1438
    %v2525 = vunpack.c.h.b16 %v1438
    %v2526 = vunpack.c.l.b16 %v1439
    %v2527 = vunpack.c.h.b16 %v1439
    %v2528 = vunpack.c.l.b16 %v1440
    %v2529 = vunpack.c.h.b16 %v1440
    %v2530 = vunpack.c.l.b16 %v1441
    %v2531 = vunpack.c.h.b16 %v1441
    %v2532 = vunpack.c.l.b16 %v1442
    %v2533 = vunpack.c.h.b16 %v1442
    %v2534 = vunpack.c.l.b16 %v1443
    %v2535 = vunpack.c.h.b16 %v1443
    %v2536 = vunpack.c.l.b16 %v1444
    %v2537 = vunpack.c.h.b16 %v1444
    %v2538 = vunpack.c.l.b16 %v1445
    %v2539 = vunpack.c.h.b16 %v1445
    %v2540 = vunpack.c.l.b16 %v1446
    %v2541 = vunpack.c.h.b16 %v1446
    %v2542 = vunpack.c.l.b16 %v1447
    %v2543 = vunpack.c.h.b16 %v1447
    %v2544 = vunpack.c.l.b16 %v1448
    %v2545 = vunpack.c.h.b16 %v1448
    %v2546 = vunpack.c.l.b16 %v1449
    %v2547 = vunpack.c.h.b16 %v1449
    %v2548 = vunpack.c.l.b16 %v1450
    %v2549 = vunpack.c.h.b16 %v1450
    %v2550 = vunpack.c.l.b16 %v1451
    %v2551 = vunpack.c.h.b16 %v1451
    %v2552 = vunpack.c.l.b16 %v1452
    %v2553 = vunpack.c.h.b16 %v1452
    %v2554 = vunpack.c.l.b16 %v1453
    %v2555 = vunpack.c.h.b16 %v1453
    %v2556 = vunpack.c.l.b16 %v1454
    %v2557 = vunpack.c.h.b16 %v1454
    %v2558 = vunpack.c.l.b16 %v1455
    %v2559 = vunpack.c.h.b16 %v1455
    %v2560 = vunpack.c.l.b16 %v1456
    %v2561 = vunpack.c.h.b16 %v1456
    %v2562 = vunpack.c.l.b16 %v1457
    %v2563 = vunpack.c.h.b16 %v1457
    %v2564 = vunpack.c.l.b16 %v1458
    %v2565 = vunpack.c.h.b16 %v1458
    %v2566 = vunpack.c.l.b16 %v1459
    %v2567 = vunpack.c.h.b16 %v1459
    %v2568 = vunpack.c.l.b16 %v1460
    %v2569 = vunpack.c.h.b16 %v1460
    %v2570 = vunpack.c.l.b16 %v1461
    %v2571 = vunpack.c.h.b16 %v1461
    %v2572 = vunpack.c.l.b16 %v1462
    %v2573 = vunpack.c.h.b16 %v1462
    %v2574 = vunpack.c.l.b16 %v1463
    %v2575 = vunpack.c.h.b16 %v1463
    %v2576 = vunpack.c.l.b16 %v1464
    %v2577 = vunpack.c.h.b16 %v1464
    %v2578 = vunpack.c.l.b16 %v1465
    %v2579 = vunpack.c.h.b16 %v1465
    %v2580 = vunpack.c.l.b16 %v1466
    %v2581 = vunpack.c.h.b16 %v1466
    %v2582 = vunpack.c.l.b16 %v1467
    %v2583 = vunpack.c.h.b16 %v1467
    %v2584 = vunpack.c.l.b16 %v1468
    %v2585 = vunpack.c.h.b16 %v1468
    %v2586 = vunpack.c.l.b16 %v1469
    %v2587 = vunpack.c.h.b16 %v1469
    %v2588 = vunpack.c.l.b16 %v1470
    %v2589 = vunpack.c.h.b16 %v1470
    %v2590 = vunpack.c.l.b16 %v1471
    %v2591 = vunpack.c.h.b16 %v1471
    %v2592 = vunpack.c.l.b16 %v1472
    %v2593 = vunpack.c.h.b16 %v1472
    %v2594 = vunpack.c.l.b16 %v1473
    %v2595 = vunpack.c.h.b16 %v1473
    %v2596 = vunpack.c.l.b16 %v1474
    %v2597 = vunpack.c.h.b16 %v1474
    %v2598 = vunpack.c.l.b16 %v1475
    %v2599 = vunpack.c.h.b16 %v1475
    %v2600 = vunpack.c.l.b16 %v1476
    %v2601 = vunpack.c.h.b16 %v1476
    %v2602 = vunpack.c.l.b16 %v1477
    %v2603 = vunpack.c.h.b16 %v1477
    %v2604 = vunpack.c.l.b16 %v1478
    %v2605 = vunpack.c.h.b16 %v1478
    %v2606 = vunpack.c.l.b16 %v1479
    %v2607 = vunpack.c.h.b16 %v1479
    %v2608 = vunpack.c.l.b16 %v1480
    %v2609 = vunpack.c.h.b16 %v1480
    %v2610 = vunpack.c.l.b16 %v1481
    %v2611 = vunpack.c.h.b16 %v1481
    %v2612 = vunpack.c.l.b16 %v1482
    %v2613 = vunpack.c.h.b16 %v1482
    %v2614 = vunpack.c.l.b16 %v1483
    %v2615 = vunpack.c.h.b16 %v1483
    %v2616 = vunpack.c.l.b16 %v1484
    %v2617 = vunpack.c.h.b16 %v1484
    %v2618 = vunpack.c.l.b16 %v1485
    %v2619 = vunpack.c.h.b16 %v1485
    %v2620 = vunpack.c.l.b16 %v1486
    %v2621 = vunpack.c.h.b16 %v1486
    %v2622 = vunpack.c.l.b16 %v1487
    %v2623 = vunpack.c.h.b16 %v1487
    %v2624 = vunpack.c.l.b16 %v1488
    %v2625 = vunpack.c.h.b16 %v1488
    %v2626 = vunpack.c.l.b16 %v1489
    %v2627 = vunpack.c.h.b16 %v1489
    %v2628 = vunpack.c.l.b16 %v1490
    %v2629 = vunpack.c.h.b16 %v1490
    %v2630 = vunpack.c.l.b16 %v1491
    %v2631 = vunpack.c.h.b16 %v1491
    %v2632 = vunpack.c.l.b16 %v1492
    %v2633 = vunpack.c.h.b16 %v1492
    %v2634 = vunpack.c.l.b16 %v1493
    %v2635 = vunpack.c.h.b16 %v1493
    %v2636 = vunpack.c.l.b16 %v1494
    %v2637 = vunpack.c.h.b16 %v1494
    %v2638 = vunpack.c.l.b16 %v1495
    %v2639 = vunpack.c.h.b16 %v1495
    %v2640 = vunpack.c.l.b16 %v1496
    %v2641 = vunpack.c.h.b16 %v1496
    %v2642 = vunpack.c.l.b16 %v1497
    %v2643 = vunpack.c.h.b16 %v1497
    %v2644 = vunpack.c.l.b16 %v1498
    %v2645 = vunpack.c.h.b16 %v1498
    %v2646 = vunpack.c.l.b16 %v1499
    %v2647 = vunpack.c.h.b16 %v1499
    %v2648 = vunpack.c.l.b16 %v1500
    %v2649 = vunpack.c.h.b16 %v1500
    %v2650 = vunpack.c.l.b16 %v1501
    %v2651 = vunpack.c.h.b16 %v1501
    %v2652 = vunpack.c.l.b16 %v1502
    %v2653 = vunpack.c.h.b16 %v1502
    %v2654 = vunpack.c.l.b16 %v1503
    %v2655 = vunpack.c.h.b16 %v1503
    %v2656 = vunpack.c.l.b16 %v1504
    %v2657 = vunpack.c.h.b16 %v1504
    %v2658 = vunpack.c.l.b16 %v1505
    %v2659 = vunpack.c.h.b16 %v1505
    %v2660 = vunpack.c.l.b16 %v1506
    %v2661 = vunpack.c.h.b16 %v1506
    %v2662 = vunpack.c.l.b16 %v1507
    %v2663 = vunpack.c.h.b16 %v1507
    %v2664 = vunpack.c.l.b16 %v1508
    %v2665 = vunpack.c.h.b16 %v1508
    %v2666 = vunpack.c.l.b16 %v1509
    %v2667 = vunpack.c.h.b16 %v1509
    %v2668 = vunpack.c.l.b16 %v1510
    %v2669 = vunpack.c.h.b16 %v1510
    %v2670 = vunpack.c.l.b16 %v1511
    %v2671 = vunpack.c.h.b16 %v1511
    %v2672 = vunpack.c.l.b16 %v1512
    %v2673 = vunpack.c.h.b16 %v1512
    %v2674 = vunpack.c.l.b16 %v1513
    %v2675 = vunpack.c.h.b16 %v1513
    %v2676 = vunpack.c.l.b16 %v1514
    %v2677 = vunpack.c.h.b16 %v1514
    %v2678 = vunpack.c.l.b16 %v1515
    %v2679 = vunpack.c.h.b16 %v1515
    %v2680 = vunpack.c.l.b16 %v1516
    %v2681 = vunpack.c.h.b16 %v1516
    %v2682 = vunpack.c.l.b16 %v1517
    %v2683 = vunpack.c.h.b16 %v1517
    %v2684 = vunpack.c.l.b16 %v1518
    %v2685 = vunpack.c.h.b16 %v1518
    %v2686 = vunpack.c.l.b16 %v1519
    %v2687 = vunpack.c.h.b16 %v1519
    %v2688 = vunpack.c.l.b16 %v1520
    %v2689 = vunpack.c.h.b16 %v1520
    %v2690 = vunpack.c.l.b16 %v1521
    %v2691 = vunpack.c.h.b16 %v1521
    %v2692 = vunpack.c.l.b16 %v1522
    %v2693 = vunpack.c.h.b16 %v1522
    %v2694 = vunpack.c.l.b16 %v1523
    %v2695 = vunpack.c.h.b16 %v1523
    %v2696 = vunpack.c.l.b16 %v1524
    %v2697 = vunpack.c.h.b16 %v1524
    %v2698 = vunpack.c.l.b16 %v1525
    %v2699 = vunpack.c.h.b16 %v1525
    %v2700 = vunpack.c.l.b16 %v1526
    %v2701 = vunpack.c.h.b16 %v1526
    %v2702 = vunpack.c.l.b16 %v1527
    %v2703 = vunpack.c.h.b16 %v1527
    %v2704 = vunpack.c.l.b16 %v1528
    %v2705 = vunpack.c.h.b16 %v1528
    %v2706 = vunpack.c.l.b16 %v1529
    %v2707 = vunpack.c.h.b16 %v1529
    %v2708 = vunpack.c.l.b16 %v1530
    %v2709 = vunpack.c.h.b16 %v1530
    %v2710 = vunpack.c.l.b16 %v1531
    %v2711 = vunpack.c.h.b16 %v1531
    %v2712 = vunpack.c.l.b16 %v1532
    %v2713 = vunpack.c.h.b16 %v1532
    %v2714 = vunpack.c.l.b16 %v1533
    %v2715 = vunpack.c.h.b16 %v1533
    %v2716 = vunpack.c.l.b16 %v1534
    %v2717 = vunpack.c.h.b16 %v1534
    %v2718 = vunpack.c.l.b16 %v1535
    %v2719 = vunpack.c.h.b16 %v1535
    %v2720 = vunpack.c.l.b16 %v1536
    %v2721 = vunpack.c.h.b16 %v1536
    %v2722 = vunpack.c.l.b16 %v1537
    %v2723 = vunpack.c.h.b16 %v1537
    %v2724 = vunpack.c.l.b16 %v1538
    %v2725 = vunpack.c.h.b16 %v1538
    %v2726 = vunpack.c.l.b16 %v1539
    %v2727 = vunpack.c.h.b16 %v1539
    %v2728 = vunpack.c.l.b16 %v1540
    %v2729 = vunpack.c.h.b16 %v1540
    %v2730 = vunpack.c.l.b16 %v1541
    %v2731 = vunpack.c.h.b16 %v1541
    %v2732 = vunpack.c.l.b16 %v1542
    %v2733 = vunpack.c.h.b16 %v1542
    %v2734 = vunpack.c.l.b16 %v1543
    %v2735 = vunpack.c.h.b16 %v1543
    %v2736 = vunpack.c.l.b16 %v1544
    %v2737 = vunpack.c.h.b16 %v1544
    %v2738 = vunpack.c.l.b16 %v1545
    %v2739 = vunpack.c.h.b16 %v1545
    %v2740 = vunpack.c.l.b16 %v1546
    %v2741 = vunpack.c.h.b16 %v1546
    %v2742 = vunpack.c.l.b16 %v1547
    %v2743 = vunpack.c.h.b16 %v1547
    %v2744 = vunpack.c.l.b16 %v1548
    %v2745 = vunpack.c.h.b16 %v1548
    %v2746 = vunpack.c.l.b16 %v1549
    %v2747 = vunpack.c.h.b16 %v1549
    %v2748 = vunpack.c.l.b16 %v1550
    %v2749 = vunpack.c.h.b16 %v1550
    %v2750 = vunpack.c.l.b16 %v1551
    %v2751 = vunpack.c.h.b16 %v1551
    %v2752 = vunpack.c.l.b16 %v1552
    %v2753 = vunpack.c.h.b16 %v1552
    %v2754 = vunpack.c.l.b16 %v1553
    %v2755 = vunpack.c.h.b16 %v1553
    %v2756 = vunpack.c.l.b16 %v1554
    %v2757 = vunpack.c.h.b16 %v1554
    %v2758 = vunpack.c.l.b16 %v1555
    %v2759 = vunpack.c.h.b16 %v1555
    %v2760 = vunpack.c.l.b16 %v1556
    %v2761 = vunpack.c.h.b16 %v1556
    %v2762 = vunpack.c.l.b16 %v1557
    %v2763 = vunpack.c.h.b16 %v1557
    %v2764 = vunpack.c.l.b16 %v1558
    %v2765 = vunpack.c.h.b16 %v1558
    %v2766 = vunpack.c.l.b16 %v1559
    %v2767 = vunpack.c.h.b16 %v1559
    %v2768 = vunpack.c.l.b16 %v1560
    %v2769 = vunpack.c.h.b16 %v1560
    %v2770 = vunpack.c.l.b16 %v1561
    %v2771 = vunpack.c.h.b16 %v1561
    %v2772 = vunpack.c.l.b16 %v1562
    %v2773 = vunpack.c.h.b16 %v1562
    %v2774 = vunpack.c.l.b16 %v1563
    %v2775 = vunpack.c.h.b16 %v1563
    %v2776 = vunpack.c.l.b16 %v1564
    %v2777 = vunpack.c.h.b16 %v1564
    %v2778 = vunpack.c.l.b16 %v1565
    %v2779 = vunpack.c.h.b16 %v1565
    %v2780 = vunpack.c.l.b16 %v1566
    %v2781 = vunpack.c.h.b16 %v1566
    %v2782 = vunpack.c.l.b16 %v1567
    %v2783 = vunpack.c.h.b16 %v1567
    %v2784 = vunpack.c.l.b16 %v1568
    %v2785 = vunpack.c.h.b16 %v1568
    %v2786 = vunpack.c.l.b16 %v1569
    %v2787 = vunpack.c.h.b16 %v1569
    %v2788 = vunpack.c.l.b16 %v1570
    %v2789 = vunpack.c.h.b16 %v1570
    %v2790 = vunpack.c.l.b16 %v1571
    %v2791 = vunpack.c.h.b16 %v1571
    %v2792 = vunpack.c.l.b16 %v1572
    %v2793 = vunpack.c.h.b16 %v1572
    %v2794 = vunpack.c.l.b16 %v1573
    %v2795 = vunpack.c.h.b16 %v1573
    %v2796 = vunpack.c.l.b16 %v1574
    %v2797 = vunpack.c.h.b16 %v1574
    %v2798 = vunpack.c.l.b16 %v1575
    %v2799 = vunpack.c.h.b16 %v1575
    %v2800 = vunpack.c.l.b16 %v1576
    %v2801 = vunpack.c.h.b16 %v1576
    %v2802 = vunpack.c.l.b16 %v1577
    %v2803 = vunpack.c.h.b16 %v1577
    %v2804 = vunpack.c.l.b16 %v1578
    %v2805 = vunpack.c.h.b16 %v1578
    %v2806 = vunpack.c.l.b16 %v1579
    %v2807 = vunpack.c.h.b16 %v1579
    %v2808 = vunpack.c.l.b16 %v1580
    %v2809 = vunpack.c.h.b16 %v1580
    %v2810 = vunpack.c.l.b16 %v1581
    %v2811 = vunpack.c.h.b16 %v1581
    %v2812 = vunpack.c.l.b16 %v1582
    %v2813 = vunpack.c.h.b16 %v1582
    %v2814 = vunpack.c.l.b16 %v1583
    %v2815 = vunpack.c.h.b16 %v1583
    %v2816 = vunpack.c.l.b16 %v1584
    %v2817 = vunpack.c.h.b16 %v1584
    %v2818 = vunpack.c.l.b16 %v1585
    %v2819 = vunpack.c.h.b16 %v1585
    %v2820 = vunpack.c.l.b16 %v1586
    %v2821 = vunpack.c.h.b16 %v1586
    %v2822 = vunpack.c.l.b16 %v1587
    %v2823 = vunpack.c.h.b16 %v1587
    %v2824 = vunpack.c.l.b16 %v1588
    %v2825 = vunpack.c.h.b16 %v1588
    %v2826 = vunpack.c.l.b16 %v1589
    %v2827 = vunpack.c.h.b16 %v1589
    %v2828 = vunpack.c.l.b16 %v1590
    %v2829 = vunpack.c.h.b16 %v1590
    %v2830 = vunpack.c.l.b16 %v1591
    %v2831 = vunpack.c.h.b16 %v1591
    %v2832 = vunpack.c.l.b16 %v1592
    %v2833 = vunpack.c.h.b16 %v1592
    %v2834 = vunpack.c.l.b16 %v1593
    %v2835 = vunpack.c.h.b16 %v1593
    %v2836 = vunpack.c.l.b16 %v1594
    %v2837 = vunpack.c.h.b16 %v1594
    %v2838 = vunpack.c.l.b16 %v1595
    %v2839 = vunpack.c.h.b16 %v1595
    %v2840 = vunpack.c.l.b16 %v1596
    %v2841 = vunpack.c.h.b16 %v1596
    %v2842 = vunpack.c.l.b16 %v1597
    %v2843 = vunpack.c.h.b16 %v1597
    %v2844 = vunpack.c.l.b16 %v1598
    %v2845 = vunpack.c.h.b16 %v1598
    %v2846 = vunpack.c.l.b16 %v1599
    %v2847 = vunpack.c.h.b16 %v1599
    %v2848 = vunpack.c.l.b16 %v1600
    %v2849 = vunpack.c.h.b16 %v1600
    %v2850 = vunpack.c.l.b16 %v1601
    %v2851 = vunpack.c.h.b16 %v1601
    %v2852 = vunpack.c.l.b16 %v1602
    %v2853 = vunpack.c.h.b16 %v1602
    %v2854 = vunpack.c.l.b16 %v1603
    %v2855 = vunpack.c.h.b16 %v1603
    %v2856 = vunpack.c.l.b16 %v1604
    %v2857 = vunpack.c.h.b16 %v1604
    %v2858 = vunpack.c.l.b16 %v1605
    %v2859 = vunpack.c.h.b16 %v1605
    %v2860 = vunpack.c.l.b16 %v1606
    %v2861 = vunpack.c.h.b16 %v1606
    %v2862 = vunpack.c.l.b16 %v1607
    %v2863 = vunpack.c.h.b16 %v1607
    %v2864 = vunpack.c.l.b16 %v1608
    %v2865 = vunpack.c.h.b16 %v1608
    %v2866 = vunpack.c.l.b16 %v1609
    %v2867 = vunpack.c.h.b16 %v1609
    %v2868 = vunpack.c.l.b16 %v1610
    %v2869 = vunpack.c.h.b16 %v1610
    %v2870 = vunpack.c.l.b16 %v1611
    %v2871 = vunpack.c.h.b16 %v1611
    %v2872 = vunpack.c.l.b16 %v1612
    %v2873 = vunpack.c.h.b16 %v1612
    %v2874 = vunpack.c.l.b16 %v1613
    %v2875 = vunpack.c.h.b16 %v1613
    %v2876 = vunpack.c.l.b16 %v1614
    %v2877 = vunpack.c.h.b16 %v1614
    %v2878 = vunpack.c.l.b16 %v1615
    %v2879 = vunpack.c.h.b16 %v1615
    %v2880 = vunpack.c.l.b16 %v1616
    %v2881 = vunpack.c.h.b16 %v1616
    %v2882 = vunpack.c.l.b16 %v1617
    %v2883 = vunpack.c.h.b16 %v1617
    %v2884 = vunpack.c.l.b16 %v1618
    %v2885 = vunpack.c.h.b16 %v1618
    %v2886 = vunpack.c.l.b16 %v1619
    %v2887 = vunpack.c.h.b16 %v1619
    %v2888 = vunpack.c.l.b16 %v1620
    %v2889 = vunpack.c.h.b16 %v1620
    %v2890 = vunpack.c.l.b16 %v1621
    %v2891 = vunpack.c.h.b16 %v1621
    %v2892 = vunpack.c.l.b16 %v1622
    %v2893 = vunpack.c.h.b16 %v1622
    %v2894 = vunpack.c.l.b16 %v1623
    %v2895 = vunpack.c.h.b16 %v1623
    %v2896 = vunpack.c.l.b16 %v1624
    %v2897 = vunpack.c.h.b16 %v1624
    %v2898 = vunpack.c.l.b16 %v1625
    %v2899 = vunpack.c.h.b16 %v1625
    %v2900 = vunpack.c.l.b16 %v1626
    %v2901 = vunpack.c.h.b16 %v1626
    %v2902 = vunpack.c.l.b16 %v1627
    %v2903 = vunpack.c.h.b16 %v1627
    %v2904 = vunpack.c.l.b16 %v1628
    %v2905 = vunpack.c.h.b16 %v1628
    %v2906 = vunpack.c.l.b16 %v1629
    %v2907 = vunpack.c.h.b16 %v1629
    %v2908 = vunpack.c.l.b16 %v1630
    %v2909 = vunpack.c.h.b16 %v1630
    %v2910 = vunpack.c.l.b16 %v1631
    %v2911 = vunpack.c.h.b16 %v1631
    %v2912 = vunpack.c.l.b16 %v1632
    %v2913 = vunpack.c.h.b16 %v1632
    %v2914 = vunpack.c.l.b16 %v1633
    %v2915 = vunpack.c.h.b16 %v1633
    %v2916 = vunpack.c.l.b16 %v1634
    %v2917 = vunpack.c.h.b16 %v1634
    %v2918 = vunpack.c.l.b16 %v1635
    %v2919 = vunpack.c.h.b16 %v1635
    %v2920 = vunpack.c.l.b16 %v1636
    %v2921 = vunpack.c.h.b16 %v1636
    %v2922 = vunpack.c.l.b16 %v1637
    %v2923 = vunpack.c.h.b16 %v1637
    %v2924 = vunpack.c.l.b16 %v1638
    %v2925 = vunpack.c.h.b16 %v1638
    %v2926 = vunpack.c.l.b16 %v1639
    %v2927 = vunpack.c.h.b16 %v1639
    %v2928 = vunpack.c.l.b16 %v1640
    %v2929 = vunpack.c.h.b16 %v1640
    %v2930 = vunpack.c.l.b16 %v1641
    %v2931 = vunpack.c.h.b16 %v1641
    %v2932 = vunpack.c.l.b16 %v1642
    %v2933 = vunpack.c.h.b16 %v1642
    %v2934 = vunpack.c.l.b16 %v1643
    %v2935 = vunpack.c.h.b16 %v1643
    %v2936 = vunpack.c.l.b16 %v1644
    %v2937 = vunpack.c.h.b16 %v1644
    %v2938 = vunpack.c.l.b16 %v1645
    %v2939 = vunpack.c.h.b16 %v1645
    %v2940 = vunpack.c.l.b16 %v1646
    %v2941 = vunpack.c.h.b16 %v1646
    %v2942 = vunpack.c.l.b16 %v1647
    %v2943 = vunpack.c.h.b16 %v1647
    %v2944 = vunpack.c.l.b16 %v1648
    %v2945 = vunpack.c.h.b16 %v1648
    %v2946 = vunpack.c.l.b16 %v1649
    %v2947 = vunpack.c.h.b16 %v1649
    %v2948 = vunpack.c.l.b16 %v1650
    %v2949 = vunpack.c.h.b16 %v1650
    %v2950 = vunpack.c.l.b16 %v1651
    %v2951 = vunpack.c.h.b16 %v1651
    %v2952 = vunpack.c.l.b16 %v1652
    %v2953 = vunpack.c.h.b16 %v1652
    %v2954 = vunpack.c.l.b16 %v1653
    %v2955 = vunpack.c.h.b16 %v1653
    %v2956 = vunpack.c.l.b16 %v1654
    %v2957 = vunpack.c.h.b16 %v1654
    %v2958 = vunpack.c.l.b16 %v1655
    %v2959 = vunpack.c.h.b16 %v1655
    %v2960 = vunpack.c.l.b16 %v1656
    %v2961 = vunpack.c.h.b16 %v1656
    %v2962 = vunpack.c.l.b16 %v1657
    %v2963 = vunpack.c.h.b16 %v1657
    %v2964 = vunpack.c.l.b16 %v1658
    %v2965 = vunpack.c.h.b16 %v1658
    %v2966 = vunpack.c.l.b16 %v1659
    %v2967 = vunpack.c.h.b16 %v1659
    %v2968 = vunpack.c.l.b16 %v1660
    %v2969 = vunpack.c.h.b16 %v1660
    %v2970 = vunpack.c.l.b16 %v1661
    %v2971 = vunpack.c.h.b16 %v1661
    %v2972 = vunpack.c.l.b16 %v1662
    %v2973 = vunpack.c.h.b16 %v1662
    %v2974 = vunpack.c.l.b16 %v1663
    %v2975 = vunpack.c.h.b16 %v1663
    %v2976 = vunpack.c.l.b16 %v1664
    %v2977 = vunpack.c.h.b16 %v1664
    %v2978 = vunpack.c.l.b16 %v1665
    %v2979 = vunpack.c.h.b16 %v1665
    %v2980 = vunpack.c.l.b16 %v1666
    %v2981 = vunpack.c.h.b16 %v1666
    %v2982 = vunpack.c.l.b16 %v1667
    %v2983 = vunpack.c.h.b16 %v1667
    %v2984 = vunpack.c.l.b16 %v1668
    %v2985 = vunpack.c.h.b16 %v1668
    %v2986 = vunpack.c.l.b16 %v1669
    %v2987 = vunpack.c.h.b16 %v1669
    %v2988 = vunpack.c.l.b16 %v1670
    %v2989 = vunpack.c.h.b16 %v1670
    %v2990 = vunpack.c.l.b16 %v1671
    %v2991 = vunpack.c.h.b16 %v1671
    %v2992 = vunpack.c.l.b16 %v1672
    %v2993 = vunpack.c.h.b16 %v1672
    %v2994 = vunpack.c.l.b16 %v1673
    %v2995 = vunpack.c.h.b16 %v1673
    %v2996 = vunpack.c.l.b16 %v1674
    %v2997 = vunpack.c.h.b16 %v1674
    %v2998 = vunpack.c.l.b16 %v1675
    %v2999 = vunpack.c.h.b16 %v1675
    %v3000 = vunpack.c.l.b16 %v1676
    %v3001 = vunpack.c.h.b16 %v1676
    %v3002 = vunpack.c.l.b16 %v1677
    %v3003 = vunpack.c.h.b16 %v1677
    %v3004 = vunpack.c.l.b16 %v1678
    %v3005 = vunpack.c.h.b16 %v1678
    %v3006 = vunpack.c.l.b16 %v1679
    %v3007 = vunpack.c.h.b16 %v1679
    %v3008 = vunpack.c.l.b16 %v1680
    %v3009 = vunpack.c.h.b16 %v1680
    %v3010 = vunpack.c.l.b16 %v1681
    %v3011 = vunpack.c.h.b16 %v1681
    %v3012 = vunpack.c.l.b16 %v1682
    %v3013 = vunpack.c.h.b16 %v1682
    %v3014 = vunpack.c.l.b16 %v1683
    %v3015 = vunpack.c.h.b16 %v1683
    %v3016 = vunpack.c.l.b16 %v1684
    %v3017 = vunpack.c.h.b16 %v1684
    %v3018 = vunpack.c.l.b16 %v1685
    %v3019 = vunpack.c.h.b16 %v1685
    %v3020 = vunpack.c.l.b16 %v1686
    %v3021 = vunpack.c.h.b16 %v1686
    %v3022 = vunpack.c.l.b16 %v1687
    %v3023 = vunpack.c.h.b16 %v1687
    %v3024 = vunpack.c.l.b16 %v1688
    %v3025 = vunpack.c.h.b16 %v1688
    %v3026 = vunpack.c.l.b16 %v1689
    %v3027 = vunpack.c.h.b16 %v1689
    %v3028 = vunpack.c.l.b16 %v1690
    %v3029 = vunpack.c.h.b16 %v1690
    %v3030 = vunpack.c.l.b16 %v1691
    %v3031 = vunpack.c.h.b16 %v1691
    %v3032 = vunpack.c.l.b16 %v1692
    %v3033 = vunpack.c.h.b16 %v1692
    %v3034 = vunpack.c.l.b16 %v1693
    %v3035 = vunpack.c.h.b16 %v1693
    %v3036 = vunpack.c.l.b16 %v1694
    %v3037 = vunpack.c.h.b16 %v1694
    %v3038 = vunpack.c.l.b16 %v1695
    %v3039 = vunpack.c.h.b16 %v1695
    %v3040 = vunpack.c.l.b16 %v1696
    %v3041 = vunpack.c.h.b16 %v1696
    %v3042 = vunpack.c.l.b16 %v1697
    %v3043 = vunpack.c.h.b16 %v1697
    %v3044 = vunpack.c.l.b16 %v1698
    %v3045 = vunpack.c.h.b16 %v1698
    %v3046 = vunpack.c.l.b16 %v1699
    %v3047 = vunpack.c.h.b16 %v1699
    %v3048 = vunpack.c.l.b16 %v1700
    %v3049 = vunpack.c.h.b16 %v1700
    %v3050 = vunpack.c.l.b16 %v1701
    %v3051 = vunpack.c.h.b16 %v1701
    %v3052 = vunpack.c.l.b16 %v1702
    %v3053 = vunpack.c.h.b16 %v1702
    %v3054 = vunpack.c.l.b16 %v1703
    %v3055 = vunpack.c.h.b16 %v1703
    %v3056 = vunpack.c.l.b16 %v1704
    %v3057 = vunpack.c.h.b16 %v1704
    %v3058 = vunpack.c.l.b16 %v1705
    %v3059 = vunpack.c.h.b16 %v1705
    %v3060 = vunpack.c.l.b16 %v1706
    %v3061 = vunpack.c.h.b16 %v1706
    %v3062 = vunpack.c.l.b16 %v1707
    %v3063 = vunpack.c.h.b16 %v1707
    %v3064 = vunpack.c.l.b16 %v1708
    %v3065 = vunpack.c.h.b16 %v1708
    %v3066 = vunpack.c.l.b16 %v1709
    %v3067 = vunpack.c.h.b16 %v1709
    %v3068 = vunpack.c.l.b16 %v1710
    %v3069 = vunpack.c.h.b16 %v1710
    %v3070 = vunpack.c.l.b16 %v1711
    %v3071 = vunpack.c.h.b16 %v1711
    %v3072 = vunpack.c.l.b16 %v1712
    %v3073 = vunpack.c.h.b16 %v1712
    %v3074 = vunpack.c.l.b16 %v1713
    %v3075 = vunpack.c.h.b16 %v1713
    %v3076 = vunpack.c.l.b16 %v1714
    %v3077 = vunpack.c.h.b16 %v1714
    %v3078 = vunpack.c.l.b16 %v1715
    %v3079 = vunpack.c.h.b16 %v1715
    %v3080 = vunpack.c.l.b16 %v1716
    %v3081 = vunpack.c.h.b16 %v1716
    %v3082 = vunpack.c.l.b16 %v1717
    %v3083 = vunpack.c.h.b16 %v1717
    %v3084 = vunpack.c.l.b16 %v1718
    %v3085 = vunpack.c.h.b16 %v1718
    %v3086 = vunpack.c.l.b16 %v1719
    %v3087 = vunpack.c.h.b16 %v1719
    %v3088 = vunpack.c.l.b16 %v1720
    %v3089 = vunpack.c.h.b16 %v1720
    %v3090 = vunpack.c.l.b16 %v1721
    %v3091 = vunpack.c.h.b16 %v1721
    %v3092 = vunpack.c.l.b16 %v1722
    %v3093 = vunpack.c.h.b16 %v1722
    %v3094 = vunpack.c.l.b16 %v1723
    %v3095 = vunpack.c.h.b16 %v1723
    %v3096 = vunpack.c.l.b16 %v1724
    %v3097 = vunpack.c.h.b16 %v1724
    %v3098 = vunpack.c.l.b16 %v1725
    %v3099 = vunpack.c.h.b16 %v1725
    %v3100 = vunpack.c.l.b16 %v1726
    %v3101 = vunpack.c.h.b16 %v1726
    %v3102 = vunpack.c.l.b16 %v1727
    %v3103 = vunpack.c.h.b16 %v1727
    %v3104 = vunpack.c.l.b16 %v1728
    %v3105 = vunpack.c.h.b16 %v1728
    %v3106 = vunpack.c.l.b16 %v1729
    %v3107 = vunpack.c.h.b16 %v1729
    %v3108 = vunpack.c.l.b16 %v1730
    %v3109 = vunpack.c.h.b16 %v1730
    %v3110 = vunpack.c.l.b16 %v1731
    %v3111 = vunpack.c.h.b16 %v1731
    %v3112 = vunpack.c.l.b16 %v1732
    %v3113 = vunpack.c.h.b16 %v1732
    %v3114 = vunpack.c.l.b16 %v1733
    %v3115 = vunpack.c.h.b16 %v1733
    %v3116 = vunpack.c.l.b16 %v1734
    %v3117 = vunpack.c.h.b16 %v1734
    %v3118 = vunpack.c.l.b16 %v1735
    %v3119 = vunpack.c.h.b16 %v1735
    %v3120 = vunpack.c.l.b16 %v1736
    %v3121 = vunpack.c.h.b16 %v1736
    %v3122 = vunpack.c.l.b16 %v1737
    %v3123 = vunpack.c.h.b16 %v1737
    %v3124 = vunpack.c.l.b16 %v1738
    %v3125 = vunpack.c.h.b16 %v1738
    %v3126 = vunpack.c.l.b16 %v1739
    %v3127 = vunpack.c.h.b16 %v1739
    %v3128 = vunpack.c.l.b16 %v1740
    %v3129 = vunpack.c.h.b16 %v1740
    %v3130 = vunpack.c.l.b16 %v1741
    %v3131 = vunpack.c.h.b16 %v1741
    %v3132 = vunpack.c.l.b16 %v1742
    %v3133 = vunpack.c.h.b16 %v1742
    %v3134 = vunpack.c.l.b16 %v1743
    %v3135 = vunpack.c.h.b16 %v1743
    %v3136 = vunpack.c.l.b16 %v1744
    %v3137 = vunpack.c.h.b16 %v1744
    %v3138 = vunpack.c.l.b16 %v1745
    %v3139 = vunpack.c.h.b16 %v1745
    %v3140 = vunpack.c.l.b16 %v1746
    %v3141 = vunpack.c.h.b16 %v1746
    %v3142 = vunpack.c.l.b16 %v1747
    %v3143 = vunpack.c.h.b16 %v1747
    %v3144 = vunpack.c.l.b16 %v1748
    %v3145 = vunpack.c.h.b16 %v1748
    %v3146 = vunpack.c.l.b16 %v1749
    %v3147 = vunpack.c.h.b16 %v1749
    %v3148 = vunpack.c.l.b16 %v1750
    %v3149 = vunpack.c.h.b16 %v1750
    %v3150 = vunpack.c.l.b16 %v1751
    %v3151 = vunpack.c.h.b16 %v1751
    %v3152 = vunpack.c.l.b16 %v1752
    %v3153 = vunpack.c.h.b16 %v1752
    %v3154 = vunpack.c.l.b16 %v1753
    %v3155 = vunpack.c.h.b16 %v1753
    %v3156 = vunpack.c.l.b16 %v1754
    %v3157 = vunpack.c.h.b16 %v1754
    %v3158 = vunpack.c.l.b16 %v1755
    %v3159 = vunpack.c.h.b16 %v1755
    %v3160 = vunpack.c.l.b16 %v1756
    %v3161 = vunpack.c.h.b16 %v1756
    %v3162 = vunpack.c.l.b16 %v1757
    %v3163 = vunpack.c.h.b16 %v1757
    %v3164 = vunpack.c.l.b16 %v1758
    %v3165 = vunpack.c.h.b16 %v1758
    %v3166 = vunpack.c.l.b16 %v1759
    %v3167 = vunpack.c.h.b16 %v1759
    %v3168 = vunpack.c.l.b16 %v1760
    %v3169 = vunpack.c.h.b16 %v1760
    %v3170 = vunpack.c.l.b16 %v1761
    %v3171 = vunpack.c.h.b16 %v1761
    %v3172 = vunpack.c.l.b16 %v1762
    %v3173 = vunpack.c.h.b16 %v1762
    %v3174 = vunpack.c.l.b16 %v1763
    %v3175 = vunpack.c.h.b16 %v1763
    %v3176 = vunpack.c.l.b16 %v1764
    %v3177 = vunpack.c.h.b16 %v1764
    %v3178 = vunpack.c.l.b16 %v1765
    %v3179 = vunpack.c.h.b16 %v1765
    %v3180 = vunpack.c.l.b16 %v1766
    %v3181 = vunpack.c.h.b16 %v1766
    %v3182 = vunpack.c.l.b16 %v1767
    %v3183 = vunpack.c.h.b16 %v1767
    %v3184 = vunpack.c.l.b16 %v1768
    %v3185 = vunpack.c.h.b16 %v1768
    %v3186 = vunpack.c.l.b16 %v1769
    %v3187 = vunpack.c.h.b16 %v1769
    %v3188 = vunpack.c.l.b16 %v1770
    %v3189 = vunpack.c.h.b16 %v1770
    %v3190 = vunpack.c.l.b16 %v1771
    %v3191 = vunpack.c.h.b16 %v1771
    %v3192 = vunpack.c.l.b16 %v1772
    %v3193 = vunpack.c.h.b16 %v1772
    %v3194 = vunpack.c.l.b16 %v1773
    %v3195 = vunpack.c.h.b16 %v1773
    %v3196 = vunpack.c.l.b16 %v1774
    %v3197 = vunpack.c.h.b16 %v1774
    %v3198 = vunpack.c.l.b16 %v1775
    %v3199 = vunpack.c.h.b16 %v1775
    %v3200 = vunpack.c.l.b16 %v1776
    %v3201 = vunpack.c.h.b16 %v1776
    %v3202 = vunpack.c.l.b16 %v1777
    %v3203 = vunpack.c.h.b16 %v1777
    %v3204 = vunpack.c.l.b16 %v1778
    %v3205 = vunpack.c.h.b16 %v1778
    %v3206 = vunpack.c.l.b16 %v1779
    %v3207 = vunpack.c.h.b16 %v1779
    %v3208 = vunpack.c.l.b16 %v1780
    %v3209 = vunpack.c.h.b16 %v1780
    %v3210 = vunpack.c.l.b16 %v1781
    %v3211 = vunpack.c.h.b16 %v1781
    %v3212 = vunpack.c.l.b16 %v1782
    %v3213 = vunpack.c.h.b16 %v1782
    %v3214 = vunpack.c.l.b16 %v1783
    %v3215 = vunpack.c.h.b16 %v1783
    %v3216 = vunpack.c.l.b16 %v1784
    %v3217 = vunpack.c.h.b16 %v1784
    %v3218 = vunpack.c.l.b16 %v1785
    %v3219 = vunpack.c.h.b16 %v1785
    %v3220 = vunpack.c.l.b16 %v1786
    %v3221 = vunpack.c.h.b16 %v1786
    %v3222 = vunpack.c.l.b16 %v1787
    %v3223 = vunpack.c.h.b16 %v1787
    %v3224 = vunpack.c.l.b16 %v1788
    %v3225 = vunpack.c.h.b16 %v1788
    %v3226 = vunpack.c.l.b16 %v1789
    %v3227 = vunpack.c.h.b16 %v1789
    %v3228 = vunpack.c.l.b16 %v1790
    %v3229 = vunpack.c.h.b16 %v1790
    %v3230 = vunpack.c.l.b16 %v1791
    %v3231 = vunpack.c.h.b16 %v1791
    %v3232 = vunpack.c.l.b16 %v1792
    %v3233 = vunpack.c.h.b16 %v1792
    %v3234 = vunpack.c.l.b16 %v1793
    %v3235 = vunpack.c.h.b16 %v1793
    %v3236 = vunpack.c.l.b16 %v1794
    %v3237 = vunpack.c.h.b16 %v1794
    %v3238 = vunpack.c.l.b16 %v1795
    %v3239 = vunpack.c.h.b16 %v1795
    %v3240 = vunpack.c.l.b16 %v1796
    %v3241 = vunpack.c.h.b16 %v1796
    %v3242 = vunpack.c.l.b16 %v1797
    %v3243 = vunpack.c.h.b16 %v1797
    %v3244 = vunpack.c.l.b16 %v1798
    %v3245 = vunpack.c.h.b16 %v1798
    %v3246 = vunpack.c.l.b16 %v1799
    %v3247 = vunpack.c.h.b16 %v1799
    %v3248 = vunpack.c.l.b16 %v1800
    %v3249 = vunpack.c.h.b16 %v1800
    %v3250 = vunpack.c.l.b16 %v1801
    %v3251 = vunpack.c.h.b16 %v1801
    %v3252 = vunpack.c.l.b16 %v1802
    %v3253 = vunpack.c.h.b16 %v1802
    %v3254 = vunpack.c.l.b16 %v1803
    %v3255 = vunpack.c.h.b16 %v1803
    %v3256 = vunpack.c.l.b16 %v1804
    %v3257 = vunpack.c.h.b16 %v1804
    %v3258 = vunpack.c.l.b16 %v1805
    %v3259 = vunpack.c.h.b16 %v1805
    %v3260 = vunpack.c.l.b16 %v1806
    %v3261 = vunpack.c.h.b16 %v1806
    %v3262 = vunpack.c.l.b16 %v1807
    %v3263 = vunpack.c.h.b16 %v1807
    %v3264 = vunpack.c.l.b16 %v1808
    %v3265 = vunpack.c.h.b16 %v1808
    %v3266 = vunpack.c.l.b16 %v1809
    %v3267 = vunpack.c.h.b16 %v1809
    %v3268 = vunpack.c.l.b16 %v1810
    %v3269 = vunpack.c.h.b16 %v1810
    %v3270 = vunpack.c.l.b16 %v1811
    %v3271 = vunpack.c.h.b16 %v1811
    %v3272 = vunpack.c.l.b16 %v1812
    %v3273 = vunpack.c.h.b16 %v1812
    %v3274 = vunpack.c.l.b16 %v1813
    %v3275 = vunpack.c.h.b16 %v1813
    %v3276 = vunpack.c.l.b16 %v1814
    %v3277 = vunpack.c.h.b16 %v1814
    %v3278 = vunpack.c.l.b16 %v1815
    %v3279 = vunpack.c.h.b16 %v1815
    %v3280 = vunpack.c.l.b16 %v1816
    %v3281 = vunpack.c.h.b16 %v1816
    %v3282 = vunpack.c.l.b16 %v1817
    %v3283 = vunpack.c.h.b16 %v1817
    %v3284 = vunpack.c.l.b16 %v1818
    %v3285 = vunpack.c.h.b16 %v1818
    %v3286 = vunpack.c.l.b16 %v1819
    %v3287 = vunpack.c.h.b16 %v1819
    %v3288 = vunpack.c.l.b16 %v1820
    %v3289 = vunpack.c.h.b16 %v1820
    %v3290 = vunpack.c.l.b16 %v1821
    %v3291 = vunpack.c.h.b16 %v1821
    %v3292 = vunpack.c.l.b16 %v1822
    %v3293 = vunpack.c.h.b16 %v1822
    %v3294 = vunpack.c.l.b16 %v1823
    %v3295 = vunpack.c.h.b16 %v1823
    %v3296 = vunpack.c.l.b16 %v1824
    %v3297 = vunpack.c.h.b16 %v1824
    %v3298 = vunpack.c.l.b16 %v1825
    %v3299 = vunpack.c.h.b16 %v1825
    %v3300 = vunpack.c.l.b16 %v1826
    %v3301 = vunpack.c.h.b16 %v1826
    %v3302 = vunpack.c.l.b16 %v1827
    %v3303 = vunpack.c.h.b16 %v1827
    %v3304 = vunpack.c.l.b16 %v1828
    %v3305 = vunpack.c.h.b16 %v1828
    %v3306 = vunpack.c.l.b16 %v1829
    %v3307 = vunpack.c.h.b16 %v1829
    %v3308 = vunpack.c.l.b16 %v1830
    %v3309 = vunpack.c.h.b16 %v1830
    %v3310 = vunpack.c.l.b16 %v1831
    %v3311 = vunpack.c.h.b16 %v1831
    %v3312 = vunpack.c.l.b16 %v1832
    %v3313 = vunpack.c.h.b16 %v1832
    %v3314 = vunpack.c.l.b16 %v1833
    %v3315 = vunpack.c.h.b16 %v1833
    %v3316 = vunpack.c.l.b16 %v1834
    %v3317 = vunpack.c.h.b16 %v1834
    %v3318 = vunpack.c.l.b16 %v1835
    %v3319 = vunpack.c.h.b16 %v1835
    %v3320 = vunpack.c.l.b16 %v1836
    %v3321 = vunpack.c.h.b16 %v1836
    %v3322 = vunpack.c.l.b16 %v1837
    %v3323 = vunpack.c.h.b16 %v1837
    %v3324 = vunpack.c.l.b16 %v1838
    %v3325 = vunpack.c.h.b16 %v1838
    %v3326 = vunpack.c.l.b16 %v1839
    %v3327 = vunpack.c.h.b16 %v1839
    %v3328 = vunpack.c.l.b16 %v1840
    %v3329 = vunpack.c.h.b16 %v1840
    %v3330 = vunpack.c.l.b16 %v1841
    %v3331 = vunpack.c.h.b16 %v1841
    %v3332 = vunpack.c.l.b16 %v1842
    %v3333 = vunpack.c.h.b16 %v1842
    %v3334 = vunpack.c.l.b16 %v1843
    %v3335 = vunpack.c.h.b16 %v1843
    %v3336 = vunpack.c.l.b16 %v1844
    %v3337 = vunpack.c.h.b16 %v1844
    %v3338 = vunpack.c.l.b16 %v1845
    %v3339 = vunpack.c.h.b16 %v1845
    %v3340 = vunpack.c.l.b16 %v1846
    %v3341 = vunpack.c.h.b16 %v1846
    %v3342 = vunpack.c.l.b16 %v1847
    %v3343 = vunpack.c.h.b16 %v1847
    %v3344 = vunpack.c.l.b16 %v1848
    %v3345 = vunpack.c.h.b16 %v1848
    %v3346 = vunpack.c.l.b16 %v1849
    %v3347 = vunpack.c.h.b16 %v1849
    %v3348 = vunpack.c.l.b16 %v1850
    %v3349 = vunpack.c.h.b16 %v1850
    %v3350 = vunpack.c.l.b16 %v1851
    %v3351 = vunpack.c.h.b16 %v1851
    %v3352 = vunpack.c.l.b16 %v1852
    %v3353 = vunpack.c.h.b16 %v1852
    %v3354 = vunpack.c.l.b16 %v1853
    %v3355 = vunpack.c.h.b16 %v1853
    %v3356 = vunpack.c.l.b16 %v1854
    %v3357 = vunpack.c.h.b16 %v1854
    %v3358 = vunpack.c.l.b16 %v1855
    %v3359 = vunpack.c.h.b16 %v1855
    %v3360 = vunpack.c.l.b16 %v1856
    %v3361 = vunpack.c.h.b16 %v1856
    %v3362 = vunpack.c.l.b16 %v1857
    %v3363 = vunpack.c.h.b16 %v1857
    %v3364 = vunpack.c.l.b16 %v1858
    %v3365 = vunpack.c.h.b16 %v1858
    %v3366 = vunpack.c.l.b16 %v1859
    %v3367 = vunpack.c.h.b16 %v1859
    %v3368 = vunpack.c.l.b16 %v1860
    %v3369 = vunpack.c.h.b16 %v1860
    %v3370 = vunpack.c.l.b16 %v1861
    %v3371 = vunpack.c.h.b16 %v1861
    %v3372 = vunpack.c.l.b16 %v1862
    %v3373 = vunpack.c.h.b16 %v1862
    %v3374 = vunpack.c.l.b16 %v1863
    %v3375 = vunpack.c.h.b16 %v1863
    %v3376 = vunpack.c.l.b16 %v1864
    %v3377 = vunpack.c.h.b16 %v1864
    %v3378 = vunpack.c.l.b16 %v1865
    %v3379 = vunpack.c.h.b16 %v1865
    %v3380 = vunpack.c.l.b16 %v1866
    %v3381 = vunpack.c.h.b16 %v1866
    %v3382 = vunpack.c.l.b16 %v1867
    %v3383 = vunpack.c.h.b16 %v1867
    %v3384 = vunpack.c.l.b16 %v1868
    %v3385 = vunpack.c.h.b16 %v1868
    %v3386 = vunpack.c.l.b16 %v1869
    %v3387 = vunpack.c.h.b16 %v1869
    %v3388 = vunpack.c.l.b16 %v1870
    %v3389 = vunpack.c.h.b16 %v1870
    %v3390 = vunpack.c.l.b16 %v1871
    %v3391 = vunpack.c.h.b16 %v1871
    %v3392 = vunpack.c.l.b16 %v1872
    %v3393 = vunpack.c.h.b16 %v1872
    %v3394 = vunpack.c.l.b16 %v1873
    %v3395 = vunpack.c.h.b16 %v1873
    %v3396 = vunpack.c.l.b16 %v1874
    %v3397 = vunpack.c.h.b16 %v1874
    %v3398 = vunpack.c.l.b16 %v1875
    %v3399 = vunpack.c.h.b16 %v1875
    %v3400 = vunpack.c.l.b16 %v1876
    %v3401 = vunpack.c.h.b16 %v1876
    %v3402 = vunpack.c.l.b16 %v1877
    %v3403 = vunpack.c.h.b16 %v1877
    %v3404 = vunpack.c.l.b16 %v1878
    %v3405 = vunpack.c.h.b16 %v1878
    %v3406 = vunpack.c.l.b16 %v1879
    %v3407 = vunpack.c.h.b16 %v1879
    %v3408 = vunpack.c.l.b16 %v1880
    %v3409 = vunpack.c.h.b16 %v1880
    %v3410 = vunpack.c.l.b16 %v1881
    %v3411 = vunpack.c.h.b16 %v1881
    %v3412 = vunpack.c.l.b16 %v1882
    %v3413 = vunpack.c.h.b16 %v1882
    %v3414 = vunpack.c.l.b16 %v1883
    %v3415 = vunpack.c.h.b16 %v1883
    %v3416 = vunpack.c.l.b16 %v1884
    %v3417 = vunpack.c.h.b16 %v1884
    %v3418 = vunpack.c.l.b16 %v1885
    %v3419 = vunpack.c.h.b16 %v1885
    %v3420 = vunpack.c.l.b16 %v1886
    %v3421 = vunpack.c.h.b16 %v1886
    %v3422 = vunpack.c.l.b16 %v1887
    %v3423 = vunpack.c.h.b16 %v1887
    %v3424 = vunpack.c.l.b16 %v1888
    %v3425 = vunpack.c.h.b16 %v1888
    %v3426 = vunpack.c.l.b16 %v1889
    %v3427 = vunpack.c.h.b16 %v1889
    %v3428 = vunpack.c.l.b16 %v1890
    %v3429 = vunpack.c.h.b16 %v1890
    %v3430 = vunpack.c.l.b16 %v1891
    %v3431 = vunpack.c.h.b16 %v1891
    %v3432 = vunpack.c.l.b16 %v1892
    %v3433 = vunpack.c.h.b16 %v1892
    %v3434 = vunpack.c.l.b16 %v1893
    %v3435 = vunpack.c.h.b16 %v1893
    %v3436 = vunpack.c.l.b16 %v1894
    %v3437 = vunpack.c.h.b16 %v1894
    %v3438 = vunpack.c.l.b16 %v1895
    %v3439 = vunpack.c.h.b16 %v1895
    %v3440 = vunpack.c.l.b16 %v1896
    %v3441 = vunpack.c.h.b16 %v1896
    %v3442 = vunpack.c.l.b16 %v1897
    %v3443 = vunpack.c.h.b16 %v1897
    %v3444 = vunpack.c.l.b16 %v1898
    %v3445 = vunpack.c.h.b16 %v1898
    %v3446 = vunpack.c.l.b16 %v1899
    %v3447 = vunpack.c.h.b16 %v1899
    %v3448 = vunpack.c.l.b16 %v1900
    %v3449 = vunpack.c.h.b16 %v1900
    %v3450 = vunpack.c.l.b16 %v1901
    %v3451 = vunpack.c.h.b16 %v1901
    %v3452 = vunpack.c.l.b16 %v1902
    %v3453 = vunpack.c.h.b16 %v1902
    %v3454 = vunpack.c.l.b16 %v1903
    %v3455 = vunpack.c.h.b16 %v1903
    %v3456 = vunpack.c.l.b16 %v1904
    %v3457 = vunpack.c.h.b16 %v1904
    %v3458 = vunpack.c.l.b16 %v1905
    %v3459 = vunpack.c.h.b16 %v1905
    %v3460 = vpack.c.b16 %v2444, %v2436
    %v3461 = vpack.c.b16 %v2445, %v2437
    %v3462 = vpack.c.b16 %v2446, %v2438
    %v3463 = vpack.c.b16 %v2447, %v2439
    %v3464 = vpack.c.b16 %v2448, %v2440
    %v3465 = vpack.c.b16 %v2449, %v2441
    %v3466 = vpack.c.b16 %v2450, %v2442
    %v3467 = vpack.c.b16 %v2451, %v2443
    %v3468 = vpack.c.b16 %v2460, %v2452
    %v3469 = vpack.c.b16 %v2461, %v2453
    %v3470 = vpack.c.b16 %v2462, %v2454
    %v3471 = vpack.c.b16 %v2463, %v2455
    %v3472 = vpack.c.b16 %v2464, %v2456
    %v3473 = vpack.c.b16 %v2465, %v2457
    %v3474 = vpack.c.b16 %v2466, %v2458
    %v3475 = vpack.c.b16 %v2467, %v2459
    %v3476 = vpack.c.b16 %v2476, %v2468
    %v3477 = vpack.c.b16 %v2477, %v2469
    %v3478 = vpack.c.b16 %v2478, %v2470
    %v3479 = vpack.c.b16 %v2479, %v2471
    %v3480 = vpack.c.b16 %v2480, %v2472
    %v3481 = vpack.c.b16 %v2481, %v2473
    %v3482 = vpack.c.b16 %v2482, %v2474
    %v3483 = vpack.c.b16 %v2483, %v2475
    %v3484 = vpack.c.b16 %v2492, %v2484
    %v3485 = vpack.c.b16 %v2493, %v2485
    %v3486 = vpack.c.b16 %v2494, %v2486
    %v3487 = vpack.c.b16 %v2495, %v2487
    %v3488 = vpack.c.b16 %v2496, %v2488
    %v3489 = vpack.c.b16 %v2497, %v2489
    %v3490 = vpack.c.b16 %v2498, %v2490
    %v3491 = vpack.c.b16 %v2499, %v2491
    %v3492 = vpack.c.b16 %v2508, %v2500
    %v3493 = vpack.c.b16 %v2509, %v2501
    %v3494 = vpack.c.b16 %v2510, %v2502
    %v3495 = vpack.c.b16 %v2511, %v2503
    %v3496 = vpack.c.b16 %v2512, %v2504
    %v3497 = vpack.c.b16 %v2513, %v2505
    %v3498 = vpack.c.b16 %v2514, %v2506
    %v3499 = vpack.c.b16 %v2515, %v2507
    %v3500 = vpack.c.b16 %v2524, %v2516
    %v3501 = vpack.c.b16 %v2525, %v2517
    %v3502 = vpack.c.b16 %v2526, %v2518
    %v3503 = vpack.c.b16 %v2527, %v2519
    %v3504 = vpack.c.b16 %v2528, %v2520
    %v3505 = vpack.c.b16 %v2529, %v2521
    %v3506 = vpack.c.b16 %v2530, %v2522
    %v3507 = vpack.c.b16 %v2531, %v2523
    %v3508 = vpack.c.b16 %v2540, %v2532
    %v3509 = vpack.c.b16 %v2541, %v2533
    %v3510 = vpack.c.b16 %v2542, %v2534
    %v3511 = vpack.c.b16 %v2543, %v2535
    %v3512 = vpack.c.b16 %v2544, %v2536
    %v3513 = vpack.c.b16 %v2545, %v2537
    %v3514 = vpack.c.b16 %v2546, %v2538
    %v3515 = vpack.c.b16 %v2547, %v2539
    %v3516 = vpack.c.b16 %v2556, %v2548
    %v3517 = vpack.c.b16 %v2557, %v2549
    %v3518 = vpack.c.b16 %v2558, %v2550
    %v3519 = vpack.c.b16 %v2559, %v2551
    %v3520 = vpack.c.b16 %v2560, %v2552
    %v3521 = vpack.c.b16 %v2561, %v2553
    %v3522 = vpack.c.b16 %v2562, %v2554
    %v3523 = vpack.c.b16 %v2563, %v2555
    %v3524 = vpack.c.b16 %v2572, %v2564
    %v3525 = vpack.c.b16 %v2573, %v2565
    %v3526 = vpack.c.b16 %v2574, %v2566
    %v3527 = vpack.c.b16 %v2575, %v2567
    %v3528 = vpack.c.b16 %v2576, %v2568
    %v3529 = vpack.c.b16 %v2577, %v2569
    %v3530 = vpack.c.b16 %v2578, %v2570
    %v3531 = vpack.c.b16 %v2579, %v2571
    %v3532 = vpack.c.b16 %v2588, %v2580
    %v3533 = vpack.c.b16 %v2589, %v2581
    %v3534 = vpack.c.b16 %v2590, %v2582
    %v3535 = vpack.c.b16 %v2591, %v2583
    %v3536 = vpack.c.b16 %v2592, %v2584
    %v3537 = vpack.c.b16 %v2593, %v2585
    %v3538 = vpack.c.b16 %v2594, %v2586
    %v3539 = vpack.c.b16 %v2595, %v2587
    %v3540 = vpack.c.b16 %v2604, %v2596
    %v3541 = vpack.c.b16 %v2605, %v2597
    %v3542 = vpack.c.b16 %v2606, %v2598
    %v3543 = vpack.c.b16 %v2607, %v2599
    %v3544 = vpack.c.b16 %v2608, %v2600
    %v3545 = vpack.c.b16 %v2609, %v2601
    %v3546 = vpack.c.b16 %v2610, %v2602
    %v3547 = vpack.c.b16 %v2611, %v2603
    %v3548 = vpack.c.b16 %v2620, %v2612
    %v3549 = vpack.c.b16 %v2621, %v2613
    %v3550 = vpack.c.b16 %v2622, %v2614
    %v3551 = vpack.c.b16 %v2623, %v2615
    %v3552 = vpack.c.b16 %v2624, %v2616
    %v3553 = vpack.c.b16 %v2625, %v2617
    %v3554 = vpack.c.b16 %v2626, %v2618
    %v3555 = vpack.c.b16 %v2627, %v2619
    %v3556 = vpack.c.b16 %v2636, %v2628
    %v3557 = vpack.c.b16 %v2637, %v2629
    %v3558 = vpack.c.b16 %v2638, %v2630
    %v3559 = vpack.c.b16 %v2639, %v2631
    %v3560 = vpack.c.b16 %v2640, %v2632
    %v3561 = vpack.c.b16 %v2641, %v2633
    %v3562 = vpack.c.b16 %v2642, %v2634
    %v3563 = vpack.c.b16 %v2643, %v2635
    %v3564 = vpack.c.b16 %v2652, %v2644
    %v3565 = vpack.c.b16 %v2653, %v2645
    %v3566 = vpack.c.b16 %v2654, %v2646
    %v3567 = vpack.c.b16 %v2655, %v2647
    %v3568 = vpack.c.b16 %v2656, %v2648
    %v3569 = vpack.c.b16 %v2657, %v2649
    %v3570 = vpack.c.b16 %v2658, %v2650
    %v3571 = vpack.c.b16 %v2659, %v2651
    %v3572 = vpack.c.b16 %v2668, %v2660
    %v3573 = vpack.c.b16 %v2669, %v2661
    %v3574 = vpack.c.b16 %v2670, %v2662
    %v3575 = vpack.c.b16 %v2671, %v2663
    %v3576 = vpack.c.b16 %v2672, %v2664
    %v3577 = vpack.c.b16 %v2673, %v2665
    %v3578 = vpack.c.b16 %v2674, %v2666
    %v3579 = vpack.c.b16 %v2675, %v2667
    %v3580 = vpack.c.b16 %v2684, %v2676
    %v3581 = vpack.c.b16 %v2685, %v2677
    %v3582 = vpack.c.b16 %v2686, %v2678
    %v3583 = vpack.c.b16 %v2687, %v2679
    %v3584 = vpack.c.b16 %v2688, %v2680
    %v3585 = vpack.c.b16 %v2689, %v2681
    %v3586 = vpack.c.b16 %v2690, %v2682
    %v3587 = vpack.c.b16 %v2691, %v2683
    %v3588 = vpack.c.b16 %v2700, %v2692
    %v3589 = vpack.c.b16 %v2701, %v2693
    %v3590 = vpack.c.b16 %v2702, %v2694
    %v3591 = vpack.c.b16 %v2703, %v2695
    %v3592 = vpack.c.b16 %v2704, %v2696
    %v3593 = vpack.c.b16 %v2705, %v2697
    %v3594 = vpack.c.b16 %v2706, %v2698
    %v3595 = vpack.c.b16 %v2707, %v2699
    %v3596 = vpack.c.b16 %v2716, %v2708
    %v3597 = vpack.c.b16 %v2717, %v2709
    %v3598 = vpack.c.b16 %v2718, %v2710
    %v3599 = vpack.c.b16 %v2719, %v2711
    %v3600 = vpack.c.b16 %v2720, %v2712
    %v3601 = vpack.c.b16 %v2721, %v2713
    %v3602 = vpack.c.b16 %v2722, %v2714
    %v3603 = vpack.c.b16 %v2723, %v2715
    %v3604 = vpack.c.b16 %v2732, %v2724
    %v3605 = vpack.c.b16 %v2733, %v2725
    %v3606 = vpack.c.b16 %v2734, %v2726
    %v3607 = vpack.c.b16 %v2735, %v2727
    %v3608 = vpack.c.b16 %v2736, %v2728
    %v3609 = vpack.c.b16 %v2737, %v2729
    %v3610 = vpack.c.b16 %v2738, %v2730
    %v3611 = vpack.c.b16 %v2739, %v2731
    %v3612 = vpack.c.b16 %v2748, %v2740
    %v3613 = vpack.c.b16 %v2749, %v2741
    %v3614 = vpack.c.b16 %v2750, %v2742
    %v3615 = vpack.c.b16 %v2751, %v2743
    %v3616 = vpack.c.b16 %v2752, %v2744
    %v3617 = vpack.c.b16 %v2753, %v2745
    %v3618 = vpack.c.b16 %v2754, %v2746
    %v3619 = vpack.c.b16 %v2755, %v2747
    %v3620 = vpack.c.b16 %v2764, %v2756
    %v3621 = vpack.c.b16 %v2765, %v2757
    %v3622 = vpack.c.b16 %v2766, %v2758
    %v3623 = vpack.c.b16 %v2767, %v2759
    %v3624 = vpack.c.b16 %v2768, %v2760
    %v3625 = vpack.c.b16 %v2769, %v2761
    %v3626 = vpack.c.b16 %v2770, %v2762
    %v3627 = vpack.c.b16 %v2771, %v2763
    %v3628 = vpack.c.b16 %v2780, %v2772
    %v3629 = vpack.c.b16 %v2781, %v2773
    %v3630 = vpack.c.b16 %v2782, %v2774
    %v3631 = vpack.c.b16 %v2783, %v2775
    %v3632 = vpack.c.b16 %v2784, %v2776
    %v3633 = vpack.c.b16 %v2785, %v2777
    %v3634 = vpack.c.b16 %v2786, %v2778
    %v3635 = vpack.c.b16 %v2787, %v2779
    %v3636 = vpack.c.b16 %v2796, %v2788
    %v3637 = vpack.c.b16 %v2797, %v2789
    %v3638 = vpack.c.b16 %v2798, %v2790
    %v3639 = vpack.c.b16 %v2799, %v2791
    %v3640 = vpack.c.b16 %v2800, %v2792
    %v3641 = vpack.c.b16 %v2801, %v2793
    %v3642 = vpack.c.b16 %v2802, %v2794
    %v3643 = vpack.c.b16 %v2803, %v2795
    %v3644 = vpack.c.b16 %v2812, %v2804
    %v3645 = vpack.c.b16 %v2813, %v2805
    %v3646 = vpack.c.b16 %v2814, %v2806
    %v3647 = vpack.c.b16 %v2815, %v2807
    %v3648 = vpack.c.b16 %v2816, %v2808
    %v3649 = vpack.c.b16 %v2817, %v2809
    %v3650 = vpack.c.b16 %v2818, %v2810
    %v3651 = vpack.c.b16 %v2819, %v2811
    %v3652 = vpack.c.b16 %v2828, %v2820
    %v3653 = vpack.c.b16 %v2829, %v2821
    %v3654 = vpack.c.b16 %v2830, %v2822
    %v3655 = vpack.c.b16 %v2831, %v2823
    %v3656 = vpack.c.b16 %v2832, %v2824
    %v3657 = vpack.c.b16 %v2833, %v2825
    %v3658 = vpack.c.b16 %v2834, %v2826
    %v3659 = vpack.c.b16 %v2835, %v2827
    %v3660 = vpack.c.b16 %v2844, %v2836
    %v3661 = vpack.c.b16 %v2845, %v2837
    %v3662 = vpack.c.b16 %v2846, %v2838
    %v3663 = vpack.c.b16 %v2847, %v2839
    %v3664 = vpack.c.b16 %v2848, %v2840
    %v3665 = vpack.c.b16 %v2849, %v2841
    %v3666 = vpack.c.b16 %v2850, %v2842
    %v3667 = vpack.c.b16 %v2851, %v2843
    %v3668 = vpack.c.b16 %v2860, %v2852
    %v3669 = vpack.c.b16 %v2861, %v2853
    %v3670 = vpack.c.b16 %v2862, %v2854
    %v3671 = vpack.c.b16 %v2863, %v2855
    %v3672 = vpack.c.b16 %v2864, %v2856
    %v3673 = vpack.c.b16 %v2865, %v2857
    %v3674 = vpack.c.b16 %v2866, %v2858
    %v3675 = vpack.c.b16 %v2867, %v2859
    %v3676 = vpack.c.b16 %v2876, %v2868
    %v3677 = vpack.c.b16 %v2877, %v2869
    %v3678 = vpack.c.b16 %v2878, %v2870
    %v3679 = vpack.c.b16 %v2879, %v2871
    %v3680 = vpack.c.b16 %v2880, %v2872
    %v3681 = vpack.c.b16 %v2881, %v2873
    %v3682 = vpack.c.b16 %v2882, %v2874
    %v3683 = vpack.c.b16 %v2883, %v2875
    %v3684 = vpack.c.b16 %v2892, %v2884
    %v3685 = vpack.c.b16 %v2893, %v2885
    %v3686 = vpack.c.b16 %v2894, %v2886
    %v3687 = vpack.c.b16 %v2895, %v2887
    %v3688 = vpack.c.b16 %v2896, %v2888
    %v3689 = vpack.c.b16 %v2897, %v2889
    %v3690 = vpack.c.b16 %v2898, %v2890
    %v3691 = vpack.c.b16 %v2899, %v2891
    %v3692 = vpack.c.b16 %v2908, %v2900
    %v3693 = vpack.c.b16 %v2909, %v2901
    %v3694 = vpack.c.b16 %v2910, %v2902
    %v3695 = vpack.c.b16 %v2911, %v2903
    %v3696 = vpack.c.b16 %v2912, %v2904
    %v3697 = vpack.c.b16 %v2913, %v2905
    %v3698 = vpack.c.b16 %v2914, %v2906
    %v3699 = vpack.c.b16 %v2915, %v2907
    %v3700 = vpack.c.b16 %v2924, %v2916
    %v3701 = vpack.c.b16 %v2925, %v2917
    %v3702 = vpack.c.b16 %v2926, %v2918
    %v3703 = vpack.c.b16 %v2927, %v2919
    %v3704 = vpack.c.b16 %v2928, %v2920
    %v3705 = vpack.c.b16 %v2929, %v2921
    %v3706 = vpack.c.b16 %v2930, %v2922
    %v3707 = vpack.c.b16 %v2931, %v2923
    %v3708 = vpack.c.b16 %v2940, %v2932
    %v3709 = vpack.c.b16 %v2941, %v2933
    %v3710 = vpack.c.b16 %v2942, %v2934
    %v3711 = vpack.c.b16 %v2943, %v2935
    %v3712 = vpack.c.b16 %v2944, %v2936
    %v3713 = vpack.c.b16 %v2945, %v2937
    %v3714 = vpack.c.b16 %v2946, %v2938
    %v3715 = vpack.c.b16 %v2947, %v2939
    %v3716 = vpack.c.b16 %v2956, %v2948
    %v3717 = vpack.c.b16 %v2957, %v2949
    %v3718 = vpack.c.b16 %v2958, %v2950
    %v3719 = vpack.c.b16 %v2959, %v2951
    %v3720 = vpack.c.b16 %v2960, %v2952
    %v3721 = vpack.c.b16 %v2961, %v2953
    %v3722 = vpack.c.b16 %v2962, %v2954
    %v3723 = vpack.c.b16 %v2963, %v2955
    %v3724 = vpack.c.b16 %v2972, %v2964
    %v3725 = vpack.c.b16 %v2973, %v2965
    %v3726 = vpack.c.b16 %v2974, %v2966
    %v3727 = vpack.c.b16 %v2975, %v2967
    %v3728 = vpack.c.b16 %v2976, %v2968
    %v3729 = vpack.c.b16 %v2977, %v2969
    %v3730 = vpack.c.b16 %v2978, %v2970
    %v3731 = vpack.c.b16 %v2979, %v2971
    %v3732 = vpack.c.b16 %v2988, %v2980
    %v3733 = vpack.c.b16 %v2989, %v2981
    %v3734 = vpack.c.b16 %v2990, %v2982
    %v3735 = vpack.c.b16 %v2991, %v2983
    %v3736 = vpack.c.b16 %v2992, %v2984
    %v3737 = vpack.c.b16 %v2993, %v2985
    %v3738 = vpack.c.b16 %v2994, %v2986
    %v3739 = vpack.c.b16 %v2995, %v2987
    %v3740 = vpack.c.b16 %v3004, %v2996
    %v3741 = vpack.c.b16 %v3005, %v2997
    %v3742 = vpack.c.b16 %v3006, %v2998
    %v3743 = vpack.c.b16 %v3007, %v2999
    %v3744 = vpack.c.b16 %v3008, %v3000
    %v3745 = vpack.c.b16 %v3009, %v3001
    %v3746 = vpack.c.b16 %v3010, %v3002
    %v3747 = vpack.c.b16 %v3011, %v3003
    %v3748 = vpack.c.b16 %v3020, %v3012
    %v3749 = vpack.c.b16 %v3021, %v3013
    %v3750 = vpack.c.b16 %v3022, %v3014
    %v3751 = vpack.c.b16 %v3023, %v3015
    %v3752 = vpack.c.b16 %v3024, %v3016
    %v3753 = vpack.c.b16 %v3025, %v3017
    %v3754 = vpack.c.b16 %v3026, %v3018
    %v3755 = vpack.c.b16 %v3027, %v3019
    %v3756 = vpack.c.b16 %v3036, %v3028
    %v3757 = vpack.c.b16 %v3037, %v3029
    %v3758 = vpack.c.b16 %v3038, %v3030
    %v3759 = vpack.c.b16 %v3039, %v3031
    %v3760 = vpack.c.b16 %v3040, %v3032
    %v3761 = vpack.c.b16 %v3041, %v3033
    %v3762 = vpack.c.b16 %v3042, %v3034
    %v3763 = vpack.c.b16 %v3043, %v3035
    %v3764 = vpack.c.b16 %v3052, %v3044
    %v3765 = vpack.c.b16 %v3053, %v3045
    %v3766 = vpack.c.b16 %v3054, %v3046
    %v3767 = vpack.c.b16 %v3055, %v3047
    %v3768 = vpack.c.b16 %v3056, %v3048
    %v3769 = vpack.c.b16 %v3057, %v3049
    %v3770 = vpack.c.b16 %v3058, %v3050
    %v3771 = vpack.c.b16 %v3059, %v3051
    %v3772 = vpack.c.b16 %v3068, %v3060
    %v3773 = vpack.c.b16 %v3069, %v3061
    %v3774 = vpack.c.b16 %v3070, %v3062
    %v3775 = vpack.c.b16 %v3071, %v3063
    %v3776 = vpack.c.b16 %v3072, %v3064
    %v3777 = vpack.c.b16 %v3073, %v3065
    %v3778 = vpack.c.b16 %v3074, %v3066
    %v3779 = vpack.c.b16 %v3075, %v3067
    %v3780 = vpack.c.b16 %v3084, %v3076
    %v3781 = vpack.c.b16 %v3085, %v3077
    %v3782 = vpack.c.b16 %v3086, %v3078
    %v3783 = vpack.c.b16 %v3087, %v3079
    %v3784 = vpack.c.b16 %v3088, %v3080
    %v3785 = vpack.c.b16 %v3089, %v3081
    %v3786 = vpack.c.b16 %v3090, %v3082
    %v3787 = vpack.c.b16 %v3091, %v3083
    %v3788 = vpack.c.b16 %v3100, %v3092
    %v3789 = vpack.c.b16 %v3101, %v3093
    %v3790 = vpack.c.b16 %v3102, %v3094
    %v3791 = vpack.c.b16 %v3103, %v3095
    %v3792 = vpack.c.b16 %v3104, %v3096
    %v3793 = vpack.c.b16 %v3105, %v3097
    %v3794 = vpack.c.b16 %v3106, %v3098
    %v3795 = vpack.c.b16 %v3107, %v3099
    %v3796 = vpack.c.b16 %v3116, %v3108
    %v3797 = vpack.c.b16 %v3117, %v3109
    %v3798 = vpack.c.b16 %v3118, %v3110
    %v3799 = vpack.c.b16 %v3119, %v3111
    %v3800 = vpack.c.b16 %v3120, %v3112
    %v3801 = vpack.c.b16 %v3121, %v3113
    %v3802 = vpack.c.b16 %v3122, %v3114
    %v3803 = vpack.c.b16 %v3123, %v3115
    %v3804 = vpack.c.b16 %v3132, %v3124
    %v3805 = vpack.c.b16 %v3133, %v3125
    %v3806 = vpack.c.b16 %v3134, %v3126
    %v3807 = vpack.c.b16 %v3135, %v3127
    %v3808 = vpack.c.b16 %v3136, %v3128
    %v3809 = vpack.c.b16 %v3137, %v3129
    %v3810 = vpack.c.b16 %v3138, %v3130
    %v3811 = vpack.c.b16 %v3139, %v3131
    %v3812 = vpack.c.b16 %v3148, %v3140
    %v3813 = vpack.c.b16 %v3149, %v3141
    %v3814 = vpack.c.b16 %v3150, %v3142
    %v3815 = vpack.c.b16 %v3151, %v3143
    %v3816 = vpack.c.b16 %v3152, %v3144
    %v3817 = vpack.c.b16 %v3153, %v3145
    %v3818 = vpack.c.b16 %v3154, %v3146
    %v3819 = vpack.c.b16 %v3155, %v3147
    %v3820 = vpack.c.b16 %v3164, %v3156
    %v3821 = vpack.c.b16 %v3165, %v3157
    %v3822 = vpack.c.b16 %v3166, %v3158
    %v3823 = vpack.c.b16 %v3167, %v3159
    %v3824 = vpack.c.b16 %v3168, %v3160
    %v3825 = vpack.c.b16 %v3169, %v3161
    %v3826 = vpack.c.b16 %v3170, %v3162
    %v3827 = vpack.c.b16 %v3171, %v3163
    %v3828 = vpack.c.b16 %v3180, %v3172
    %v3829 = vpack.c.b16 %v3181, %v3173
    %v3830 = vpack.c.b16 %v3182, %v3174
    %v3831 = vpack.c.b16 %v3183, %v3175
    %v3832 = vpack.c.b16 %v3184, %v3176
    %v3833 = vpack.c.b16 %v3185, %v3177
    %v3834 = vpack.c.b16 %v3186, %v3178
    %v3835 = vpack.c.b16 %v3187, %v3179
    %v3836 = vpack.c.b16 %v3196, %v3188
    %v3837 = vpack.c.b16 %v3197, %v3189
    %v3838 = vpack.c.b16 %v3198, %v3190
    %v3839 = vpack.c.b16 %v3199, %v3191
    %v3840 = vpack.c.b16 %v3200, %v3192
    %v3841 = vpack.c.b16 %v3201, %v3193
    %v3842 = vpack.c.b16 %v3202, %v3194
    %v3843 = vpack.c.b16 %v3203, %v3195
    %v3844 = vpack.c.b16 %v3212, %v3204
    %v3845 = vpack.c.b16 %v3213, %v3205
    %v3846 = vpack.c.b16 %v3214, %v3206
    %v3847 = vpack.c.b16 %v3215, %v3207
    %v3848 = vpack.c.b16 %v3216, %v3208
    %v3849 = vpack.c.b16 %v3217, %v3209
    %v3850 = vpack.c.b16 %v3218, %v3210
    %v3851 = vpack.c.b16 %v3219, %v3211
    %v3852 = vpack.c.b16 %v3228, %v3220
    %v3853 = vpack.c.b16 %v3229, %v3221
    %v3854 = vpack.c.b16 %v3230, %v3222
    %v3855 = vpack.c.b16 %v3231, %v3223
    %v3856 = vpack.c.b16 %v3232, %v3224
    %v3857 = vpack.c.b16 %v3233, %v3225
    %v3858 = vpack.c.b16 %v3234, %v3226
    %v3859 = vpack.c.b16 %v3235, %v3227
    %v3860 = vpack.c.b16 %v3244, %v3236
    %v3861 = vpack.c.b16 %v3245, %v3237
    %v3862 = vpack.c.b16 %v3246, %v3238
    %v3863 = vpack.c.b16 %v3247, %v3239
    %v3864 = vpack.c.b16 %v3248, %v3240
    %v3865 = vpack.c.b16 %v3249, %v3241
    %v3866 = vpack.c.b16 %v3250, %v3242
    %v3867 = vpack.c.b16 %v3251, %v3243
    %v3868 = vpack.c.b16 %v3260, %v3252
    %v3869 = vpack.c.b16 %v3261, %v3253
    %v3870 = vpack.c.b16 %v3262, %v3254
    %v3871 = vpack.c.b16 %v3263, %v3255
    %v3872 = vpack.c.b16 %v3264, %v3256
    %v3873 = vpack.c.b16 %v3265, %v3257
    %v3874 = vpack.c.b16 %v3266, %v3258
    %v3875 = vpack.c.b16 %v3267, %v3259
    %v3876 = vpack.c.b16 %v3276, %v3268
    %v3877 = vpack.c.b16 %v3277, %v3269
    %v3878 = vpack.c.b16 %v3278, %v3270
    %v3879 = vpack.c.b16 %v3279, %v3271
    %v3880 = vpack.c.b16 %v3280, %v3272
    %v3881 = vpack.c.b16 %v3281, %v3273
    %v3882 = vpack.c.b16 %v3282, %v3274
    %v3883 = vpack.c.b16 %v3283, %v3275
    %v3884 = vpack.c.b16 %v3292, %v3284
    %v3885 = vpack.c.b16 %v3293, %v3285
    %v3886 = vpack.c.b16 %v3294, %v3286
    %v3887 = vpack.c.b16 %v3295, %v3287
    %v3888 = vpack.c.b16 %v3296, %v3288
    %v3889 = vpack.c.b16 %v3297, %v3289
    %v3890 = vpack.c.b16 %v3298, %v3290
    %v3891 = vpack.c.b16 %v3299, %v3291
    %v3892 = vpack.c.b16 %v3308, %v3300
    %v3893 = vpack.c.b16 %v3309, %v3301
    %v3894 = vpack.c.b16 %v3310, %v3302
    %v3895 = vpack.c.b16 %v3311, %v3303
    %v3896 = vpack.c.b16 %v3312, %v3304
    %v3897 = vpack.c.b16 %v3313, %v3305
    %v3898 = vpack.c.b16 %v3314, %v3306
    %v3899 = vpack.c.b16 %v3315, %v3307
    %v3900 = vpack.c.b16 %v3324, %v3316
    %v3901 = vpack.c.b16 %v3325, %v3317
    %v3902 = vpack.c.b16 %v3326, %v3318
    %v3903 = vpack.c.b16 %v3327, %v3319
    %v3904 = vpack.c.b16 %v3328, %v3320
    %v3905 = vpack.c.b16 %v3329, %v3321
    %v3906 = vpack.c.b16 %v3330, %v3322
    %v3907 = vpack.c.b16 %v3331, %v3323
    %v3908 = vpack.c.b16 %v3340, %v3332
    %v3909 = vpack.c.b16 %v3341, %v3333
    %v3910 = vpack.c.b16 %v3342, %v3334
    %v3911 = vpack.c.b16 %v3343, %v3335
    %v3912 = vpack.c.b16 %v3344, %v3336
    %v3913 = vpack.c.b16 %v3345, %v3337
    %v3914 = vpack.c.b16 %v3346, %v3338
    %v3915 = vpack.c.b16 %v3347, %v3339
    %v3916 = vpack.c.b16 %v3356, %v3348
    %v3917 = vpack.c.b16 %v3357, %v3349
    %v3918 = vpack.c.b16 %v3358, %v3350
    %v3919 = vpack.c.b16 %v3359, %v3351
    %v3920 = vpack.c.b16 %v3360, %v3352
    %v3921 = vpack.c.b16 %v3361, %v3353
    %v3922 = vpack.c.b16 %v3362, %v3354
    %v3923 = vpack.c.b16 %v3363, %v3355
    %v3924 = vpack.c.b16 %v3372, %v3364
    %v3925 = vpack.c.b16 %v3373, %v3365
    %v3926 = vpack.c.b16 %v3374, %v3366
    %v3927 = vpack.c.b16 %v3375, %v3367
    %v3928 = vpack.c.b16 %v3376, %v3368
    %v3929 = vpack.c.b16 %v3377, %v3369
    %v3930 = vpack.c.b16 %v3378, %v3370
    %v3931 = vpack.c.b16 %v3379, %v3371
    %v3932 = vpack.c.b16 %v3388, %v3380
    %v3933 = vpack.c.b16 %v3389, %v3381
    %v3934 = vpack.c.b16 %v3390, %v3382
    %v3935 = vpack.c.b16 %v3391, %v3383
    %v3936 = vpack.c.b16 %v3392, %v3384
    %v3937 = vpack.c.b16 %v3393, %v3385
    %v3938 = vpack.c.b16 %v3394, %v3386
    %v3939 = vpack.c.b16 %v3395, %v3387
    %v3940 = vpack.c.b16 %v3404, %v3396
    %v3941 = vpack.c.b16 %v3405, %v3397
    %v3942 = vpack.c.b16 %v3406, %v3398
    %v3943 = vpack.c.b16 %v3407, %v3399
    %v3944 = vpack.c.b16 %v3408, %v3400
    %v3945 = vpack.c.b16 %v3409, %v3401
    %v3946 = vpack.c.b16 %v3410, %v3402
    %v3947 = vpack.c.b16 %v3411, %v3403
    %v3948 = vpack.c.b16 %v3420, %v3412
    %v3949 = vpack.c.b16 %v3421, %v3413
    %v3950 = vpack.c.b16 %v3422, %v3414
    %v3951 = vpack.c.b16 %v3423, %v3415
    %v3952 = vpack.c.b16 %v3424, %v3416
    %v3953 = vpack.c.b16 %v3425, %v3417
    %v3954 = vpack.c.b16 %v3426, %v3418
    %v3955 = vpack.c.b16 %v3427, %v3419
    %v3956 = vpack.c.b16 %v3436, %v3428
    %v3957 = vpack.c.b16 %v3437, %v3429
    %v3958 = vpack.c.b16 %v3438, %v3430
    %v3959 = vpack.c.b16 %v3439, %v3431
    %v3960 = vpack.c.b16 %v3440, %v3432
    %v3961 = vpack.c.b16 %v3441, %v3433
    %v3962 = vpack.c.b16 %v3442, %v3434
    %v3963 = vpack.c.b16 %v3443, %v3435
    %v3964 = vpack.c.b16 %v3452, %v3444
    %v3965 = vpack.c.b16 %v3453, %v3445
    %v3966 = vpack.c.b16 %v3454, %v3446
    %v3967 = vpack.c.b16 %v3455, %v3447
    %v3968 = vpack.c.b16 %v3456, %v3448
    %v3969 = vpack.c.b16 %v3457, %v3449
    %v3970 = vpack.c.b16 %v3458, %v3450
    %v3971 = vpack.c.b16 %v3459, %v3451
    %4484 = vmatpush.bf16.msra.mxu0 %v3516
    %4485 = vmatpush.bf16.msra.mxu0 %v3508
    %4486 = vmatpush.bf16.msra.mxu0 %v3500
    %4487 = vmatpush.bf16.msra.mxu0 %v3492
    %4488 = vmatpush.bf16.msra.mxu0 %v3484
    %4489 = vmatpush.bf16.msra.mxu0 %v3476
    %4490 = vmatpush.bf16.msra.mxu0 %v3468
    %4491 = vmatpush.bf16.msra.mxu0 %v3460
    %4492 = vmatmul.bf16.gmra.mxu0 %v1386
    %v4493 = vpop.f32.mrf.mxu0
    %v4494 = vadd.f32 %v1908, %v4493
    %v4495 = vpop.f32.mrf.mxu0
    %4496 = vdwg.mxu0
    %4497 = vmatpush.bf16.msra.mxu0 %v3580
    %4498 = vmatpush.bf16.msra.mxu0 %v3572
    %4499 = vmatpush.bf16.msra.mxu0 %v3564
    %4500 = vmatpush.bf16.msra.mxu0 %v3556
    %4501 = vmatpush.bf16.msra.mxu0 %v3548
    %4502 = vmatpush.bf16.msra.mxu0 %v3540
    %4503 = vmatpush.bf16.msra.mxu0 %v3532
    %4504 = vmatpush.bf16.msra.mxu0 %v3524
    %4505 = vmatmul.bf16.gmra.mxu0 %v1387
    %v4506 = vpop.f32.mrf.mxu0
    %v4507 = vadd.f32 %v4494, %v4506
    %v4508 = vpop.f32.mrf.mxu0
    %4509 = vdwg.mxu0
    %4510 = vmatpush.bf16.msra.mxu0 %v3644
    %4511 = vmatpush.bf16.msra.mxu0 %v3636
    %4512 = vmatpush.bf16.msra.mxu0 %v3628
    %4513 = vmatpush.bf16.msra.mxu0 %v3620
    %4514 = vmatpush.bf16.msra.mxu0 %v3612
    %4515 = vmatpush.bf16.msra.mxu0 %v3604
    %4516 = vmatpush.bf16.msra.mxu0 %v3596
    %4517 = vmatpush.bf16.msra.mxu0 %v3588
    %4518 = vmatmul.bf16.gmra.mxu0 %v1388
    %v4519 = vpop.f32.mrf.mxu0
    %v4520 = vadd.f32 %v4507, %v4519
    %v4521 = vpop.f32.mrf.mxu0
    %4522 = vdwg.mxu0
    %4523 = vmatpush.bf16.msra.mxu0 %v3708
    %4524 = vmatpush.bf16.msra.mxu0 %v3700
    %4525 = vmatpush.bf16.msra.mxu0 %v3692
    %4526 = vmatpush.bf16.msra.mxu0 %v3684
    %4527 = vmatpush.bf16.msra.mxu0 %v3676
    %4528 = vmatpush.bf16.msra.mxu0 %v3668
    %4529 = vmatpush.bf16.msra.mxu0 %v3660
    %4530 = vmatpush.bf16.msra.mxu0 %v3652
    %4531 = vmatmul.bf16.gmra.mxu0 %v1389
    %v4532 = vpop.f32.mrf.mxu0
    %v4533 = vadd.f32 %v4520, %v4532
    %v4534 = vpop.f32.mrf.mxu0
    %4535 = vdwg.mxu0
    %4536 = vmatpush.bf16.msra.mxu0 %v3772
    %4537 = vmatpush.bf16.msra.mxu0 %v3764
    %4538 = vmatpush.bf16.msra.mxu0 %v3756
    %4539 = vmatpush.bf16.msra.mxu0 %v3748
    %4540 = vmatpush.bf16.msra.mxu0 %v3740
    %4541 = vmatpush.bf16.msra.mxu0 %v3732
    %4542 = vmatpush.bf16.msra.mxu0 %v3724
    %4543 = vmatpush.bf16.msra.mxu0 %v3716
    %4544 = vmatmul.bf16.gmra.mxu0 %v1390
    %v4545 = vpop.f32.mrf.mxu0
    %v4546 = vadd.f32 %v4533, %v4545
    %v4547 = vpop.f32.mrf.mxu0
    %4548 = vdwg.mxu0
    %4549 = vmatpush.bf16.msra.mxu0 %v3836
    %4550 = vmatpush.bf16.msra.mxu0 %v3828
    %4551 = vmatpush.bf16.msra.mxu0 %v3820
    %4552 = vmatpush.bf16.msra.mxu0 %v3812
    %4553 = vmatpush.bf16.msra.mxu0 %v3804
    %4554 = vmatpush.bf16.msra.mxu0 %v3796
    %4555 = vmatpush.bf16.msra.mxu0 %v3788
    %4556 = vmatpush.bf16.msra.mxu0 %v3780
    %4557 = vmatmul.bf16.gmra.mxu0 %v1391
    %v4558 = vpop.f32.mrf.mxu0
    %v4559 = vadd.f32 %v4546, %v4558
    %v4560 = vpop.f32.mrf.mxu0
    %4561 = vdwg.mxu0
    %4562 = vmatpush.bf16.msra.mxu0 %v3900
    %4563 = vmatpush.bf16.msra.mxu0 %v3892
    %4564 = vmatpush.bf16.msra.mxu0 %v3884
    %4565 = vmatpush.bf16.msra.mxu0 %v3876
    %4566 = vmatpush.bf16.msra.mxu0 %v3868
    %4567 = vmatpush.bf16.msra.mxu0 %v3860
    %4568 = vmatpush.bf16.msra.mxu0 %v3852
    %4569 = vmatpush.bf16.msra.mxu0 %v3844
    %4570 = vmatmul.bf16.gmra.mxu0 %v1392
    %v4571 = vpop.f32.mrf.mxu0
    %v4572 = vadd.f32 %v4559, %v4571
    %v4573 = vpop.f32.mrf.mxu0
    %4574 = vdwg.mxu0
    %4575 = vmatpush.bf16.msra.mxu0 %v3964
    %4576 = vmatpush.bf16.msra.mxu0 %v3956
    %4577 = vmatpush.bf16.msra.mxu0 %v3948
    %4578 = vmatpush.bf16.msra.mxu0 %v3940
    %4579 = vmatpush.bf16.msra.mxu0 %v3932
    %4580 = vmatpush.bf16.msra.mxu0 %v3924
    %4581 = vmatpush.bf16.msra.mxu0 %v3916
    %4582 = vmatpush.bf16.msra.mxu0 %v3908
    %4583 = vmatmul.bf16.gmra.mxu0 %v1393
    %v4584 = vpop.f32.mrf.mxu0
    %v4585 = vadd.f32 %v4572, %v4584
    %v4586 = vpop.f32.mrf.mxu0
    %4587 = vdwg.mxu0
    %4588 = vmatpush.bf16.msra.mxu0 %v3517
    %4589 = vmatpush.bf16.msra.mxu0 %v3509
    %4590 = vmatpush.bf16.msra.mxu0 %v3501
    %4591 = vmatpush.bf16.msra.mxu0 %v3493
    %4592 = vmatpush.bf16.msra.mxu0 %v3485
    %4593 = vmatpush.bf16.msra.mxu0 %v3477
    %4594 = vmatpush.bf16.msra.mxu0 %v3469
    %4595 = vmatpush.bf16.msra.mxu0 %v3461
    %4596 = vmatmul.bf16.gmra.mxu0 %v1386
    %v4597 = vpop.f32.mrf.mxu0
    %v4598 = vadd.f32 %v1909, %v4597
    %v4599 = vpop.f32.mrf.mxu0
    %4600 = vdwg.mxu0
    %4601 = vmatpush.bf16.msra.mxu0 %v3581
    %4602 = vmatpush.bf16.msra.mxu0 %v3573
    %4603 = vmatpush.bf16.msra.mxu0 %v3565
    %4604 = vmatpush.bf16.msra.mxu0 %v3557
    %4605 = vmatpush.bf16.msra.mxu0 %v3549
    %4606 = vmatpush.bf16.msra.mxu0 %v3541
    %4607 = vmatpush.bf16.msra.mxu0 %v3533
    %4608 = vmatpush.bf16.msra.mxu0 %v3525
    %4609 = vmatmul.bf16.gmra.mxu0 %v1387
    %v4610 = vpop.f32.mrf.mxu0
    %v4611 = vadd.f32 %v4598, %v4610
    %v4612 = vpop.f32.mrf.mxu0
    %4613 = vdwg.mxu0
    %4614 = vmatpush.bf16.msra.mxu0 %v3645
    %4615 = vmatpush.bf16.msra.mxu0 %v3637
    %4616 = vmatpush.bf16.msra.mxu0 %v3629
    %4617 = vmatpush.bf16.msra.mxu0 %v3621
    %4618 = vmatpush.bf16.msra.mxu0 %v3613
    %4619 = vmatpush.bf16.msra.mxu0 %v3605
    %4620 = vmatpush.bf16.msra.mxu0 %v3597
    %4621 = vmatpush.bf16.msra.mxu0 %v3589
    %4622 = vmatmul.bf16.gmra.mxu0 %v1388
    %v4623 = vpop.f32.mrf.mxu0
    %v4624 = vadd.f32 %v4611, %v4623
    %v4625 = vpop.f32.mrf.mxu0
    %4626 = vdwg.mxu0
    %4627 = vmatpush.bf16.msra.mxu0 %v3709
    %4628 = vmatpush.bf16.msra.mxu0 %v3701
    %4629 = vmatpush.bf16.msra.mxu0 %v3693
    %4630 = vmatpush.bf16.msra.mxu0 %v3685
    %4631 = vmatpush.bf16.msra.mxu0 %v3677
    %4632 = vmatpush.bf16.msra.mxu0 %v3669
    %4633 = vmatpush.bf16.msra.mxu0 %v3661
    %4634 = vmatpush.bf16.msra.mxu0 %v3653
    %4635 = vmatmul.bf16.gmra.mxu0 %v1389
    %v4636 = vpop.f32.mrf.mxu0
    %v4637 = vadd.f32 %v4624, %v4636
    %v4638 = vpop.f32.mrf.mxu0
    %4639 = vdwg.mxu0
    %4640 = vmatpush.bf16.msra.mxu0 %v3773
    %4641 = vmatpush.bf16.msra.mxu0 %v3765
    %4642 = vmatpush.bf16.msra.mxu0 %v3757
    %4643 = vmatpush.bf16.msra.mxu0 %v3749
    %4644 = vmatpush.bf16.msra.mxu0 %v3741
    %4645 = vmatpush.bf16.msra.mxu0 %v3733
    %4646 = vmatpush.bf16.msra.mxu0 %v3725
    %4647 = vmatpush.bf16.msra.mxu0 %v3717
    %4648 = vmatmul.bf16.gmra.mxu0 %v1390
    %v4649 = vpop.f32.mrf.mxu0
    %v4650 = vadd.f32 %v4637, %v4649
    %v4651 = vpop.f32.mrf.mxu0
    %4652 = vdwg.mxu0
    %4653 = vmatpush.bf16.msra.mxu0 %v3837
    %4654 = vmatpush.bf16.msra.mxu0 %v3829
    %4655 = vmatpush.bf16.msra.mxu0 %v3821
    %4656 = vmatpush.bf16.msra.mxu0 %v3813
    %4657 = vmatpush.bf16.msra.mxu0 %v3805
    %4658 = vmatpush.bf16.msra.mxu0 %v3797
    %4659 = vmatpush.bf16.msra.mxu0 %v3789
    %4660 = vmatpush.bf16.msra.mxu0 %v3781
    %4661 = vmatmul.bf16.gmra.mxu0 %v1391
    %v4662 = vpop.f32.mrf.mxu0
    %v4663 = vadd.f32 %v4650, %v4662
    %v4664 = vpop.f32.mrf.mxu0
    %4665 = vdwg.mxu0
    %4666 = vmatpush.bf16.msra.mxu0 %v3901
    %4667 = vmatpush.bf16.msra.mxu0 %v3893
    %4668 = vmatpush.bf16.msra.mxu0 %v3885
    %4669 = vmatpush.bf16.msra.mxu0 %v3877
    %4670 = vmatpush.bf16.msra.mxu0 %v3869
    %4671 = vmatpush.bf16.msra.mxu0 %v3861
    %4672 = vmatpush.bf16.msra.mxu0 %v3853
    %4673 = vmatpush.bf16.msra.mxu0 %v3845
    %4674 = vmatmul.bf16.gmra.mxu0 %v1392
    %v4675 = vpop.f32.mrf.mxu0
    %v4676 = vadd.f32 %v4663, %v4675
    %v4677 = vpop.f32.mrf.mxu0
    %4678 = vdwg.mxu0
    %4679 = vmatpush.bf16.msra.mxu0 %v3965
    %4680 = vmatpush.bf16.msra.mxu0 %v3957
    %4681 = vmatpush.bf16.msra.mxu0 %v3949
    %4682 = vmatpush.bf16.msra.mxu0 %v3941
    %4683 = vmatpush.bf16.msra.mxu0 %v3933
    %4684 = vmatpush.bf16.msra.mxu0 %v3925
    %4685 = vmatpush.bf16.msra.mxu0 %v3917
    %4686 = vmatpush.bf16.msra.mxu0 %v3909
    %4687 = vmatmul.bf16.gmra.mxu0 %v1393
    %v4688 = vpop.f32.mrf.mxu0
    %v4689 = vadd.f32 %v4676, %v4688
    %v4690 = vpop.f32.mrf.mxu0
    %4691 = vdwg.mxu0
    %4692 = vmatpush.bf16.msra.mxu0 %v3518
    %4693 = vmatpush.bf16.msra.mxu0 %v3510
    %4694 = vmatpush.bf16.msra.mxu0 %v3502
    %4695 = vmatpush.bf16.msra.mxu0 %v3494
    %4696 = vmatpush.bf16.msra.mxu0 %v3486
    %4697 = vmatpush.bf16.msra.mxu0 %v3478
    %4698 = vmatpush.bf16.msra.mxu0 %v3470
    %4699 = vmatpush.bf16.msra.mxu0 %v3462
    %4700 = vmatmul.bf16.gmra.mxu0 %v1386
    %v4701 = vpop.f32.mrf.mxu0
    %v4702 = vadd.f32 %v1910, %v4701
    %v4703 = vpop.f32.mrf.mxu0
    %4704 = vdwg.mxu0
    %4705 = vmatpush.bf16.msra.mxu0 %v3582
    %4706 = vmatpush.bf16.msra.mxu0 %v3574
    %4707 = vmatpush.bf16.msra.mxu0 %v3566
    %4708 = vmatpush.bf16.msra.mxu0 %v3558
    %4709 = vmatpush.bf16.msra.mxu0 %v3550
    %4710 = vmatpush.bf16.msra.mxu0 %v3542
    %4711 = vmatpush.bf16.msra.mxu0 %v3534
    %4712 = vmatpush.bf16.msra.mxu0 %v3526
    %4713 = vmatmul.bf16.gmra.mxu0 %v1387
    %v4714 = vpop.f32.mrf.mxu0
    %v4715 = vadd.f32 %v4702, %v4714
    %v4716 = vpop.f32.mrf.mxu0
    %4717 = vdwg.mxu0
    %4718 = vmatpush.bf16.msra.mxu0 %v3646
    %4719 = vmatpush.bf16.msra.mxu0 %v3638
    %4720 = vmatpush.bf16.msra.mxu0 %v3630
    %4721 = vmatpush.bf16.msra.mxu0 %v3622
    %4722 = vmatpush.bf16.msra.mxu0 %v3614
    %4723 = vmatpush.bf16.msra.mxu0 %v3606
    %4724 = vmatpush.bf16.msra.mxu0 %v3598
    %4725 = vmatpush.bf16.msra.mxu0 %v3590
    %4726 = vmatmul.bf16.gmra.mxu0 %v1388
    %v4727 = vpop.f32.mrf.mxu0
    %v4728 = vadd.f32 %v4715, %v4727
    %v4729 = vpop.f32.mrf.mxu0
    %4730 = vdwg.mxu0
    %4731 = vmatpush.bf16.msra.mxu0 %v3710
    %4732 = vmatpush.bf16.msra.mxu0 %v3702
    %4733 = vmatpush.bf16.msra.mxu0 %v3694
    %4734 = vmatpush.bf16.msra.mxu0 %v3686
    %4735 = vmatpush.bf16.msra.mxu0 %v3678
    %4736 = vmatpush.bf16.msra.mxu0 %v3670
    %4737 = vmatpush.bf16.msra.mxu0 %v3662
    %4738 = vmatpush.bf16.msra.mxu0 %v3654
    %4739 = vmatmul.bf16.gmra.mxu0 %v1389
    %v4740 = vpop.f32.mrf.mxu0
    %v4741 = vadd.f32 %v4728, %v4740
    %v4742 = vpop.f32.mrf.mxu0
    %4743 = vdwg.mxu0
    %4744 = vmatpush.bf16.msra.mxu0 %v3774
    %4745 = vmatpush.bf16.msra.mxu0 %v3766
    %4746 = vmatpush.bf16.msra.mxu0 %v3758
    %4747 = vmatpush.bf16.msra.mxu0 %v3750
    %4748 = vmatpush.bf16.msra.mxu0 %v3742
    %4749 = vmatpush.bf16.msra.mxu0 %v3734
    %4750 = vmatpush.bf16.msra.mxu0 %v3726
    %4751 = vmatpush.bf16.msra.mxu0 %v3718
    %4752 = vmatmul.bf16.gmra.mxu0 %v1390
    %v4753 = vpop.f32.mrf.mxu0
    %v4754 = vadd.f32 %v4741, %v4753
    %v4755 = vpop.f32.mrf.mxu0
    %4756 = vdwg.mxu0
    %4757 = vmatpush.bf16.msra.mxu0 %v3838
    %4758 = vmatpush.bf16.msra.mxu0 %v3830
    %4759 = vmatpush.bf16.msra.mxu0 %v3822
    %4760 = vmatpush.bf16.msra.mxu0 %v3814
    %4761 = vmatpush.bf16.msra.mxu0 %v3806
    %4762 = vmatpush.bf16.msra.mxu0 %v3798
    %4763 = vmatpush.bf16.msra.mxu0 %v3790
    %4764 = vmatpush.bf16.msra.mxu0 %v3782
    %4765 = vmatmul.bf16.gmra.mxu0 %v1391
    %v4766 = vpop.f32.mrf.mxu0
    %v4767 = vadd.f32 %v4754, %v4766
    %v4768 = vpop.f32.mrf.mxu0
    %4769 = vdwg.mxu0
    %4770 = vmatpush.bf16.msra.mxu0 %v3902
    %4771 = vmatpush.bf16.msra.mxu0 %v3894
    %4772 = vmatpush.bf16.msra.mxu0 %v3886
    %4773 = vmatpush.bf16.msra.mxu0 %v3878
    %4774 = vmatpush.bf16.msra.mxu0 %v3870
    %4775 = vmatpush.bf16.msra.mxu0 %v3862
    %4776 = vmatpush.bf16.msra.mxu0 %v3854
    %4777 = vmatpush.bf16.msra.mxu0 %v3846
    %4778 = vmatmul.bf16.gmra.mxu0 %v1392
    %v4779 = vpop.f32.mrf.mxu0
    %v4780 = vadd.f32 %v4767, %v4779
    %v4781 = vpop.f32.mrf.mxu0
    %4782 = vdwg.mxu0
    %4783 = vmatpush.bf16.msra.mxu0 %v3966
    %4784 = vmatpush.bf16.msra.mxu0 %v3958
    %4785 = vmatpush.bf16.msra.mxu0 %v3950
    %4786 = vmatpush.bf16.msra.mxu0 %v3942
    %4787 = vmatpush.bf16.msra.mxu0 %v3934
    %4788 = vmatpush.bf16.msra.mxu0 %v3926
    %4789 = vmatpush.bf16.msra.mxu0 %v3918
    %4790 = vmatpush.bf16.msra.mxu0 %v3910
    %4791 = vmatmul.bf16.gmra.mxu0 %v1393
    %v4792 = vpop.f32.mrf.mxu0
    %v4793 = vadd.f32 %v4780, %v4792
    %v4794 = vpop.f32.mrf.mxu0
    %4795 = vdwg.mxu0
    %4796 = vmatpush.bf16.msra.mxu0 %v3519
    %4797 = vmatpush.bf16.msra.mxu0 %v3511
    %4798 = vmatpush.bf16.msra.mxu0 %v3503
    %4799 = vmatpush.bf16.msra.mxu0 %v3495
    %4800 = vmatpush.bf16.msra.mxu0 %v3487
    %4801 = vmatpush.bf16.msra.mxu0 %v3479
    %4802 = vmatpush.bf16.msra.mxu0 %v3471
    %4803 = vmatpush.bf16.msra.mxu0 %v3463
    %4804 = vmatmul.bf16.gmra.mxu0 %v1386
    %v4805 = vpop.f32.mrf.mxu0
    %v4806 = vadd.f32 %v1911, %v4805
    %v4807 = vpop.f32.mrf.mxu0
    %4808 = vdwg.mxu0
    %4809 = vmatpush.bf16.msra.mxu0 %v3583
    %4810 = vmatpush.bf16.msra.mxu0 %v3575
    %4811 = vmatpush.bf16.msra.mxu0 %v3567
    %4812 = vmatpush.bf16.msra.mxu0 %v3559
    %4813 = vmatpush.bf16.msra.mxu0 %v3551
    %4814 = vmatpush.bf16.msra.mxu0 %v3543
    %4815 = vmatpush.bf16.msra.mxu0 %v3535
    %4816 = vmatpush.bf16.msra.mxu0 %v3527
    %4817 = vmatmul.bf16.gmra.mxu0 %v1387
    %v4818 = vpop.f32.mrf.mxu0
    %v4819 = vadd.f32 %v4806, %v4818
    %v4820 = vpop.f32.mrf.mxu0
    %4821 = vdwg.mxu0
    %4822 = vmatpush.bf16.msra.mxu0 %v3647
    %4823 = vmatpush.bf16.msra.mxu0 %v3639
    %4824 = vmatpush.bf16.msra.mxu0 %v3631
    %4825 = vmatpush.bf16.msra.mxu0 %v3623
    %4826 = vmatpush.bf16.msra.mxu0 %v3615
    %4827 = vmatpush.bf16.msra.mxu0 %v3607
    %4828 = vmatpush.bf16.msra.mxu0 %v3599
    %4829 = vmatpush.bf16.msra.mxu0 %v3591
    %4830 = vmatmul.bf16.gmra.mxu0 %v1388
    %v4831 = vpop.f32.mrf.mxu0
    %v4832 = vadd.f32 %v4819, %v4831
    %v4833 = vpop.f32.mrf.mxu0
    %4834 = vdwg.mxu0
    %4835 = vmatpush.bf16.msra.mxu0 %v3711
    %4836 = vmatpush.bf16.msra.mxu0 %v3703
    %4837 = vmatpush.bf16.msra.mxu0 %v3695
    %4838 = vmatpush.bf16.msra.mxu0 %v3687
    %4839 = vmatpush.bf16.msra.mxu0 %v3679
    %4840 = vmatpush.bf16.msra.mxu0 %v3671
    %4841 = vmatpush.bf16.msra.mxu0 %v3663
    %4842 = vmatpush.bf16.msra.mxu0 %v3655
    %4843 = vmatmul.bf16.gmra.mxu0 %v1389
    %v4844 = vpop.f32.mrf.mxu0
    %v4845 = vadd.f32 %v4832, %v4844
    %v4846 = vpop.f32.mrf.mxu0
    %4847 = vdwg.mxu0
    %4848 = vmatpush.bf16.msra.mxu0 %v3775
    %4849 = vmatpush.bf16.msra.mxu0 %v3767
    %4850 = vmatpush.bf16.msra.mxu0 %v3759
    %4851 = vmatpush.bf16.msra.mxu0 %v3751
    %4852 = vmatpush.bf16.msra.mxu0 %v3743
    %4853 = vmatpush.bf16.msra.mxu0 %v3735
    %4854 = vmatpush.bf16.msra.mxu0 %v3727
    %4855 = vmatpush.bf16.msra.mxu0 %v3719
    %4856 = vmatmul.bf16.gmra.mxu0 %v1390
    %v4857 = vpop.f32.mrf.mxu0
    %v4858 = vadd.f32 %v4845, %v4857
    %v4859 = vpop.f32.mrf.mxu0
    %4860 = vdwg.mxu0
    %4861 = vmatpush.bf16.msra.mxu0 %v3839
    %4862 = vmatpush.bf16.msra.mxu0 %v3831
    %4863 = vmatpush.bf16.msra.mxu0 %v3823
    %4864 = vmatpush.bf16.msra.mxu0 %v3815
    %4865 = vmatpush.bf16.msra.mxu0 %v3807
    %4866 = vmatpush.bf16.msra.mxu0 %v3799
    %4867 = vmatpush.bf16.msra.mxu0 %v3791
    %4868 = vmatpush.bf16.msra.mxu0 %v3783
    %4869 = vmatmul.bf16.gmra.mxu0 %v1391
    %v4870 = vpop.f32.mrf.mxu0
    %v4871 = vadd.f32 %v4858, %v4870
    %v4872 = vpop.f32.mrf.mxu0
    %4873 = vdwg.mxu0
    %4874 = vmatpush.bf16.msra.mxu0 %v3903
    %4875 = vmatpush.bf16.msra.mxu0 %v3895
    %4876 = vmatpush.bf16.msra.mxu0 %v3887
    %4877 = vmatpush.bf16.msra.mxu0 %v3879
    %4878 = vmatpush.bf16.msra.mxu0 %v3871
    %4879 = vmatpush.bf16.msra.mxu0 %v3863
    %4880 = vmatpush.bf16.msra.mxu0 %v3855
    %4881 = vmatpush.bf16.msra.mxu0 %v3847
    %4882 = vmatmul.bf16.gmra.mxu0 %v1392
    %v4883 = vpop.f32.mrf.mxu0
    %v4884 = vadd.f32 %v4871, %v4883
    %v4885 = vpop.f32.mrf.mxu0
    %4886 = vdwg.mxu0
    %4887 = vmatpush.bf16.msra.mxu0 %v3967
    %4888 = vmatpush.bf16.msra.mxu0 %v3959
    %4889 = vmatpush.bf16.msra.mxu0 %v3951
    %4890 = vmatpush.bf16.msra.mxu0 %v3943
    %4891 = vmatpush.bf16.msra.mxu0 %v3935
    %4892 = vmatpush.bf16.msra.mxu0 %v3927
    %4893 = vmatpush.bf16.msra.mxu0 %v3919
    %4894 = vmatpush.bf16.msra.mxu0 %v3911
    %4895 = vmatmul.bf16.gmra.mxu0 %v1393
    %v4896 = vpop.f32.mrf.mxu0
    %v4897 = vadd.f32 %v4884, %v4896
    %v4898 = vpop.f32.mrf.mxu0
    %4899 = vdwg.mxu0
    %4900 = vmatpush.bf16.msra.mxu0 %v3520
    %4901 = vmatpush.bf16.msra.mxu0 %v3512
    %4902 = vmatpush.bf16.msra.mxu0 %v3504
    %4903 = vmatpush.bf16.msra.mxu0 %v3496
    %4904 = vmatpush.bf16.msra.mxu0 %v3488
    %4905 = vmatpush.bf16.msra.mxu0 %v3480
    %4906 = vmatpush.bf16.msra.mxu0 %v3472
    %4907 = vmatpush.bf16.msra.mxu0 %v3464
    %4908 = vmatmul.bf16.gmra.mxu0 %v1386
    %v4909 = vpop.f32.mrf.mxu0
    %v4910 = vadd.f32 %v1912, %v4909
    %v4911 = vpop.f32.mrf.mxu0
    %4912 = vdwg.mxu0
    %4913 = vmatpush.bf16.msra.mxu0 %v3584
    %4914 = vmatpush.bf16.msra.mxu0 %v3576
    %4915 = vmatpush.bf16.msra.mxu0 %v3568
    %4916 = vmatpush.bf16.msra.mxu0 %v3560
    %4917 = vmatpush.bf16.msra.mxu0 %v3552
    %4918 = vmatpush.bf16.msra.mxu0 %v3544
    %4919 = vmatpush.bf16.msra.mxu0 %v3536
    %4920 = vmatpush.bf16.msra.mxu0 %v3528
    %4921 = vmatmul.bf16.gmra.mxu0 %v1387
    %v4922 = vpop.f32.mrf.mxu0
    %v4923 = vadd.f32 %v4910, %v4922
    %v4924 = vpop.f32.mrf.mxu0
    %4925 = vdwg.mxu0
    %4926 = vmatpush.bf16.msra.mxu0 %v3648
    %4927 = vmatpush.bf16.msra.mxu0 %v3640
    %4928 = vmatpush.bf16.msra.mxu0 %v3632
    %4929 = vmatpush.bf16.msra.mxu0 %v3624
    %4930 = vmatpush.bf16.msra.mxu0 %v3616
    %4931 = vmatpush.bf16.msra.mxu0 %v3608
    %4932 = vmatpush.bf16.msra.mxu0 %v3600
    %4933 = vmatpush.bf16.msra.mxu0 %v3592
    %4934 = vmatmul.bf16.gmra.mxu0 %v1388
    %v4935 = vpop.f32.mrf.mxu0
    %v4936 = vadd.f32 %v4923, %v4935
    %v4937 = vpop.f32.mrf.mxu0
    %4938 = vdwg.mxu0
    %4939 = vmatpush.bf16.msra.mxu0 %v3712
    %4940 = vmatpush.bf16.msra.mxu0 %v3704
    %4941 = vmatpush.bf16.msra.mxu0 %v3696
    %4942 = vmatpush.bf16.msra.mxu0 %v3688
    %4943 = vmatpush.bf16.msra.mxu0 %v3680
    %4944 = vmatpush.bf16.msra.mxu0 %v3672
    %4945 = vmatpush.bf16.msra.mxu0 %v3664
    %4946 = vmatpush.bf16.msra.mxu0 %v3656
    %4947 = vmatmul.bf16.gmra.mxu0 %v1389
    %v4948 = vpop.f32.mrf.mxu0
    %v4949 = vadd.f32 %v4936, %v4948
    %v4950 = vpop.f32.mrf.mxu0
    %4951 = vdwg.mxu0
    %4952 = vmatpush.bf16.msra.mxu0 %v3776
    %4953 = vmatpush.bf16.msra.mxu0 %v3768
    %4954 = vmatpush.bf16.msra.mxu0 %v3760
    %4955 = vmatpush.bf16.msra.mxu0 %v3752
    %4956 = vmatpush.bf16.msra.mxu0 %v3744
    %4957 = vmatpush.bf16.msra.mxu0 %v3736
    %4958 = vmatpush.bf16.msra.mxu0 %v3728
    %4959 = vmatpush.bf16.msra.mxu0 %v3720
    %4960 = vmatmul.bf16.gmra.mxu0 %v1390
    %v4961 = vpop.f32.mrf.mxu0
    %v4962 = vadd.f32 %v4949, %v4961
    %v4963 = vpop.f32.mrf.mxu0
    %4964 = vdwg.mxu0
    %4965 = vmatpush.bf16.msra.mxu0 %v3840
    %4966 = vmatpush.bf16.msra.mxu0 %v3832
    %4967 = vmatpush.bf16.msra.mxu0 %v3824
    %4968 = vmatpush.bf16.msra.mxu0 %v3816
    %4969 = vmatpush.bf16.msra.mxu0 %v3808
    %4970 = vmatpush.bf16.msra.mxu0 %v3800
    %4971 = vmatpush.bf16.msra.mxu0 %v3792
    %4972 = vmatpush.bf16.msra.mxu0 %v3784
    %4973 = vmatmul.bf16.gmra.mxu0 %v1391
    %v4974 = vpop.f32.mrf.mxu0
    %v4975 = vadd.f32 %v4962, %v4974
    %v4976 = vpop.f32.mrf.mxu0
    %4977 = vdwg.mxu0
    %4978 = vmatpush.bf16.msra.mxu0 %v3904
    %4979 = vmatpush.bf16.msra.mxu0 %v3896
    %4980 = vmatpush.bf16.msra.mxu0 %v3888
    %4981 = vmatpush.bf16.msra.mxu0 %v3880
    %4982 = vmatpush.bf16.msra.mxu0 %v3872
    %4983 = vmatpush.bf16.msra.mxu0 %v3864
    %4984 = vmatpush.bf16.msra.mxu0 %v3856
    %4985 = vmatpush.bf16.msra.mxu0 %v3848
    %4986 = vmatmul.bf16.gmra.mxu0 %v1392
    %v4987 = vpop.f32.mrf.mxu0
    %v4988 = vadd.f32 %v4975, %v4987
    %v4989 = vpop.f32.mrf.mxu0
    %4990 = vdwg.mxu0
    %4991 = vmatpush.bf16.msra.mxu0 %v3968
    %4992 = vmatpush.bf16.msra.mxu0 %v3960
    %4993 = vmatpush.bf16.msra.mxu0 %v3952
    %4994 = vmatpush.bf16.msra.mxu0 %v3944
    %4995 = vmatpush.bf16.msra.mxu0 %v3936
    %4996 = vmatpush.bf16.msra.mxu0 %v3928
    %4997 = vmatpush.bf16.msra.mxu0 %v3920
    %4998 = vmatpush.bf16.msra.mxu0 %v3912
    %4999 = vmatmul.bf16.gmra.mxu0 %v1393
    %v5000 = vpop.f32.mrf.mxu0
    %v5001 = vadd.f32 %v4988, %v5000
    %v5002 = vpop.f32.mrf.mxu0
    %5003 = vdwg.mxu0
    %5004 = vmatpush.bf16.msra.mxu0 %v3521
    %5005 = vmatpush.bf16.msra.mxu0 %v3513
    %5006 = vmatpush.bf16.msra.mxu0 %v3505
    %5007 = vmatpush.bf16.msra.mxu0 %v3497
    %5008 = vmatpush.bf16.msra.mxu0 %v3489
    %5009 = vmatpush.bf16.msra.mxu0 %v3481
    %5010 = vmatpush.bf16.msra.mxu0 %v3473
    %5011 = vmatpush.bf16.msra.mxu0 %v3465
    %5012 = vmatmul.bf16.gmra.mxu0 %v1386
    %v5013 = vpop.f32.mrf.mxu0
    %v5014 = vadd.f32 %v1913, %v5013
    %v5015 = vpop.f32.mrf.mxu0
    %5016 = vdwg.mxu0
    %5017 = vmatpush.bf16.msra.mxu0 %v3585
    %5018 = vmatpush.bf16.msra.mxu0 %v3577
    %5019 = vmatpush.bf16.msra.mxu0 %v3569
    %5020 = vmatpush.bf16.msra.mxu0 %v3561
    %5021 = vmatpush.bf16.msra.mxu0 %v3553
    %5022 = vmatpush.bf16.msra.mxu0 %v3545
    %5023 = vmatpush.bf16.msra.mxu0 %v3537
    %5024 = vmatpush.bf16.msra.mxu0 %v3529
    %5025 = vmatmul.bf16.gmra.mxu0 %v1387
    %v5026 = vpop.f32.mrf.mxu0
    %v5027 = vadd.f32 %v5014, %v5026
    %v5028 = vpop.f32.mrf.mxu0
    %5029 = vdwg.mxu0
    %5030 = vmatpush.bf16.msra.mxu0 %v3649
    %5031 = vmatpush.bf16.msra.mxu0 %v3641
    %5032 = vmatpush.bf16.msra.mxu0 %v3633
    %5033 = vmatpush.bf16.msra.mxu0 %v3625
    %5034 = vmatpush.bf16.msra.mxu0 %v3617
    %5035 = vmatpush.bf16.msra.mxu0 %v3609
    %5036 = vmatpush.bf16.msra.mxu0 %v3601
    %5037 = vmatpush.bf16.msra.mxu0 %v3593
    %5038 = vmatmul.bf16.gmra.mxu0 %v1388
    %v5039 = vpop.f32.mrf.mxu0
    %v5040 = vadd.f32 %v5027, %v5039
    %v5041 = vpop.f32.mrf.mxu0
    %5042 = vdwg.mxu0
    %5043 = vmatpush.bf16.msra.mxu0 %v3713
    %5044 = vmatpush.bf16.msra.mxu0 %v3705
    %5045 = vmatpush.bf16.msra.mxu0 %v3697
    %5046 = vmatpush.bf16.msra.mxu0 %v3689
    %5047 = vmatpush.bf16.msra.mxu0 %v3681
    %5048 = vmatpush.bf16.msra.mxu0 %v3673
    %5049 = vmatpush.bf16.msra.mxu0 %v3665
    %5050 = vmatpush.bf16.msra.mxu0 %v3657
    %5051 = vmatmul.bf16.gmra.mxu0 %v1389
    %v5052 = vpop.f32.mrf.mxu0
    %v5053 = vadd.f32 %v5040, %v5052
    %v5054 = vpop.f32.mrf.mxu0
    %5055 = vdwg.mxu0
    %5056 = vmatpush.bf16.msra.mxu0 %v3777
    %5057 = vmatpush.bf16.msra.mxu0 %v3769
    %5058 = vmatpush.bf16.msra.mxu0 %v3761
    %5059 = vmatpush.bf16.msra.mxu0 %v3753
    %5060 = vmatpush.bf16.msra.mxu0 %v3745
    %5061 = vmatpush.bf16.msra.mxu0 %v3737
    %5062 = vmatpush.bf16.msra.mxu0 %v3729
    %5063 = vmatpush.bf16.msra.mxu0 %v3721
    %5064 = vmatmul.bf16.gmra.mxu0 %v1390
    %v5065 = vpop.f32.mrf.mxu0
    %v5066 = vadd.f32 %v5053, %v5065
    %v5067 = vpop.f32.mrf.mxu0
    %5068 = vdwg.mxu0
    %5069 = vmatpush.bf16.msra.mxu0 %v3841
    %5070 = vmatpush.bf16.msra.mxu0 %v3833
    %5071 = vmatpush.bf16.msra.mxu0 %v3825
    %5072 = vmatpush.bf16.msra.mxu0 %v3817
    %5073 = vmatpush.bf16.msra.mxu0 %v3809
    %5074 = vmatpush.bf16.msra.mxu0 %v3801
    %5075 = vmatpush.bf16.msra.mxu0 %v3793
    %5076 = vmatpush.bf16.msra.mxu0 %v3785
    %5077 = vmatmul.bf16.gmra.mxu0 %v1391
    %v5078 = vpop.f32.mrf.mxu0
    %v5079 = vadd.f32 %v5066, %v5078
    %v5080 = vpop.f32.mrf.mxu0
    %5081 = vdwg.mxu0
    %5082 = vmatpush.bf16.msra.mxu0 %v3905
    %5083 = vmatpush.bf16.msra.mxu0 %v3897
    %5084 = vmatpush.bf16.msra.mxu0 %v3889
    %5085 = vmatpush.bf16.msra.mxu0 %v3881
    %5086 = vmatpush.bf16.msra.mxu0 %v3873
    %5087 = vmatpush.bf16.msra.mxu0 %v3865
    %5088 = vmatpush.bf16.msra.mxu0 %v3857
    %5089 = vmatpush.bf16.msra.mxu0 %v3849
    %5090 = vmatmul.bf16.gmra.mxu0 %v1392
    %v5091 = vpop.f32.mrf.mxu0
    %v5092 = vadd.f32 %v5079, %v5091
    %v5093 = vpop.f32.mrf.mxu0
    %5094 = vdwg.mxu0
    %5095 = vmatpush.bf16.msra.mxu0 %v3969
    %5096 = vmatpush.bf16.msra.mxu0 %v3961
    %5097 = vmatpush.bf16.msra.mxu0 %v3953
    %5098 = vmatpush.bf16.msra.mxu0 %v3945
    %5099 = vmatpush.bf16.msra.mxu0 %v3937
    %5100 = vmatpush.bf16.msra.mxu0 %v3929
    %5101 = vmatpush.bf16.msra.mxu0 %v3921
    %5102 = vmatpush.bf16.msra.mxu0 %v3913
    %5103 = vmatmul.bf16.gmra.mxu0 %v1393
    %v5104 = vpop.f32.mrf.mxu0
    %v5105 = vadd.f32 %v5092, %v5104
    %v5106 = vpop.f32.mrf.mxu0
    %5107 = vdwg.mxu0
    %5108 = vmatpush.bf16.msra.mxu0 %v3522
    %5109 = vmatpush.bf16.msra.mxu0 %v3514
    %5110 = vmatpush.bf16.msra.mxu0 %v3506
    %5111 = vmatpush.bf16.msra.mxu0 %v3498
    %5112 = vmatpush.bf16.msra.mxu0 %v3490
    %5113 = vmatpush.bf16.msra.mxu0 %v3482
    %5114 = vmatpush.bf16.msra.mxu0 %v3474
    %5115 = vmatpush.bf16.msra.mxu0 %v3466
    %5116 = vmatmul.bf16.gmra.mxu0 %v1386
    %v5117 = vpop.f32.mrf.mxu0
    %v5118 = vadd.f32 %v1914, %v5117
    %v5119 = vpop.f32.mrf.mxu0
    %5120 = vdwg.mxu0
    %5121 = vmatpush.bf16.msra.mxu0 %v3586
    %5122 = vmatpush.bf16.msra.mxu0 %v3578
    %5123 = vmatpush.bf16.msra.mxu0 %v3570
    %5124 = vmatpush.bf16.msra.mxu0 %v3562
    %5125 = vmatpush.bf16.msra.mxu0 %v3554
    %5126 = vmatpush.bf16.msra.mxu0 %v3546
    %5127 = vmatpush.bf16.msra.mxu0 %v3538
    %5128 = vmatpush.bf16.msra.mxu0 %v3530
    %5129 = vmatmul.bf16.gmra.mxu0 %v1387
    %v5130 = vpop.f32.mrf.mxu0
    %v5131 = vadd.f32 %v5118, %v5130
    %v5132 = vpop.f32.mrf.mxu0
    %5133 = vdwg.mxu0
    %5134 = vmatpush.bf16.msra.mxu0 %v3650
    %5135 = vmatpush.bf16.msra.mxu0 %v3642
    %5136 = vmatpush.bf16.msra.mxu0 %v3634
    %5137 = vmatpush.bf16.msra.mxu0 %v3626
    %5138 = vmatpush.bf16.msra.mxu0 %v3618
    %5139 = vmatpush.bf16.msra.mxu0 %v3610
    %5140 = vmatpush.bf16.msra.mxu0 %v3602
    %5141 = vmatpush.bf16.msra.mxu0 %v3594
    %5142 = vmatmul.bf16.gmra.mxu0 %v1388
    %v5143 = vpop.f32.mrf.mxu0
    %v5144 = vadd.f32 %v5131, %v5143
    %v5145 = vpop.f32.mrf.mxu0
    %5146 = vdwg.mxu0
    %5147 = vmatpush.bf16.msra.mxu0 %v3714
    %5148 = vmatpush.bf16.msra.mxu0 %v3706
    %5149 = vmatpush.bf16.msra.mxu0 %v3698
    %5150 = vmatpush.bf16.msra.mxu0 %v3690
    %5151 = vmatpush.bf16.msra.mxu0 %v3682
    %5152 = vmatpush.bf16.msra.mxu0 %v3674
    %5153 = vmatpush.bf16.msra.mxu0 %v3666
    %5154 = vmatpush.bf16.msra.mxu0 %v3658
    %5155 = vmatmul.bf16.gmra.mxu0 %v1389
    %v5156 = vpop.f32.mrf.mxu0
    %v5157 = vadd.f32 %v5144, %v5156
    %v5158 = vpop.f32.mrf.mxu0
    %5159 = vdwg.mxu0
    %5160 = vmatpush.bf16.msra.mxu0 %v3778
    %5161 = vmatpush.bf16.msra.mxu0 %v3770
    %5162 = vmatpush.bf16.msra.mxu0 %v3762
    %5163 = vmatpush.bf16.msra.mxu0 %v3754
    %5164 = vmatpush.bf16.msra.mxu0 %v3746
    %5165 = vmatpush.bf16.msra.mxu0 %v3738
    %5166 = vmatpush.bf16.msra.mxu0 %v3730
    %5167 = vmatpush.bf16.msra.mxu0 %v3722
    %5168 = vmatmul.bf16.gmra.mxu0 %v1390
    %v5169 = vpop.f32.mrf.mxu0
    %v5170 = vadd.f32 %v5157, %v5169
    %v5171 = vpop.f32.mrf.mxu0
    %5172 = vdwg.mxu0
    %5173 = vmatpush.bf16.msra.mxu0 %v3842
    %5174 = vmatpush.bf16.msra.mxu0 %v3834
    %5175 = vmatpush.bf16.msra.mxu0 %v3826
    %5176 = vmatpush.bf16.msra.mxu0 %v3818
    %5177 = vmatpush.bf16.msra.mxu0 %v3810
    %5178 = vmatpush.bf16.msra.mxu0 %v3802
    %5179 = vmatpush.bf16.msra.mxu0 %v3794
    %5180 = vmatpush.bf16.msra.mxu0 %v3786
    %5181 = vmatmul.bf16.gmra.mxu0 %v1391
    %v5182 = vpop.f32.mrf.mxu0
    %v5183 = vadd.f32 %v5170, %v5182
    %v5184 = vpop.f32.mrf.mxu0
    %5185 = vdwg.mxu0
    %5186 = vmatpush.bf16.msra.mxu0 %v3906
    %5187 = vmatpush.bf16.msra.mxu0 %v3898
    %5188 = vmatpush.bf16.msra.mxu0 %v3890
    %5189 = vmatpush.bf16.msra.mxu0 %v3882
    %5190 = vmatpush.bf16.msra.mxu0 %v3874
    %5191 = vmatpush.bf16.msra.mxu0 %v3866
    %5192 = vmatpush.bf16.msra.mxu0 %v3858
    %5193 = vmatpush.bf16.msra.mxu0 %v3850
    %5194 = vmatmul.bf16.gmra.mxu0 %v1392
    %v5195 = vpop.f32.mrf.mxu0
    %v5196 = vadd.f32 %v5183, %v5195
    %v5197 = vpop.f32.mrf.mxu0
    %5198 = vdwg.mxu0
    %5199 = vmatpush.bf16.msra.mxu0 %v3970
    %5200 = vmatpush.bf16.msra.mxu0 %v3962
    %5201 = vmatpush.bf16.msra.mxu0 %v3954
    %5202 = vmatpush.bf16.msra.mxu0 %v3946
    %5203 = vmatpush.bf16.msra.mxu0 %v3938
    %5204 = vmatpush.bf16.msra.mxu0 %v3930
    %5205 = vmatpush.bf16.msra.mxu0 %v3922
    %5206 = vmatpush.bf16.msra.mxu0 %v3914
    %5207 = vmatmul.bf16.gmra.mxu0 %v1393
    %v5208 = vpop.f32.mrf.mxu0
    %v5209 = vadd.f32 %v5196, %v5208
    %v5210 = vpop.f32.mrf.mxu0
    %5211 = vdwg.mxu0
    %5212 = vmatpush.bf16.msra.mxu0 %v3523
    %5213 = vmatpush.bf16.msra.mxu0 %v3515
    %5214 = vmatpush.bf16.msra.mxu0 %v3507
    %5215 = vmatpush.bf16.msra.mxu0 %v3499
    %5216 = vmatpush.bf16.msra.mxu0 %v3491
    %5217 = vmatpush.bf16.msra.mxu0 %v3483
    %5218 = vmatpush.bf16.msra.mxu0 %v3475
    %5219 = vmatpush.bf16.msra.mxu0 %v3467
    %5220 = vmatmul.bf16.gmra.mxu0 %v1386
    %v5221 = vpop.f32.mrf.mxu0
    %v5222 = vadd.f32 %v1915, %v5221
    %v5223 = vpop.f32.mrf.mxu0
    %5224 = vdwg.mxu0
    %5225 = vmatpush.bf16.msra.mxu0 %v3587
    %5226 = vmatpush.bf16.msra.mxu0 %v3579
    %5227 = vmatpush.bf16.msra.mxu0 %v3571
    %5228 = vmatpush.bf16.msra.mxu0 %v3563
    %5229 = vmatpush.bf16.msra.mxu0 %v3555
    %5230 = vmatpush.bf16.msra.mxu0 %v3547
    %5231 = vmatpush.bf16.msra.mxu0 %v3539
    %5232 = vmatpush.bf16.msra.mxu0 %v3531
    %5233 = vmatmul.bf16.gmra.mxu0 %v1387
    %v5234 = vpop.f32.mrf.mxu0
    %v5235 = vadd.f32 %v5222, %v5234
    %v5236 = vpop.f32.mrf.mxu0
    %5237 = vdwg.mxu0
    %5238 = vmatpush.bf16.msra.mxu0 %v3651
    %5239 = vmatpush.bf16.msra.mxu0 %v3643
    %5240 = vmatpush.bf16.msra.mxu0 %v3635
    %5241 = vmatpush.bf16.msra.mxu0 %v3627
    %5242 = vmatpush.bf16.msra.mxu0 %v3619
    %5243 = vmatpush.bf16.msra.mxu0 %v3611
    %5244 = vmatpush.bf16.msra.mxu0 %v3603
    %5245 = vmatpush.bf16.msra.mxu0 %v3595
    %5246 = vmatmul.bf16.gmra.mxu0 %v1388
    %v5247 = vpop.f32.mrf.mxu0
    %v5248 = vadd.f32 %v5235, %v5247
    %v5249 = vpop.f32.mrf.mxu0
    %5250 = vdwg.mxu0
    %5251 = vmatpush.bf16.msra.mxu0 %v3715
    %5252 = vmatpush.bf16.msra.mxu0 %v3707
    %5253 = vmatpush.bf16.msra.mxu0 %v3699
    %5254 = vmatpush.bf16.msra.mxu0 %v3691
    %5255 = vmatpush.bf16.msra.mxu0 %v3683
    %5256 = vmatpush.bf16.msra.mxu0 %v3675
    %5257 = vmatpush.bf16.msra.mxu0 %v3667
    %5258 = vmatpush.bf16.msra.mxu0 %v3659
    %5259 = vmatmul.bf16.gmra.mxu0 %v1389
    %v5260 = vpop.f32.mrf.mxu0
    %v5261 = vadd.f32 %v5248, %v5260
    %v5262 = vpop.f32.mrf.mxu0
    %5263 = vdwg.mxu0
    %5264 = vmatpush.bf16.msra.mxu0 %v3779
    %5265 = vmatpush.bf16.msra.mxu0 %v3771
    %5266 = vmatpush.bf16.msra.mxu0 %v3763
    %5267 = vmatpush.bf16.msra.mxu0 %v3755
    %5268 = vmatpush.bf16.msra.mxu0 %v3747
    %5269 = vmatpush.bf16.msra.mxu0 %v3739
    %5270 = vmatpush.bf16.msra.mxu0 %v3731
    %5271 = vmatpush.bf16.msra.mxu0 %v3723
    %5272 = vmatmul.bf16.gmra.mxu0 %v1390
    %v5273 = vpop.f32.mrf.mxu0
    %v5274 = vadd.f32 %v5261, %v5273
    %v5275 = vpop.f32.mrf.mxu0
    %5276 = vdwg.mxu0
    %5277 = vmatpush.bf16.msra.mxu0 %v3843
    %5278 = vmatpush.bf16.msra.mxu0 %v3835
    %5279 = vmatpush.bf16.msra.mxu0 %v3827
    %5280 = vmatpush.bf16.msra.mxu0 %v3819
    %5281 = vmatpush.bf16.msra.mxu0 %v3811
    %5282 = vmatpush.bf16.msra.mxu0 %v3803
    %5283 = vmatpush.bf16.msra.mxu0 %v3795
    %5284 = vmatpush.bf16.msra.mxu0 %v3787
    %5285 = vmatmul.bf16.gmra.mxu0 %v1391
    %v5286 = vpop.f32.mrf.mxu0
    %v5287 = vadd.f32 %v5274, %v5286
    %v5288 = vpop.f32.mrf.mxu0
    %5289 = vdwg.mxu0
    %5290 = vmatpush.bf16.msra.mxu0 %v3907
    %5291 = vmatpush.bf16.msra.mxu0 %v3899
    %5292 = vmatpush.bf16.msra.mxu0 %v3891
    %5293 = vmatpush.bf16.msra.mxu0 %v3883
    %5294 = vmatpush.bf16.msra.mxu0 %v3875
    %5295 = vmatpush.bf16.msra.mxu0 %v3867
    %5296 = vmatpush.bf16.msra.mxu0 %v3859
    %5297 = vmatpush.bf16.msra.mxu0 %v3851
    %5298 = vmatmul.bf16.gmra.mxu0 %v1392
    %v5299 = vpop.f32.mrf.mxu0
    %v5300 = vadd.f32 %v5287, %v5299
    %v5301 = vpop.f32.mrf.mxu0
    %5302 = vdwg.mxu0
    %5303 = vmatpush.bf16.msra.mxu0 %v3971
    %5304 = vmatpush.bf16.msra.mxu0 %v3963
    %5305 = vmatpush.bf16.msra.mxu0 %v3955
    %5306 = vmatpush.bf16.msra.mxu0 %v3947
    %5307 = vmatpush.bf16.msra.mxu0 %v3939
    %5308 = vmatpush.bf16.msra.mxu0 %v3931
    %5309 = vmatpush.bf16.msra.mxu0 %v3923
    %5310 = vmatpush.bf16.msra.mxu0 %v3915
    %5311 = vmatmul.bf16.gmra.mxu0 %v1393
    %v5312 = vpop.f32.mrf.mxu0
    %v5313 = vadd.f32 %v5300, %v5312
    %v5314 = vpop.f32.mrf.mxu0
    %5315 = vdwg.mxu0
    %v5316 = vmax.f32 %v4585, 0.0
    %v5317 = vmax.f32 %v4689, 0.0
    %v5318 = vmax.f32 %v4793, 0.0
    %v5319 = vmax.f32 %v4897, 0.0
    %v5320 = vmax.f32 %v5001, 0.0
    %v5321 = vmax.f32 %v5105, 0.0
    %v5322 = vmax.f32 %v5209, 0.0
    %v5323 = vmax.f32 %v5313, 0.0
    %v5324 = vpack.c.bf16 %v5316, %v5316
    %v5325 = vpack.c.bf16 %v5317, %v5317
    %v5326 = vpack.c.bf16 %v5318, %v5318
    %v5327 = vpack.c.bf16 %v5319, %v5319
    %v5328 = vpack.c.bf16 %v5320, %v5320
    %v5329 = vpack.c.bf16 %v5321, %v5321
    %v5330 = vpack.c.bf16 %v5322, %v5322
    %v5331 = vpack.c.bf16 %v5323, %v5323
    %v5332 = vld [vmem:[#allocation13] sm:$0xf]
    %v5333 = vld [vmem:[#allocation13 + $0x4] sm:$0xf]
    %v5334 = vld [vmem:[#allocation13 + $0x8] sm:$0xf]
    %v5335 = vld [vmem:[#allocation13 + $0xc] sm:$0xf]
    %v5336 = vld [vmem:[#allocation13 + $0x10] sm:$0xf]
    %v5337 = vld [vmem:[#allocation13 + $0x14] sm:$0xf]
    %v5338 = vld [vmem:[#allocation13 + $0x18] sm:$0xf]
    %v5339 = vld [vmem:[#allocation13 + $0x1c] sm:$0xf]
    %v5340 = vld [vmem:[#allocation13 + $0x20] sm:$0xf]
    %v5341 = vld [vmem:[#allocation13 + $0x24] sm:$0xf]
    %v5342 = vld [vmem:[#allocation13 + $0x28] sm:$0xf]
    %v5343 = vld [vmem:[#allocation13 + $0x2c] sm:$0xf]
    %v5344 = vld [vmem:[#allocation13 + $0x30] sm:$0xf]
    %v5345 = vld [vmem:[#allocation13 + $0x34] sm:$0xf]
    %v5346 = vld [vmem:[#allocation13 + $0x38] sm:$0xf]
    %v5347 = vld [vmem:[#allocation13 + $0x3c] sm:$0xf]
    %v5348 = vld [vmem:[#allocation13 + $0x40] sm:$0xf]
    %v5349 = vld [vmem:[#allocation13 + $0x44] sm:$0xf]
    %v5350 = vld [vmem:[#allocation13 + $0x48] sm:$0xf]
    %v5351 = vld [vmem:[#allocation13 + $0x4c] sm:$0xf]
    %v5352 = vld [vmem:[#allocation13 + $0x50] sm:$0xf]
    %v5353 = vld [vmem:[#allocation13 + $0x54] sm:$0xf]
    %v5354 = vld [vmem:[#allocation13 + $0x58] sm:$0xf]
    %v5355 = vld [vmem:[#allocation13 + $0x5c] sm:$0xf]
    %v5356 = vld [vmem:[#allocation13 + $0x60] sm:$0xf]
    %v5357 = vld [vmem:[#allocation13 + $0x64] sm:$0xf]
    %v5358 = vld [vmem:[#allocation13 + $0x68] sm:$0xf]
    %v5359 = vld [vmem:[#allocation13 + $0x6c] sm:$0xf]
    %v5360 = vld [vmem:[#allocation13 + $0x70] sm:$0xf]
    %v5361 = vld [vmem:[#allocation13 + $0x74] sm:$0xf]
    %v5362 = vld [vmem:[#allocation13 + $0x78] sm:$0xf]
    %v5363 = vld [vmem:[#allocation13 + $0x7c] sm:$0xf]
    %v5364 = vld [vmem:[#allocation13 + $0x80] sm:$0xf]
    %v5365 = vld [vmem:[#allocation13 + $0x84] sm:$0xf]
    %v5366 = vld [vmem:[#allocation13 + $0x88] sm:$0xf]
    %v5367 = vld [vmem:[#allocation13 + $0x8c] sm:$0xf]
    %v5368 = vld [vmem:[#allocation13 + $0x90] sm:$0xf]
    %v5369 = vld [vmem:[#allocation13 + $0x94] sm:$0xf]
    %v5370 = vld [vmem:[#allocation13 + $0x98] sm:$0xf]
    %v5371 = vld [vmem:[#allocation13 + $0x9c] sm:$0xf]
    %v5372 = vld [vmem:[#allocation13 + $0xa0] sm:$0xf]
    %v5373 = vld [vmem:[#allocation13 + $0xa4] sm:$0xf]
    %v5374 = vld [vmem:[#allocation13 + $0xa8] sm:$0xf]
    %v5375 = vld [vmem:[#allocation13 + $0xac] sm:$0xf]
    %v5376 = vld [vmem:[#allocation13 + $0xb0] sm:$0xf]
    %v5377 = vld [vmem:[#allocation13 + $0xb4] sm:$0xf]
    %v5378 = vld [vmem:[#allocation13 + $0xb8] sm:$0xf]
    %v5379 = vld [vmem:[#allocation13 + $0xbc] sm:$0xf]
    %v5380 = vld [vmem:[#allocation13 + $0xc0] sm:$0xf]
    %v5381 = vld [vmem:[#allocation13 + $0xc4] sm:$0xf]
    %v5382 = vld [vmem:[#allocation13 + $0xc8] sm:$0xf]
    %v5383 = vld [vmem:[#allocation13 + $0xcc] sm:$0xf]
    %v5384 = vld [vmem:[#allocation13 + $0xd0] sm:$0xf]
    %v5385 = vld [vmem:[#allocation13 + $0xd4] sm:$0xf]
    %v5386 = vld [vmem:[#allocation13 + $0xd8] sm:$0xf]
    %v5387 = vld [vmem:[#allocation13 + $0xdc] sm:$0xf]
    %v5388 = vld [vmem:[#allocation13 + $0xe0] sm:$0xf]
    %v5389 = vld [vmem:[#allocation13 + $0xe4] sm:$0xf]
    %v5390 = vld [vmem:[#allocation13 + $0xe8] sm:$0xf]
    %v5391 = vld [vmem:[#allocation13 + $0xec] sm:$0xf]
    %v5392 = vld [vmem:[#allocation13 + $0xf0] sm:$0xf]
    %v5393 = vld [vmem:[#allocation13 + $0xf4] sm:$0xf]
    %v5394 = vld [vmem:[#allocation13 + $0xf8] sm:$0xf]
    %v5395 = vld [vmem:[#allocation13 + $0xfc] sm:$0xf]
    %v5396 = vld [vmem:[#allocation13 + $0x100] sm:$0xf]
    %v5397 = vld [vmem:[#allocation13 + $0x104] sm:$0xf]
    %v5398 = vld [vmem:[#allocation13 + $0x108] sm:$0xf]
    %v5399 = vld [vmem:[#allocation13 + $0x10c] sm:$0xf]
    %v5400 = vld [vmem:[#allocation13 + $0x110] sm:$0xf]
    %v5401 = vld [vmem:[#allocation13 + $0x114] sm:$0xf]
    %v5402 = vld [vmem:[#allocation13 + $0x118] sm:$0xf]
    %v5403 = vld [vmem:[#allocation13 + $0x11c] sm:$0xf]
    %v5404 = vld [vmem:[#allocation13 + $0x120] sm:$0xf]
    %v5405 = vld [vmem:[#allocation13 + $0x124] sm:$0xf]
    %v5406 = vld [vmem:[#allocation13 + $0x128] sm:$0xf]
    %v5407 = vld [vmem:[#allocation13 + $0x12c] sm:$0xf]
    %v5408 = vld [vmem:[#allocation13 + $0x130] sm:$0xf]
    %v5409 = vld [vmem:[#allocation13 + $0x134] sm:$0xf]
    %v5410 = vld [vmem:[#allocation13 + $0x138] sm:$0xf]
    %v5411 = vld [vmem:[#allocation13 + $0x13c] sm:$0xf]
    %v5412 = vld [vmem:[#allocation13 + $0x140] sm:$0xf]
    %v5413 = vld [vmem:[#allocation13 + $0x144] sm:$0xf]
    %v5414 = vld [vmem:[#allocation13 + $0x148] sm:$0xf]
    %v5415 = vld [vmem:[#allocation13 + $0x14c] sm:$0xf]
    %v5416 = vld [vmem:[#allocation13 + $0x150] sm:$0xf]
    %v5417 = vld [vmem:[#allocation13 + $0x154] sm:$0xf]
    %v5418 = vld [vmem:[#allocation13 + $0x158] sm:$0xf]
    %v5419 = vld [vmem:[#allocation13 + $0x15c] sm:$0xf]
    %v5420 = vld [vmem:[#allocation13 + $0x160] sm:$0xf]
    %v5421 = vld [vmem:[#allocation13 + $0x164] sm:$0xf]
    %v5422 = vld [vmem:[#allocation13 + $0x168] sm:$0xf]
    %v5423 = vld [vmem:[#allocation13 + $0x16c] sm:$0xf]
    %v5424 = vld [vmem:[#allocation13 + $0x170] sm:$0xf]
    %v5425 = vld [vmem:[#allocation13 + $0x174] sm:$0xf]
    %v5426 = vld [vmem:[#allocation13 + $0x178] sm:$0xf]
    %v5427 = vld [vmem:[#allocation13 + $0x17c] sm:$0xf]
    %v5428 = vld [vmem:[#allocation13 + $0x180] sm:$0xf]
    %v5429 = vld [vmem:[#allocation13 + $0x184] sm:$0xf]
    %v5430 = vld [vmem:[#allocation13 + $0x188] sm:$0xf]
    %v5431 = vld [vmem:[#allocation13 + $0x18c] sm:$0xf]
    %v5432 = vld [vmem:[#allocation13 + $0x190] sm:$0xf]
    %v5433 = vld [vmem:[#allocation13 + $0x194] sm:$0xf]
    %v5434 = vld [vmem:[#allocation13 + $0x198] sm:$0xf]
    %v5435 = vld [vmem:[#allocation13 + $0x19c] sm:$0xf]
    %v5436 = vld [vmem:[#allocation13 + $0x1a0] sm:$0xf]
    %v5437 = vld [vmem:[#allocation13 + $0x1a4] sm:$0xf]
    %v5438 = vld [vmem:[#allocation13 + $0x1a8] sm:$0xf]
    %v5439 = vld [vmem:[#allocation13 + $0x1ac] sm:$0xf]
    %v5440 = vld [vmem:[#allocation13 + $0x1b0] sm:$0xf]
    %v5441 = vld [vmem:[#allocation13 + $0x1b4] sm:$0xf]
    %v5442 = vld [vmem:[#allocation13 + $0x1b8] sm:$0xf]
    %v5443 = vld [vmem:[#allocation13 + $0x1bc] sm:$0xf]
    %v5444 = vld [vmem:[#allocation13 + $0x1c0] sm:$0xf]
    %v5445 = vld [vmem:[#allocation13 + $0x1c4] sm:$0xf]
    %v5446 = vld [vmem:[#allocation13 + $0x1c8] sm:$0xf]
    %v5447 = vld [vmem:[#allocation13 + $0x1cc] sm:$0xf]
    %v5448 = vld [vmem:[#allocation13 + $0x1d0] sm:$0xf]
    %v5449 = vld [vmem:[#allocation13 + $0x1d4] sm:$0xf]
    %v5450 = vld [vmem:[#allocation13 + $0x1d8] sm:$0xf]
    %v5451 = vld [vmem:[#allocation13 + $0x1dc] sm:$0xf]
    %v5452 = vld [vmem:[#allocation13 + $0x1e0] sm:$0xf]
    %v5453 = vld [vmem:[#allocation13 + $0x1e4] sm:$0xf]
    %v5454 = vld [vmem:[#allocation13 + $0x1e8] sm:$0xf]
    %v5455 = vld [vmem:[#allocation13 + $0x1ec] sm:$0xf]
    %v5456 = vld [vmem:[#allocation13 + $0x1f0] sm:$0xf]
    %v5457 = vld [vmem:[#allocation13 + $0x1f4] sm:$0xf]
    %v5458 = vld [vmem:[#allocation13 + $0x1f8] sm:$0xf]
    %v5459 = vld [vmem:[#allocation13 + $0x1fc] sm:$0xf]
    %v5460 = vld [vmem:[#allocation14] sm:$0x1]
    %v5462 = vperm.slane %v5460, 0
    %v5592 = vunpack.c.l.b16 %v5332
    %v5593 = vunpack.c.l.b16 %v5333
    %v5594 = vunpack.c.l.b16 %v5334
    %v5595 = vunpack.c.l.b16 %v5335
    %v5596 = vunpack.c.l.b16 %v5336
    %v5597 = vunpack.c.l.b16 %v5337
    %v5598 = vunpack.c.l.b16 %v5338
    %v5599 = vunpack.c.l.b16 %v5339
    %v5600 = vunpack.c.l.b16 %v5340
    %v5601 = vunpack.c.l.b16 %v5341
    %v5602 = vunpack.c.l.b16 %v5342
    %v5603 = vunpack.c.l.b16 %v5343
    %v5604 = vunpack.c.l.b16 %v5344
    %v5605 = vunpack.c.l.b16 %v5345
    %v5606 = vunpack.c.l.b16 %v5346
    %v5607 = vunpack.c.l.b16 %v5347
    %v5608 = vunpack.c.l.b16 %v5348
    %v5609 = vunpack.c.l.b16 %v5349
    %v5610 = vunpack.c.l.b16 %v5350
    %v5611 = vunpack.c.l.b16 %v5351
    %v5612 = vunpack.c.l.b16 %v5352
    %v5613 = vunpack.c.l.b16 %v5353
    %v5614 = vunpack.c.l.b16 %v5354
    %v5615 = vunpack.c.l.b16 %v5355
    %v5616 = vunpack.c.l.b16 %v5356
    %v5617 = vunpack.c.l.b16 %v5357
    %v5618 = vunpack.c.l.b16 %v5358
    %v5619 = vunpack.c.l.b16 %v5359
    %v5620 = vunpack.c.l.b16 %v5360
    %v5621 = vunpack.c.l.b16 %v5361
    %v5622 = vunpack.c.l.b16 %v5362
    %v5623 = vunpack.c.l.b16 %v5363
    %v5624 = vunpack.c.l.b16 %v5364
    %v5625 = vunpack.c.l.b16 %v5365
    %v5626 = vunpack.c.l.b16 %v5366
    %v5627 = vunpack.c.l.b16 %v5367
    %v5628 = vunpack.c.l.b16 %v5368
    %v5629 = vunpack.c.l.b16 %v5369
    %v5630 = vunpack.c.l.b16 %v5370
    %v5631 = vunpack.c.l.b16 %v5371
    %v5632 = vunpack.c.l.b16 %v5372
    %v5633 = vunpack.c.l.b16 %v5373
    %v5634 = vunpack.c.l.b16 %v5374
    %v5635 = vunpack.c.l.b16 %v5375
    %v5636 = vunpack.c.l.b16 %v5376
    %v5637 = vunpack.c.l.b16 %v5377
    %v5638 = vunpack.c.l.b16 %v5378
    %v5639 = vunpack.c.l.b16 %v5379
    %v5640 = vunpack.c.l.b16 %v5380
    %v5641 = vunpack.c.l.b16 %v5381
    %v5642 = vunpack.c.l.b16 %v5382
    %v5643 = vunpack.c.l.b16 %v5383
    %v5644 = vunpack.c.l.b16 %v5384
    %v5645 = vunpack.c.l.b16 %v5385
    %v5646 = vunpack.c.l.b16 %v5386
    %v5647 = vunpack.c.l.b16 %v5387
    %v5648 = vunpack.c.l.b16 %v5388
    %v5649 = vunpack.c.l.b16 %v5389
    %v5650 = vunpack.c.l.b16 %v5390
    %v5651 = vunpack.c.l.b16 %v5391
    %v5652 = vunpack.c.l.b16 %v5392
    %v5653 = vunpack.c.l.b16 %v5393
    %v5654 = vunpack.c.l.b16 %v5394
    %v5655 = vunpack.c.l.b16 %v5395
    %v5656 = vunpack.c.l.b16 %v5396
    %v5657 = vunpack.c.l.b16 %v5397
    %v5658 = vunpack.c.l.b16 %v5398
    %v5659 = vunpack.c.l.b16 %v5399
    %v5660 = vunpack.c.l.b16 %v5400
    %v5661 = vunpack.c.l.b16 %v5401
    %v5662 = vunpack.c.l.b16 %v5402
    %v5663 = vunpack.c.l.b16 %v5403
    %v5664 = vunpack.c.l.b16 %v5404
    %v5665 = vunpack.c.l.b16 %v5405
    %v5666 = vunpack.c.l.b16 %v5406
    %v5667 = vunpack.c.l.b16 %v5407
    %v5668 = vunpack.c.l.b16 %v5408
    %v5669 = vunpack.c.l.b16 %v5409
    %v5670 = vunpack.c.l.b16 %v5410
    %v5671 = vunpack.c.l.b16 %v5411
    %v5672 = vunpack.c.l.b16 %v5412
    %v5673 = vunpack.c.l.b16 %v5413
    %v5674 = vunpack.c.l.b16 %v5414
    %v5675 = vunpack.c.l.b16 %v5415
    %v5676 = vunpack.c.l.b16 %v5416
    %v5677 = vunpack.c.l.b16 %v5417
    %v5678 = vunpack.c.l.b16 %v5418
    %v5679 = vunpack.c.l.b16 %v5419
    %v5680 = vunpack.c.l.b16 %v5420
    %v5681 = vunpack.c.l.b16 %v5421
    %v5682 = vunpack.c.l.b16 %v5422
    %v5683 = vunpack.c.l.b16 %v5423
    %v5684 = vunpack.c.l.b16 %v5424
    %v5685 = vunpack.c.l.b16 %v5425
    %v5686 = vunpack.c.l.b16 %v5426
    %v5687 = vunpack.c.l.b16 %v5427
    %v5688 = vunpack.c.l.b16 %v5428
    %v5689 = vunpack.c.l.b16 %v5429
    %v5690 = vunpack.c.l.b16 %v5430
    %v5691 = vunpack.c.l.b16 %v5431
    %v5692 = vunpack.c.l.b16 %v5432
    %v5693 = vunpack.c.l.b16 %v5433
    %v5694 = vunpack.c.l.b16 %v5434
    %v5695 = vunpack.c.l.b16 %v5435
    %v5696 = vunpack.c.l.b16 %v5436
    %v5697 = vunpack.c.l.b16 %v5437
    %v5698 = vunpack.c.l.b16 %v5438
    %v5699 = vunpack.c.l.b16 %v5439
    %v5700 = vunpack.c.l.b16 %v5440
    %v5701 = vunpack.c.l.b16 %v5441
    %v5702 = vunpack.c.l.b16 %v5442
    %v5703 = vunpack.c.l.b16 %v5443
    %v5704 = vunpack.c.l.b16 %v5444
    %v5705 = vunpack.c.l.b16 %v5445
    %v5706 = vunpack.c.l.b16 %v5446
    %v5707 = vunpack.c.l.b16 %v5447
    %v5708 = vunpack.c.l.b16 %v5448
    %v5709 = vunpack.c.l.b16 %v5449
    %v5710 = vunpack.c.l.b16 %v5450
    %v5711 = vunpack.c.l.b16 %v5451
    %v5712 = vunpack.c.l.b16 %v5452
    %v5713 = vunpack.c.l.b16 %v5453
    %v5714 = vunpack.c.l.b16 %v5454
    %v5715 = vunpack.c.l.b16 %v5455
    %v5716 = vunpack.c.l.b16 %v5456
    %v5717 = vunpack.c.l.b16 %v5457
    %v5718 = vunpack.c.l.b16 %v5458
    %v5719 = vunpack.c.l.b16 %v5459
    %v5720 = vpack.c.b16 %v5593, %v5592
    %v5721 = vpack.c.b16 %v5595, %v5594
    %v5722 = vpack.c.b16 %v5597, %v5596
    %v5723 = vpack.c.b16 %v5599, %v5598
    %v5724 = vpack.c.b16 %v5601, %v5600
    %v5725 = vpack.c.b16 %v5603, %v5602
    %v5726 = vpack.c.b16 %v5605, %v5604
    %v5727 = vpack.c.b16 %v5607, %v5606
    %v5728 = vpack.c.b16 %v5609, %v5608
    %v5729 = vpack.c.b16 %v5611, %v5610
    %v5730 = vpack.c.b16 %v5613, %v5612
    %v5731 = vpack.c.b16 %v5615, %v5614
    %v5732 = vpack.c.b16 %v5617, %v5616
    %v5733 = vpack.c.b16 %v5619, %v5618
    %v5734 = vpack.c.b16 %v5621, %v5620
    %v5735 = vpack.c.b16 %v5623, %v5622
    %v5736 = vpack.c.b16 %v5625, %v5624
    %v5737 = vpack.c.b16 %v5627, %v5626
    %v5738 = vpack.c.b16 %v5629, %v5628
    %v5739 = vpack.c.b16 %v5631, %v5630
    %v5740 = vpack.c.b16 %v5633, %v5632
    %v5741 = vpack.c.b16 %v5635, %v5634
    %v5742 = vpack.c.b16 %v5637, %v5636
    %v5743 = vpack.c.b16 %v5639, %v5638
    %v5744 = vpack.c.b16 %v5641, %v5640
    %v5745 = vpack.c.b16 %v5643, %v5642
    %v5746 = vpack.c.b16 %v5645, %v5644
    %v5747 = vpack.c.b16 %v5647, %v5646
    %v5748 = vpack.c.b16 %v5649, %v5648
    %v5749 = vpack.c.b16 %v5651, %v5650
    %v5750 = vpack.c.b16 %v5653, %v5652
    %v5751 = vpack.c.b16 %v5655, %v5654
    %v5752 = vpack.c.b16 %v5657, %v5656
    %v5753 = vpack.c.b16 %v5659, %v5658
    %v5754 = vpack.c.b16 %v5661, %v5660
    %v5755 = vpack.c.b16 %v5663, %v5662
    %v5756 = vpack.c.b16 %v5665, %v5664
    %v5757 = vpack.c.b16 %v5667, %v5666
    %v5758 = vpack.c.b16 %v5669, %v5668
    %v5759 = vpack.c.b16 %v5671, %v5670
    %v5760 = vpack.c.b16 %v5673, %v5672
    %v5761 = vpack.c.b16 %v5675, %v5674
    %v5762 = vpack.c.b16 %v5677, %v5676
    %v5763 = vpack.c.b16 %v5679, %v5678
    %v5764 = vpack.c.b16 %v5681, %v5680
    %v5765 = vpack.c.b16 %v5683, %v5682
    %v5766 = vpack.c.b16 %v5685, %v5684
    %v5767 = vpack.c.b16 %v5687, %v5686
    %v5768 = vpack.c.b16 %v5689, %v5688
    %v5769 = vpack.c.b16 %v5691, %v5690
    %v5770 = vpack.c.b16 %v5693, %v5692
    %v5771 = vpack.c.b16 %v5695, %v5694
    %v5772 = vpack.c.b16 %v5697, %v5696
    %v5773 = vpack.c.b16 %v5699, %v5698
    %v5774 = vpack.c.b16 %v5701, %v5700
    %v5775 = vpack.c.b16 %v5703, %v5702
    %v5776 = vpack.c.b16 %v5705, %v5704
    %v5777 = vpack.c.b16 %v5707, %v5706
    %v5778 = vpack.c.b16 %v5709, %v5708
    %v5779 = vpack.c.b16 %v5711, %v5710
    %v5780 = vpack.c.b16 %v5713, %v5712
    %v5781 = vpack.c.b16 %v5715, %v5714
    %v5782 = vpack.c.b16 %v5717, %v5716
    %v5783 = vpack.c.b16 %v5719, %v5718
    %5848 = vmatpush.bf16.msra.mxu0 %v5727
    %5849 = vmatpush.bf16.msra.mxu0 %v5726
    %5850 = vmatpush.bf16.msra.mxu0 %v5725
    %5851 = vmatpush.bf16.msra.mxu0 %v5724
    %5852 = vmatpush.bf16.msra.mxu0 %v5723
    %5853 = vmatpush.bf16.msra.mxu0 %v5722
    %5854 = vmatpush.bf16.msra.mxu0 %v5721
    %5855 = vmatpush.bf16.msra.mxu0 %v5720
    %5856 = vmatmul.bf16.gmra.mxu0 %v5324
    %v5857 = vpop.f32.mrf.mxu0
    %v5858 = vadd.f32 %v5462, %v5857
    %v5859 = vpop.f32.mrf.mxu0
    %5860 = vdwg.mxu0
    %5861 = vmatpush.bf16.msra.mxu0 %v5735
    %5862 = vmatpush.bf16.msra.mxu0 %v5734
    %5863 = vmatpush.bf16.msra.mxu0 %v5733
    %5864 = vmatpush.bf16.msra.mxu0 %v5732
    %5865 = vmatpush.bf16.msra.mxu0 %v5731
    %5866 = vmatpush.bf16.msra.mxu0 %v5730
    %5867 = vmatpush.bf16.msra.mxu0 %v5729
    %5868 = vmatpush.bf16.msra.mxu0 %v5728
    %5869 = vmatmul.bf16.gmra.mxu0 %v5325
    %v5870 = vpop.f32.mrf.mxu0
    %v5871 = vadd.f32 %v5858, %v5870
    %v5872 = vpop.f32.mrf.mxu0
    %5873 = vdwg.mxu0
    %5874 = vmatpush.bf16.msra.mxu0 %v5743
    %5875 = vmatpush.bf16.msra.mxu0 %v5742
    %5876 = vmatpush.bf16.msra.mxu0 %v5741
    %5877 = vmatpush.bf16.msra.mxu0 %v5740
    %5878 = vmatpush.bf16.msra.mxu0 %v5739
    %5879 = vmatpush.bf16.msra.mxu0 %v5738
    %5880 = vmatpush.bf16.msra.mxu0 %v5737
    %5881 = vmatpush.bf16.msra.mxu0 %v5736
    %5882 = vmatmul.bf16.gmra.mxu0 %v5326
    %v5883 = vpop.f32.mrf.mxu0
    %v5884 = vadd.f32 %v5871, %v5883
    %v5885 = vpop.f32.mrf.mxu0
    %5886 = vdwg.mxu0
    %5887 = vmatpush.bf16.msra.mxu0 %v5751
    %5888 = vmatpush.bf16.msra.mxu0 %v5750
    %5889 = vmatpush.bf16.msra.mxu0 %v5749
    %5890 = vmatpush.bf16.msra.mxu0 %v5748
    %5891 = vmatpush.bf16.msra.mxu0 %v5747
    %5892 = vmatpush.bf16.msra.mxu0 %v5746
    %5893 = vmatpush.bf16.msra.mxu0 %v5745
    %5894 = vmatpush.bf16.msra.mxu0 %v5744
    %5895 = vmatmul.bf16.gmra.mxu0 %v5327
    %v5896 = vpop.f32.mrf.mxu0
    %v5897 = vadd.f32 %v5884, %v5896
    %v5898 = vpop.f32.mrf.mxu0
    %5899 = vdwg.mxu0
    %5900 = vmatpush.bf16.msra.mxu0 %v5759
    %5901 = vmatpush.bf16.msra.mxu0 %v5758
    %5902 = vmatpush.bf16.msra.mxu0 %v5757
    %5903 = vmatpush.bf16.msra.mxu0 %v5756
    %5904 = vmatpush.bf16.msra.mxu0 %v5755
    %5905 = vmatpush.bf16.msra.mxu0 %v5754
    %5906 = vmatpush.bf16.msra.mxu0 %v5753
    %5907 = vmatpush.bf16.msra.mxu0 %v5752
    %5908 = vmatmul.bf16.gmra.mxu0 %v5328
    %v5909 = vpop.f32.mrf.mxu0
    %v5910 = vadd.f32 %v5897, %v5909
    %v5911 = vpop.f32.mrf.mxu0
    %5912 = vdwg.mxu0
    %5913 = vmatpush.bf16.msra.mxu0 %v5767
    %5914 = vmatpush.bf16.msra.mxu0 %v5766
    %5915 = vmatpush.bf16.msra.mxu0 %v5765
    %5916 = vmatpush.bf16.msra.mxu0 %v5764
    %5917 = vmatpush.bf16.msra.mxu0 %v5763
    %5918 = vmatpush.bf16.msra.mxu0 %v5762
    %5919 = vmatpush.bf16.msra.mxu0 %v5761
    %5920 = vmatpush.bf16.msra.mxu0 %v5760
    %5921 = vmatmul.bf16.gmra.mxu0 %v5329
    %v5922 = vpop.f32.mrf.mxu0
    %v5923 = vadd.f32 %v5910, %v5922
    %v5924 = vpop.f32.mrf.mxu0
    %5925 = vdwg.mxu0
    %5926 = vmatpush.bf16.msra.mxu0 %v5775
    %5927 = vmatpush.bf16.msra.mxu0 %v5774
    %5928 = vmatpush.bf16.msra.mxu0 %v5773
    %5929 = vmatpush.bf16.msra.mxu0 %v5772
    %5930 = vmatpush.bf16.msra.mxu0 %v5771
    %5931 = vmatpush.bf16.msra.mxu0 %v5770
    %5932 = vmatpush.bf16.msra.mxu0 %v5769
    %5933 = vmatpush.bf16.msra.mxu0 %v5768
    %5934 = vmatmul.bf16.gmra.mxu0 %v5330
    %v5935 = vpop.f32.mrf.mxu0
    %v5936 = vadd.f32 %v5923, %v5935
    %v5937 = vpop.f32.mrf.mxu0
    %5938 = vdwg.mxu0
    %5939 = vmatpush.bf16.msra.mxu0 %v5783
    %5940 = vmatpush.bf16.msra.mxu0 %v5782
    %5941 = vmatpush.bf16.msra.mxu0 %v5781
    %5942 = vmatpush.bf16.msra.mxu0 %v5780
    %5943 = vmatpush.bf16.msra.mxu0 %v5779
    %5944 = vmatpush.bf16.msra.mxu0 %v5778
    %5945 = vmatpush.bf16.msra.mxu0 %v5777
    %5946 = vmatpush.bf16.msra.mxu0 %v5776
    %5947 = vmatmul.bf16.gmra.mxu0 %v5331
    %v5948 = vpop.f32.mrf.mxu0
    %v5949 = vadd.f32 %v5936, %v5948
    %v5950 = vpop.f32.mrf.mxu0
    %5951 = vdwg.mxu0
    %5952 = vst [vmem:[%s10] sm:$0xff] %v5949
    // Predicated region
    $region70: #{dann_forward.1} parent=1 // pred_check
      _
    $region71: #{dann_forward.1} parent=1 // pred_check_branch
      %5954 = sbr.rel (0) target = $region73
    $region72: #{dann_forward.1} parent=1 // pred_region
      %5956 = vsyncadd [#allocation4], 0
      %s5958 = sshll.u32 [#allocation16], 4
      %s5959 = int_to_ptr.vmem [resolvable:$true] %s5958
      %s5960 = sshll.u32 %s9, 4
      %s5961 = int_to_ptr.hbm [resolvable:$true] %s5960
      %5963 = dma.vmem_to_hbm [thread:$0]  %s5959, 128, %s5961, [#allocation4]
    $region73: #{dann_forward.1} parent=1 // pred_fallthru
      _
    // Predicated region
    $region74: #{dann_forward.1} parent=1 // pred_check
      _
    $region75: #{dann_forward.1} parent=1 // pred_check_branch
      %5965 = sbr.rel (0) target = $region77
    $region76: #{dann_forward.1} parent=1 // pred_region
      _
    $region77: #{dann_forward.1} parent=1 // pred_fallthru
      _
    // Predicated region
    $region78: #{dann_forward.1} parent=1 // pred_check
      _
    $region79: #{dann_forward.1} parent=1 // pred_check_branch
      %5967 = sbr.rel (0) target = $region81
    $region80: #{dann_forward.1} parent=1 // pred_region
      %5969 = dma.done [#allocation4], 128
    $region81: #{dann_forward.1} parent=1 // pred_fallthru
      _
    // Predicated region
    $region82: #{dann_forward.1} parent=1 // pred_check
      _
    $region83: #{dann_forward.1} parent=1 // pred_check_branch
      %5971 = sbr.rel (0) target = $region85
    $region84: #{dann_forward.1} parent=1 // pred_region
      _
    $region85: #{dann_forward.1} parent=1 // pred_fallthru
      _
    %5972 = vsyncpa [#allocation3], 1
    %5973 = vsyncpa [#allocation6], 1
    %5974 = vsyncpa [#allocation9], 1
    %5975 = vsyncpa [#allocation12], 1
    %5976 = vsyncpa [#allocation15], 1
    %5977 = vsyncpa [#allocation4], 1

</llo_original>
